<compile_context>
chip_gen: v6e
topology: v6e:2x2x1
jax: 0.10.0
libtpu: 0.0.40
codegen_flags: <defaults>
</compile_context>

<pallas_src>
import functools
import math

import jax
import jax.numpy as jnp
from jax.experimental import pallas as pl
from jax.experimental.pallas import tpu as pltpu


NHEAD = 8
LN_EPS = 1e-5


def _round_up(x, m):
    return (x + m - 1) // m * m


# ------------------------ generation-aware sizing ---------------------------

def _tpu_vmem_capacity():
    try:
        fn = getattr(pltpu, "get_tpu_info", None)
        if fn is None:
            return None
        info = fn()
        for attr in ("vmem_capacity_bytes", "vmem_bytes", "vmem_size_bytes"):
            cap = getattr(info, attr, None)
            if cap:
                return int(cap)
    except Exception:
        return None
    return None


_VMEM_CAP = _tpu_vmem_capacity() or (64 * 1024 * 1024)      # conservative = v7x
VMEM_LIMIT = int(min(_VMEM_CAP // 2, 100 * 1024 * 1024))     # ~64 MiB on v5e/v6e, ~32 MiB on v7x
_BIG_VMEM = _VMEM_CAP >= 96 * 1024 * 1024
TM_TARGET = 512 if _BIG_VMEM else 256
TN_TARGET = 512 if _BIG_VMEM else 256
TK_TARGET = 512


def _tile_dim(dim, target, align):
    """Return (tile, padded_dim). Full-extent block if small, else aligned tile + pad."""
    if dim <= target:
        return dim, dim
    t = max((target // align) * align, align)
    return t, _round_up(dim, t)


# --------------------------- generic tiled linear ---------------------------

def _linear_kernel(x_ref, w_ref, b_ref, o_ref, acc_ref):
    # x: (tm, tk) bf16, w: (tk, tn) bf16 (MXU-native K,N layout), b: (1, tn) f32
    @pl.when(pl.program_id(2) == 0)
    def _init():
        acc_ref[...] = jnp.zeros_like(acc_ref)

    acc_ref[...] += jax.lax.dot_general(
        x_ref[...], w_ref[...],
        dimension_numbers=(((1,), (0,)), ((), ())),
        preferred_element_type=jnp.float32)

    @pl.when(pl.program_id(2) == pl.num_programs(2) - 1)
    def _finalize():
        o_ref[...] = (acc_ref[...] + b_ref[...]).astype(o_ref.dtype)


def linear(x, w_kn, b_1n, *, out_dtype=jnp.bfloat16):
    """y = x @ w + b; w stored (K, N) bf16, f32 accumulation, padded/tiled grid."""
    M, K = x.shape
    Kw, N = w_kn.shape
    assert K == Kw
    x = x.astype(jnp.bfloat16)

    tm, Mp = _tile_dim(M, TM_TARGET, 8)
    tn, Np = _tile_dim(N, TN_TARGET, 128)
    tk, Kp = _tile_dim(K, TK_TARGET, 128)

    if Mp != M or Kp != K:
        x = jnp.pad(x, ((0, Mp - M), (0, Kp - K)))
    if Kp != K or Np != N:
        w_kn = jnp.pad(w_kn, ((0, Kp - K), (0, Np - N)))
    if Np != N:
        b_1n = jnp.pad(b_1n, ((0, 0), (0, Np - N)))

    grid = (Mp // tm, Np // tn, Kp // tk)
    y = pl.pallas_call(
        _linear_kernel,
        out_shape=jax.ShapeDtypeStruct((Mp, Np), out_dtype),
        grid=grid,
        in_specs=[
            pl.BlockSpec((tm, tk), lambda i, j, k: (i, k)),
            pl.BlockSpec((tk, tn), lambda i, j, k: (k, j)),
            pl.BlockSpec((1, tn), lambda i, j, k: (0, j)),
        ],
        out_specs=pl.BlockSpec((tm, tn), lambda i, j, k: (i, j)),
        scratch_shapes=[pltpu.VMEM((tm, tn), jnp.float32)],
        compiler_params=pltpu.CompilerParams(
            dimension_semantics=("parallel", "parallel", "arbitrary"),
            vmem_limit_bytes=VMEM_LIMIT),
    )(x, w_kn, b_1n)
    if Mp != M or Np != N:
        y = y[:M, :N]
    return y


# -------- fused attention block: QKV + MHA + out_proj + residual + LN1 ------

def _attn_block_kernel(x_ref, wqkv_ref, bqkv_ref, wout_ref, bout_ref,
                       g_ref, be_ref, o_ref, *, nhead, scale):
    x = x_ref[0]                                               # (S, H) bf16
    H = x.shape[-1]
    hd = H // nhead

    # fused QKV projection (one MXU pass for q, k, v)
    qkv = jax.lax.dot_general(
        x, wqkv_ref[...], dimension_numbers=(((1,), (0,)), ((), ())),
        preferred_element_type=jnp.float32) + bqkv_ref[...]     # (S, 3H) f32

    q = qkv[:, :H].astype(jnp.bfloat16)
    k = qkv[:, H:2 * H].astype(jnp.bfloat16)
    v = qkv[:, 2 * H:3 * H].astype(jnp.bfloat16)

    # Per-head softmax(QK^T/sqrt(hd)) V — scores are (S, S) one head at a time
    # (8x less VMEM than a (nh, S, S) tensor), everything stays in VMEM.
    # TODO(synk): for very long sequences this should become a flash-style
    # online-softmax loop over KV tiles.
    heads = []
    for h in range(nhead):
        sl = slice(h * hd, (h + 1) * hd)
        qh, kh, vh = q[:, sl], k[:, sl], v[:, sl]
        s = jax.lax.dot_general(
            qh, kh, dimension_numbers=(((1,), (1,)), ((), ())),
            preferred_element_type=jnp.float32) * scale          # (S, S) f32
        m = jnp.max(s, axis=-1, keepdims=True)
        p = jnp.exp(s - m)
        p = p * pl.reciprocal(jnp.sum(p, axis=-1, keepdims=True), approx=True)
        heads.append(jax.lax.dot_general(
            p.astype(jnp.bfloat16), vh,
            dimension_numbers=(((1,), (0,)), ((), ())),
            preferred_element_type=jnp.float32))                  # (S, hd) f32
    attn = jnp.concatenate(heads, axis=-1)                        # (S, H) lane-dense

    # out_proj + residual + LayerNorm1 (f32 statistics)
    y = jax.lax.dot_general(
        attn.astype(jnp.bfloat16), wout_ref[...],
        dimension_numbers=(((1,), (0,)), ((), ())),
        preferred_element_type=jnp.float32)
    y = y + bout_ref[...] + x.astype(jnp.float32)
    mean = jnp.mean(y, axis=-1, keepdims=True)
    var = jnp.mean(jnp.square(y - mean), axis=-1, keepdims=True)
    o_ref[0] = ((y - mean) * jax.lax.rsqrt(var + LN_EPS) * g_ref[...]
                + be_ref[...]).astype(o_ref.dtype)


def attn_block(x_bsh, p):
    B, S, H = x_bsh.shape
    scale = 1.0 / math.sqrt(H // NHEAD)
    # TODO(synk): grid-invariant weight blocks could use pipeline_mode=
    # pl.Buffered(1) (or K-tiling) to avoid double-buffering on v7x's 64 MiB.
    w_full = lambda shape: pl.BlockSpec(shape, lambda b: (0, 0))
    return pl.pallas_call(
        functools.partial(_attn_block_kernel, nhead=NHEAD, scale=scale),
        out_shape=jax.ShapeDtypeStruct((B, S, H), jnp.bfloat16),
        grid=(B,),
        in_specs=[
            pl.BlockSpec((1, S, H), lambda b: (b, 0, 0)),
            w_full((H, 3 * H)), w_full((1, 3 * H)),
            w_full((H, H)), w_full((1, H)),
            w_full((1, H)), w_full((1, H)),
        ],
        out_specs=pl.BlockSpec((1, S, H), lambda b: (b, 0, 0)),
        compiler_params=pltpu.CompilerParams(
            dimension_semantics=("parallel",),
            vmem_limit_bytes=VMEM_LIMIT),
    )(x_bsh, p["w_qkv"], p["b_qkv"], p["w_out"], p["b_out"],
      p["ln1_g"], p["ln1_b"])


# --------- fused feed-forward block: lin1 + ReLU + lin2 + residual + LN2 ----

def _ffn_block_kernel(x_ref, w1_ref, b1_ref, w2_ref, b2_ref, g_ref, be_ref, o_ref):
    x = x_ref[0]                                                # (S, H) bf16
    h = jax.lax.dot_general(
        x, w1_ref[...], dimension_numbers=(((1,), (0,)), ((), ())),
        preferred_element_type=jnp.float32)
    h = jnp.maximum(h + b1_ref[...], 0.0).astype(jnp.bfloat16)  # bf16 intermediate
    y = jax.lax.dot_general(
        h, w2_ref[...], dimension_numbers=(((1,), (0,)), ((), ())),
        preferred_element_type=jnp.float32)
    y = y + b2_ref[...] + x.astype(jnp.float32)
    mean = jnp.mean(y, axis=-1, keepdims=True)
    var = jnp.mean(jnp.square(y - mean), axis=-1, keepdims=True)
    o_ref[0] = ((y - mean) * jax.lax.rsqrt(var + LN_EPS) * g_ref[...]
                + be_ref[...]).astype(o_ref.dtype)


def ffn_block(x_bsh, p):
    B, S, H = x_bsh.shape
    F = p["w1"].shape[1]
    w_full = lambda shape: pl.BlockSpec(shape, lambda b: (0, 0))
    return pl.pallas_call(
        _ffn_block_kernel,
        out_shape=jax.ShapeDtypeStruct((B, S, H), jnp.bfloat16),
        grid=(B,),
        in_specs=[
            pl.BlockSpec((1, S, H), lambda b: (b, 0, 0)),
            w_full((H, F)), w_full((1, F)),
            w_full((F, H)), w_full((1, H)),
            w_full((1, H)), w_full((1, H)),
        ],
        out_specs=pl.BlockSpec((1, S, H), lambda b: (b, 0, 0)),
        compiler_params=pltpu.CompilerParams(
            dimension_semantics=("parallel",),
            vmem_limit_bytes=VMEM_LIMIT),
    )(x_bsh, p["w1"], p["b1"], p["w2"], p["b2"], p["ln2_g"], p["ln2_b"])


# --------------------------- model composition -----------------------------

def transformer_forward(x, params, head_sizes):
    if x.ndim == 2:
        x = x[None]
    B, S, Fin = x.shape
    H = params["emb_w"].shape[1]
    assert B <= params["pe"].shape[0], "PE batch-indexing quirk needs B <= max_length"

    # embedding as one flattened (B*S, Fin) matmul (bf16 activations out)
    h = linear(x.reshape(B * S, Fin), params["emb_w"], params["emb_b"])
    # PE quirk reproduced: pe[b] is added to EVERY timestep of batch b
    h = (h.reshape(B, S, H) + params["pe"][:B, None, :]).astype(jnp.bfloat16)

    # TODO(synk): dropout layers are identity (inference / eval mode)
    # TODO(synk): layer weights could be stacked and driven by a grid over
    # layers with scalar-prefetched offsets to remove per-layer launch overhead.
    for lp in params["layers"]:
        h = attn_block(h, lp)      # QKV + MHA + out_proj + residual + LN1
        h = ffn_block(h, lp)       # lin1 + ReLU + lin2 + residual + LN2

    out = h.reshape(B, S * H)      # free reshape, already bf16
    # fused, lane-padded output heads: one matmul for fc1/fc2/fc3
    y = linear(out, params["fc_cat_w"], params["fc_cat_b"], out_dtype=jnp.float32)
    n1, n2, n3 = head_sizes
    x1 = y[:, :n1]
    x2 = y[:, n1:n1 + n2]
    x3 = y[:, n1 + n2:n1 + n2 + n3]
    if x1.shape[0] == 1:           # torch .squeeze(0)
        x1, x2, x3 = x1[0], x2[0], x3[0]
    return x1, x2, x3


# ----------------------------- parameter init ------------------------------

def make_positional_encoding(max_len, d_model):
    position = jnp.arange(max_len, dtype=jnp.float32)[:, None]
    div_term = jnp.exp(jnp.arange(0, d_model, 2, dtype=jnp.float32)
                       * (-math.log(10000.0) / d_model))
    pe = jnp.zeros((max_len, d_model), dtype=jnp.float32)
    pe = pe.at[:, 0::2].set(jnp.sin(position * div_term))
    pe = pe.at[:, 1::2].set(jnp.cos(position * div_term))
    return pe                                                   # (max_len, d_model)


def init_params(key, input_size, hidden_size, num_layers,
                num_classes_1, num_classes_2, num_classes_3, max_length,
                dim_feedforward=2048):
    seq_len, in_feat = input_size
    H = hidden_size
    assert H % NHEAD == 0
    ks = iter(jax.random.split(key, 12 + 8 * num_layers))

    def w(shape, scale=0.05):
        return (scale * jax.random.normal(next(ks), shape)).astype(jnp.float32)

    def wb(shape, scale=0.05):
        # matmul weights: MXU-native (K, N) layout, stored bf16
        return w(shape, scale).astype(jnp.bfloat16)

    # fused fc1/fc2/fc3 head, lane-padded to 256 (full v6e/v7x MXU pass,
    # exact multiple of the 128-wide v5e MXU)
    n1, n2, n3 = num_classes_1, num_classes_2, num_classes_3
    n_tot = n1 + n2 + n3
    n_pad = _round_up(n_tot, 256)
    Kfc = H * seq_len
    fc_w = jnp.concatenate([w((Kfc, n1)), w((Kfc, n2)), w((Kfc, n3))], axis=1)
    fc_b = jnp.concatenate([w((n1,)), w((n2,)), w((n3,))])
    fc_w = jnp.pad(fc_w, ((0, 0), (0, n_pad - n_tot))).astype(jnp.bfloat16)
    fc_b = jnp.pad(fc_b, (0, n_pad - n_tot)).reshape(1, n_pad)

    params = {
        "emb_w": wb((in_feat, H)), "emb_b": w((1, H)),
        "pe": make_positional_encoding(max_length, H),
        "fc_cat_w": fc_w, "fc_cat_b": fc_b,
        "layers": [],
    }
    for _ in range(num_layers):
        params["layers"].append({
            "w_qkv": wb((H, 3 * H)), "b_qkv": w((1, 3 * H)),
            "w_out": wb((H, H)),     "b_out": w((1, H)),
            "w1": wb((H, dim_feedforward)), "b1": w((1, dim_feedforward)),
            "w2": wb((dim_feedforward, H)), "b2": w((1, H)),
            "ln1_g": jnp.ones((1, H), jnp.float32), "ln1_b": jnp.zeros((1, H), jnp.float32),
            "ln2_g": jnp.ones((1, H), jnp.float32), "ln2_b": jnp.zeros((1, H), jnp.float32),
        })
    return params


# ---------------------------------- main ------------------------------------

if __name__ == "__main__":
    # small shapes consistent with the module's forward:
    #   input_size = (seq_len, feature_dim) = (8, 16), hidden=32, 2 layers
    B, S, Fin, H = 2, 8, 16, 32
    num_layers = 2
    n1, n2, n3 = 3, 4, 5
    max_length = 50

    key = jax.random.PRNGKey(0)
    pkey, xkey = jax.random.split(key)
    params = init_params(pkey, (S, Fin), H, num_layers, n1, n2, n3, max_length)

    x = jax.random.normal(xkey, (B, S, Fin), dtype=jnp.float32)

    fwd = jax.jit(transformer_forward, static_argnums=(2,))
    x1, x2, x3 = fwd(x, params, (n1, n2, n3))
    jax.block_until_ready((x1, x2, x3))

    assert x1.shape == (B, n1) and x2.shape == (B, n2) and x3.shape == (B, n3)
    assert all(bool(jnp.all(jnp.isfinite(a))) for a in (x1, x2, x3))
    print("KERNEL_OK")
</pallas_src>

<mosaic_0001>
module attributes {stable_mosaic.version = 11 : i64} {
  func.func @_linear_kernel(%arg0: i32, %arg1: i32, %arg2: i32, %arg3: memref<16x16xbf16, #tpu.memory_space<vmem>>, %arg4: memref<16x32xbf16, #tpu.memory_space<vmem>>, %arg5: memref<1x32xf32, #tpu.memory_space<vmem>>, %arg6: memref<16x32xbf16, #tpu.memory_space<vmem>>, %arg7: memref<16x32xf32, #tpu.memory_space<vmem>>) attributes {dimension_semantics = [#tpu.dimension_semantics<parallel>, #tpu.dimension_semantics<parallel>, #tpu.dimension_semantics<arbitrary>], iteration_bounds = array<i64: 1, 1, 1>, scalar_prefetch = 0 : i64, scratch_operands = 1 : i64, tpu.core_type = #tpu.core_type<tc>, window_params = [{transform_indices = @transform_0, window_bounds = array<i64: 16, 16>}, {transform_indices = @transform_1, window_bounds = array<i64: 16, 32>}, {transform_indices = @transform_2, window_bounds = array<i64: 1, 32>}, {transform_indices = @transform_3, window_bounds = array<i64: 16, 32>}]} {
    %c0_i32 = arith.constant 0 : i32
    %0 = arith.cmpi eq, %arg2, %c0_i32 : i32
    %1 = arith.extui %0 : i1 to i32
    %c0_i32_0 = arith.constant 0 : i32
    %2 = arith.cmpi ne, %1, %c0_i32_0 : i32
    scf.if %2 {
      %cst_10 = arith.constant 0.000000e+00 : f32
      %12 = vector.broadcast %cst_10 : f32 to vector<16x32xf32>
      %c0_11 = arith.constant 0 : index
      %c0_12 = arith.constant 0 : index
      %13 = vector.load %arg7[%c0_11, %c0_12] : memref<16x32xf32, #tpu.memory_space<vmem>>, vector<16x32xf32>
      tpu.vector_store %arg7[%c0_11, %c0_12], %12 {strides = array<i32>} : memref<16x32xf32, #tpu.memory_space<vmem>>, vector<16x32xf32>,
    } else {
    }
    %c0 = arith.constant 0 : index
    %c0_1 = arith.constant 0 : index
    %3 = vector.load %arg7[%c0, %c0_1] : memref<16x32xf32, #tpu.memory_space<vmem>>, vector<16x32xf32>
    %c0_2 = arith.constant 0 : index
    %c0_3 = arith.constant 0 : index
    %4 = vector.load %arg3[%c0_2, %c0_3] : memref<16x16xbf16, #tpu.memory_space<vmem>>, vector<16x16xbf16>
    %c0_4 = arith.constant 0 : index
    %c0_5 = arith.constant 0 : index
    %5 = vector.load %arg4[%c0_4, %c0_5] : memref<16x32xbf16, #tpu.memory_space<vmem>>, vector<16x32xbf16>
    %cst = arith.constant dense<0.000000e+00> : vector<16x32xf32>
    %6 = tpu.matmul %4, %5, %cst {dimension_numbers = #tpu.dot_dimension_numbers<[1], [0], [0], [1], [0, 0, 1, 1], [], []>} : vector<16x16xbf16>, vector<16x32xbf16>, vector<16x32xf32> -> vector<16x32xf32>
    %7 = arith.addf %3, %6 : vector<16x32xf32>
    %c0_6 = arith.constant 0 : index
    %c0_7 = arith.constant 0 : index
    %8 = vector.load %arg7[%c0_6, %c0_7] : memref<16x32xf32, #tpu.memory_space<vmem>>, vector<16x32xf32>
    tpu.vector_store %arg7[%c0_6, %c0_7], %7 {strides = array<i32>} : memref<16x32xf32, #tpu.memory_space<vmem>>, vector<16x32xf32>,
    %c0_i32_8 = arith.constant 0 : i32
    %9 = arith.cmpi eq, %arg2, %c0_i32_8 : i32
    %10 = arith.extui %9 : i1 to i32
    %c0_i32_9 = arith.constant 0 : i32
    %11 = arith.cmpi ne, %10, %c0_i32_9 : i32
    scf.if %11 {
      %c0_10 = arith.constant 0 : index
      %c0_11 = arith.constant 0 : index
      %12 = vector.load %arg7[%c0_10, %c0_11] : memref<16x32xf32, #tpu.memory_space<vmem>>, vector<16x32xf32>
      %c0_12 = arith.constant 0 : index
      %c0_13 = arith.constant 0 : index
      %13 = vector.load %arg5[%c0_12, %c0_13] : memref<1x32xf32, #tpu.memory_space<vmem>>, vector<1x32xf32>
      %14 = vector.broadcast %13 : vector<1x32xf32> to vector<16x32xf32>
      %15 = arith.addf %12, %14 : vector<16x32xf32>
      %16 = arith.truncf %15 : vector<16x32xf32> to vector<16x32xbf16>
      %c0_14 = arith.constant 0 : index
      %c0_15 = arith.constant 0 : index
      %17 = vector.load %arg6[%c0_14, %c0_15] : memref<16x32xbf16, #tpu.memory_space<vmem>>, vector<16x32xbf16>
      tpu.vector_store %arg6[%c0_14, %c0_15], %16 {strides = array<i32>} : memref<16x32xbf16, #tpu.memory_space<vmem>>, vector<16x32xbf16>,
    } else {
    }
    return
  }
  func.func @transform_0(%arg0: i32, %arg1: i32, %arg2: i32) -> (i32, i32) {
    %c0_i32 = arith.constant 0 : i32
    return %arg0, %arg2 : i32, i32
  }
  func.func @transform_1(%arg0: i32, %arg1: i32, %arg2: i32) -> (i32, i32) {
    %c0_i32 = arith.constant 0 : i32
    return %arg2, %arg1 : i32, i32
  }
  func.func @transform_2(%arg0: i32, %arg1: i32, %arg2: i32) -> (i32, i32) {
    %c0_i32 = arith.constant 0 : i32
    %c0_i32_0 = arith.constant 0 : i32
    return %c0_i32, %arg1 : i32, i32
  }
  func.func @transform_3(%arg0: i32, %arg1: i32, %arg2: i32) -> (i32, i32) {
    %c0_i32 = arith.constant 0 : i32
    return %arg0, %arg1 : i32, i32
  }
}

module attributes {stable_mosaic.version = 11 : i64} {
  func.func @_attn_block_kernel(%arg0: i32, %arg1: memref<1x8x32xbf16, #tpu.memory_space<vmem>>, %arg2: memref<32x96xbf16, #tpu.memory_space<vmem>>, %arg3: memref<1x96xf32, #tpu.memory_space<vmem>>, %arg4: memref<32x32xbf16, #tpu.memory_space<vmem>>, %arg5: memref<1x32xf32, #tpu.memory_space<vmem>>, %arg6: memref<1x32xf32, #tpu.memory_space<vmem>>, %arg7: memref<1x32xf32, #tpu.memory_space<vmem>>, %arg8: memref<1x8x32xbf16, #tpu.memory_space<vmem>>) attributes {dimension_semantics = [#tpu.dimension_semantics<parallel>], iteration_bounds = array<i64: 2>, scalar_prefetch = 0 : i64, scratch_operands = 0 : i64, tpu.core_type = #tpu.core_type<tc>, window_params = [{transform_indices = @transform_0, window_bounds = array<i64: 1, 8, 32>}, {pipeline_mode = #tpu.pipeline_mode<synchronous>, transform_indices = @transform_1, window_bounds = array<i64: 32, 96>}, {pipeline_mode = #tpu.pipeline_mode<synchronous>, transform_indices = @transform_2, window_bounds = array<i64: 1, 96>}, {pipeline_mode = #tpu.pipeline_mode<synchronous>, transform_indices = @transform_3, window_bounds = array<i64: 32, 32>}, {pipeline_mode = #tpu.pipeline_mode<synchronous>, transform_indices = @transform_4, window_bounds = array<i64: 1, 32>}, {pipeline_mode = #tpu.pipeline_mode<synchronous>, transform_indices = @transform_5, window_bounds = array<i64: 1, 32>}, {pipeline_mode = #tpu.pipeline_mode<synchronous>, transform_indices = @transform_6, window_bounds = array<i64: 1, 32>}, {transform_indices = @transform_7, window_bounds = array<i64: 1, 8, 32>}]} {
    %c0 = arith.constant 0 : index
    %c0_0 = arith.constant 0 : index
    %c0_1 = arith.constant 0 : index
    %0 = vector.load %arg1[%c0, %c0_0, %c0_1] : memref<1x8x32xbf16, #tpu.memory_space<vmem>>, vector<1x8x32xbf16>
    %1 = vector.shape_cast %0 : vector<1x8x32xbf16> to vector<8x32xbf16>
    %c0_2 = arith.constant 0 : index
    %c0_3 = arith.constant 0 : index
    %2 = vector.load %arg2[%c0_2, %c0_3] : memref<32x96xbf16, #tpu.memory_space<vmem>>, vector<32x96xbf16>
    %cst = arith.constant dense<0.000000e+00> : vector<8x96xf32>
    %3 = tpu.matmul %1, %2, %cst {dimension_numbers = #tpu.dot_dimension_numbers<[1], [0], [0], [1], [0, 0, 1, 1], [], []>} : vector<8x32xbf16>, vector<32x96xbf16>, vector<8x96xf32> -> vector<8x96xf32>
    %c0_4 = arith.constant 0 : index
    %c0_5 = arith.constant 0 : index
    %4 = vector.load %arg3[%c0_4, %c0_5] : memref<1x96xf32, #tpu.memory_space<vmem>>, vector<1x96xf32>
    %5 = vector.broadcast %4 : vector<1x96xf32> to vector<8x96xf32>
    %6 = arith.addf %3, %5 : vector<8x96xf32>
    %7 = vector.extract_strided_slice %6 {offsets = [0, 0], sizes = [8, 32], strides = [1, 1]} : vector<8x96xf32> to vector<8x32xf32>
    %8 = arith.truncf %7 : vector<8x32xf32> to vector<8x32xbf16>
    %9 = vector.extract_strided_slice %6 {offsets = [0, 32], sizes = [8, 32], strides = [1, 1]} : vector<8x96xf32> to vector<8x32xf32>
    %10 = arith.truncf %9 : vector<8x32xf32> to vector<8x32xbf16>
    %11 = vector.extract_strided_slice %6 {offsets = [0, 64], sizes = [8, 32], strides = [1, 1]} : vector<8x96xf32> to vector<8x32xf32>
    %12 = arith.truncf %11 : vector<8x32xf32> to vector<8x32xbf16>
    %13 = vector.extract_strided_slice %8 {offsets = [0, 0], sizes = [8, 4], strides = [1, 1]} : vector<8x32xbf16> to vector<8x4xbf16>
    %14 = vector.extract_strided_slice %10 {offsets = [0, 0], sizes = [8, 4], strides = [1, 1]} : vector<8x32xbf16> to vector<8x4xbf16>
    %15 = vector.extract_strided_slice %12 {offsets = [0, 0], sizes = [8, 4], strides = [1, 1]} : vector<8x32xbf16> to vector<8x4xbf16>
    %cst_6 = arith.constant dense<0.000000e+00> : vector<8x8xf32>
    %16 = tpu.matmul %13, %14, %cst_6 {dimension_numbers = #tpu.dot_dimension_numbers<[1], [1], [0], [0], [0, 0, 1, 0], [], []>} : vector<8x4xbf16>, vector<8x4xbf16>, vector<8x8xf32> -> vector<8x8xf32>
    %cst_7 = arith.constant 5.000000e-01 : f32
    %17 = vector.broadcast %cst_7 : f32 to vector<8x8xf32>
    %18 = arith.mulf %16, %17 : vector<8x8xf32>
    %cst_8 = arith.constant dense<0xFF800000> : vector<8xf32>
    %19 = vector.multi_reduction <maximumf>, %18, %cst_8 [1] : vector<8x8xf32> to vector<8xf32>
    %20 = vector.shape_cast %19 : vector<8xf32> to vector<8x1xf32>
    %21 = vector.broadcast %20 : vector<8x1xf32> to vector<8x8xf32>
    %22 = arith.subf %18, %21 : vector<8x8xf32>
    %23 = math.exp %22 : vector<8x8xf32>
    %cst_9 = arith.constant dense<0.000000e+00> : vector<8xf32>
    %24 = vector.multi_reduction <add>, %23, %cst_9 [1] : vector<8x8xf32> to vector<8xf32>
    %25 = vector.shape_cast %24 : vector<8xf32> to vector<8x1xf32>
    %26 = tpu.reciprocal %25 {approx = true} : vector<8x1xf32> -> vector<8x1xf32>
    %27 = vector.broadcast %26 : vector<8x1xf32> to vector<8x8xf32>
    %28 = arith.mulf %23, %27 : vector<8x8xf32>
    %29 = arith.truncf %28 : vector<8x8xf32> to vector<8x8xbf16>
    %cst_10 = arith.constant dense<0.000000e+00> : vector<8x4xf32>
    %30 = tpu.matmul %29, %15, %cst_10 {dimension_numbers = #tpu.dot_dimension_numbers<[1], [0], [0], [1], [0, 0, 1, 1], [], []>} : vector<8x8xbf16>, vector<8x4xbf16>, vector<8x4xf32> -> vector<8x4xf32>
    %31 = vector.extract_strided_slice %8 {offsets = [0, 4], sizes = [8, 4], strides = [1, 1]} : vector<8x32xbf16> to vector<8x4xbf16>
    %32 = vector.extract_strided_slice %10 {offsets = [0, 4], sizes = [8, 4], strides = [1, 1]} : vector<8x32xbf16> to vector<8x4xbf16>
    %33 = vector.extract_strided_slice %12 {offsets = [0, 4], sizes = [8, 4], strides = [1, 1]} : vector<8x32xbf16> to vector<8x4xbf16>
    %cst_11 = arith.constant dense<0.000000e+00> : vector<8x8xf32>
    %34 = tpu.matmul %31, %32, %cst_11 {dimension_numbers = #tpu.dot_dimension_numbers<[1], [1], [0], [0], [0, 0, 1, 0], [], []>} : vector<8x4xbf16>, vector<8x4xbf16>, vector<8x8xf32> -> vector<8x8xf32>
    %cst_12 = arith.constant 5.000000e-01 : f32
    %35 = vector.broadcast %cst_12 : f32 to vector<8x8xf32>
    %36 = arith.mulf %34, %35 : vector<8x8xf32>
    %cst_13 = arith.constant dense<0xFF800000> : vector<8xf32>
    %37 = vector.multi_reduction <maximumf>, %36, %cst_13 [1] : vector<8x8xf32> to vector<8xf32>
    %38 = vector.shape_cast %37 : vector<8xf32> to vector<8x1xf32>
    %39 = vector.broadcast %38 : vector<8x1xf32> to vector<8x8xf32>
    %40 = arith.subf %36, %39 : vector<8x8xf32>
    %41 = math.exp %40 : vector<8x8xf32>
    %cst_14 = arith.constant dense<0.000000e+00> : vector<8xf32>
    %42 = vector.multi_reduction <add>, %41, %cst_14 [1] : vector<8x8xf32> to vector<8xf32>
    %43 = vector.shape_cast %42 : vector<8xf32> to vector<8x1xf32>
    %44 = tpu.reciprocal %43 {approx = true} : vector<8x1xf32> -> vector<8x1xf32>
    %45 = vector.broadcast %44 : vector<8x1xf32> to vector<8x8xf32>
    %46 = arith.mulf %41, %45 : vector<8x8xf32>
    %47 = arith.truncf %46 : vector<8x8xf32> to vector<8x8xbf16>
    %cst_15 = arith.constant dense<0.000000e+00> : vector<8x4xf32>
    %48 = tpu.matmul %47, %33, %cst_15 {dimension_numbers = #tpu.dot_dimension_numbers<[1], [0], [0], [1], [0, 0, 1, 1], [], []>} : vector<8x8xbf16>, vector<8x4xbf16>, vector<8x4xf32> -> vector<8x4xf32>
    %49 = vector.extract_strided_slice %8 {offsets = [0, 8], sizes = [8, 4], strides = [1, 1]} : vector<8x32xbf16> to vector<8x4xbf16>
    %50 = vector.extract_strided_slice %10 {offsets = [0, 8], sizes = [8, 4], strides = [1, 1]} : vector<8x32xbf16> to vector<8x4xbf16>
    %51 = vector.extract_strided_slice %12 {offsets = [0, 8], sizes = [8, 4], strides = [1, 1]} : vector<8x32xbf16> to vector<8x4xbf16>
    %cst_16 = arith.constant dense<0.000000e+00> : vector<8x8xf32>
    %52 = tpu.matmul %49, %50, %cst_16 {dimension_numbers = #tpu.dot_dimension_numbers<[1], [1], [0], [0], [0, 0, 1, 0], [], []>} : vector<8x4xbf16>, vector<8x4xbf16>, vector<8x8xf32> -> vector<8x8xf32>
    %cst_17 = arith.constant 5.000000e-01 : f32
    %53 = vector.broadcast %cst_17 : f32 to vector<8x8xf32>
    %54 = arith.mulf %52, %53 : vector<8x8xf32>
    %cst_18 = arith.constant dense<0xFF800000> : vector<8xf32>
    %55 = vector.multi_reduction <maximumf>, %54, %cst_18 [1] : vector<8x8xf32> to vector<8xf32>
    %56 = vector.shape_cast %55 : vector<8xf32> to vector<8x1xf32>
    %57 = vector.broadcast %56 : vector<8x1xf32> to vector<8x8xf32>
    %58 = arith.subf %54, %57 : vector<8x8xf32>
    %59 = math.exp %58 : vector<8x8xf32>
    %cst_19 = arith.constant dense<0.000000e+00> : vector<8xf32>
    %60 = vector.multi_reduction <add>, %59, %cst_19 [1] : vector<8x8xf32> to vector<8xf32>
    %61 = vector.shape_cast %60 : vector<8xf32> to vector<8x1xf32>
    %62 = tpu.reciprocal %61 {approx = true} : vector<8x1xf32> -> vector<8x1xf32>
    %63 = vector.broadcast %62 : vector<8x1xf32> to vector<8x8xf32>
    %64 = arith.mulf %59, %63 : vector<8x8xf32>
    %65 = arith.truncf %64 : vector<8x8xf32> to vector<8x8xbf16>
    %cst_20 = arith.constant dense<0.000000e+00> : vector<8x4xf32>
    %66 = tpu.matmul %65, %51, %cst_20 {dimension_numbers = #tpu.dot_dimension_numbers<[1], [0], [0], [1], [0, 0, 1, 1], [], []>} : vector<8x8xbf16>, vector<8x4xbf16>, vector<8x4xf32> -> vector<8x4xf32>
    %67 = vector.extract_strided_slice %8 {offsets = [0, 12], sizes = [8, 4], strides = [1, 1]} : vector<8x32xbf16> to vector<8x4xbf16>
    %68 = vector.extract_strided_slice %10 {offsets = [0, 12], sizes = [8, 4], strides = [1, 1]} : vector<8x32xbf16> to vector<8x4xbf16>
    %69 = vector.extract_strided_slice %12 {offsets = [0, 12], sizes = [8, 4], strides = [1, 1]} : vector<8x32xbf16> to vector<8x4xbf16>
    %cst_21 = arith.constant dense<0.000000e+00> : vector<8x8xf32>
    %70 = tpu.matmul %67, %68, %cst_21 {dimension_numbers = #tpu.dot_dimension_numbers<[1], [1], [0], [0], [0, 0, 1, 0], [], []>} : vector<8x4xbf16>, vector<8x4xbf16>, vector<8x8xf32> -> vector<8x8xf32>
    %cst_22 = arith.constant 5.000000e-01 : f32
    %71 = vector.broadcast %cst_22 : f32 to vector<8x8xf32>
    %72 = arith.mulf %70, %71 : vector<8x8xf32>
    %cst_23 = arith.constant dense<0xFF800000> : vector<8xf32>
    %73 = vector.multi_reduction <maximumf>, %72, %cst_23 [1] : vector<8x8xf32> to vector<8xf32>
    %74 = vector.shape_cast %73 : vector<8xf32> to vector<8x1xf32>
    %75 = vector.broadcast %74 : vector<8x1xf32> to vector<8x8xf32>
    %76 = arith.subf %72, %75 : vector<8x8xf32>
    %77 = math.exp %76 : vector<8x8xf32>
    %cst_24 = arith.constant dense<0.000000e+00> : vector<8xf32>
    %78 = vector.multi_reduction <add>, %77, %cst_24 [1] : vector<8x8xf32> to vector<8xf32>
    %79 = vector.shape_cast %78 : vector<8xf32> to vector<8x1xf32>
    %80 = tpu.reciprocal %79 {approx = true} : vector<8x1xf32> -> vector<8x1xf32>
    %81 = vector.broadcast %80 : vector<8x1xf32> to vector<8x8xf32>
    %82 = arith.mulf %77, %81 : vector<8x8xf32>
    %83 = arith.truncf %82 : vector<8x8xf32> to vector<8x8xbf16>
    %cst_25 = arith.constant dense<0.000000e+00> : vector<8x4xf32>
    %84 = tpu.matmul %83, %69, %cst_25 {dimension_numbers = #tpu.dot_dimension_numbers<[1], [0], [0], [1], [0, 0, 1, 1], [], []>} : vector<8x8xbf16>, vector<8x4xbf16>, vector<8x4xf32> -> vector<8x4xf32>
    %85 = vector.extract_strided_slice %8 {offsets = [0, 16], sizes = [8, 4], strides = [1, 1]} : vector<8x32xbf16> to vector<8x4xbf16>
    %86 = vector.extract_strided_slice %10 {offsets = [0, 16], sizes = [8, 4], strides = [1, 1]} : vector<8x32xbf16> to vector<8x4xbf16>
    %87 = vector.extract_strided_slice %12 {offsets = [0, 16], sizes = [8, 4], strides = [1, 1]} : vector<8x32xbf16> to vector<8x4xbf16>
    %cst_26 = arith.constant dense<0.000000e+00> : vector<8x8xf32>
    %88 = tpu.matmul %85, %86, %cst_26 {dimension_numbers = #tpu.dot_dimension_numbers<[1], [1], [0], [0], [0, 0, 1, 0], [], []>} : vector<8x4xbf16>, vector<8x4xbf16>, vector<8x8xf32> -> vector<8x8xf32>
    %cst_27 = arith.constant 5.000000e-01 : f32
    %89 = vector.broadcast %cst_27 : f32 to vector<8x8xf32>
    %90 = arith.mulf %88, %89 : vector<8x8xf32>
    %cst_28 = arith.constant dense<0xFF800000> : vector<8xf32>
    %91 = vector.multi_reduction <maximumf>, %90, %cst_28 [1] : vector<8x8xf32> to vector<8xf32>
    %92 = vector.shape_cast %91 : vector<8xf32> to vector<8x1xf32>
    %93 = vector.broadcast %92 : vector<8x1xf32> to vector<8x8xf32>
    %94 = arith.subf %90, %93 : vector<8x8xf32>
    %95 = math.exp %94 : vector<8x8xf32>
    %cst_29 = arith.constant dense<0.000000e+00> : vector<8xf32>
    %96 = vector.multi_reduction <add>, %95, %cst_29 [1] : vector<8x8xf32> to vector<8xf32>
    %97 = vector.shape_cast %96 : vector<8xf32> to vector<8x1xf32>
    %98 = tpu.reciprocal %97 {approx = true} : vector<8x1xf32> -> vector<8x1xf32>
    %99 = vector.broadcast %98 : vector<8x1xf32> to vector<8x8xf32>
    %100 = arith.mulf %95, %99 : vector<8x8xf32>
    %101 = arith.truncf %100 : vector<8x8xf32> to vector<8x8xbf16>
    %cst_30 = arith.constant dense<0.000000e+00> : vector<8x4xf32>
    %102 = tpu.matmul %101, %87, %cst_30 {dimension_numbers = #tpu.dot_dimension_numbers<[1], [0], [0], [1], [0, 0, 1, 1], [], []>} : vector<8x8xbf16>, vector<8x4xbf16>, vector<8x4xf32> -> vector<8x4xf32>
    %103 = vector.extract_strided_slice %8 {offsets = [0, 20], sizes = [8, 4], strides = [1, 1]} : vector<8x32xbf16> to vector<8x4xbf16>
    %104 = vector.extract_strided_slice %10 {offsets = [0, 20], sizes = [8, 4], strides = [1, 1]} : vector<8x32xbf16> to vector<8x4xbf16>
    %105 = vector.extract_strided_slice %12 {offsets = [0, 20], sizes = [8, 4], strides = [1, 1]} : vector<8x32xbf16> to vector<8x4xbf16>
    %cst_31 = arith.constant dense<0.000000e+00> : vector<8x8xf32>
    %106 = tpu.matmul %103, %104, %cst_31 {dimension_numbers = #tpu.dot_dimension_numbers<[1], [1], [0], [0], [0, 0, 1, 0], [], []>} : vector<8x4xbf16>, vector<8x4xbf16>, vector<8x8xf32> -> vector<8x8xf32>
    %cst_32 = arith.constant 5.000000e-01 : f32
    %107 = vector.broadcast %cst_32 : f32 to vector<8x8xf32>
    %108 = arith.mulf %106, %107 : vector<8x8xf32>
    %cst_33 = arith.constant dense<0xFF800000> : vector<8xf32>
    %109 = vector.multi_reduction <maximumf>, %108, %cst_33 [1] : vector<8x8xf32> to vector<8xf32>
    %110 = vector.shape_cast %109 : vector<8xf32> to vector<8x1xf32>
    %111 = vector.broadcast %110 : vector<8x1xf32> to vector<8x8xf32>
    %112 = arith.subf %108, %111 : vector<8x8xf32>
    %113 = math.exp %112 : vector<8x8xf32>
    %cst_34 = arith.constant dense<0.000000e+00> : vector<8xf32>
    %114 = vector.multi_reduction <add>, %113, %cst_34 [1] : vector<8x8xf32> to vector<8xf32>
    %115 = vector.shape_cast %114 : vector<8xf32> to vector<8x1xf32>
    %116 = tpu.reciprocal %115 {approx = true} : vector<8x1xf32> -> vector<8x1xf32>
    %117 = vector.broadcast %116 : vector<8x1xf32> to vector<8x8xf32>
    %118 = arith.mulf %113, %117 : vector<8x8xf32>
    %119 = arith.truncf %118 : vector<8x8xf32> to vector<8x8xbf16>
    %cst_35 = arith.constant dense<0.000000e+00> : vector<8x4xf32>
    %120 = tpu.matmul %119, %105, %cst_35 {dimension_numbers = #tpu.dot_dimension_numbers<[1], [0], [0], [1], [0, 0, 1, 1], [], []>} : vector<8x8xbf16>, vector<8x4xbf16>, vector<8x4xf32> -> vector<8x4xf32>
    %121 = vector.extract_strided_slice %8 {offsets = [0, 24], sizes = [8, 4], strides = [1, 1]} : vector<8x32xbf16> to vector<8x4xbf16>
    %122 = vector.extract_strided_slice %10 {offsets = [0, 24], sizes = [8, 4], strides = [1, 1]} : vector<8x32xbf16> to vector<8x4xbf16>
    %123 = vector.extract_strided_slice %12 {offsets = [0, 24], sizes = [8, 4], strides = [1, 1]} : vector<8x32xbf16> to vector<8x4xbf16>
    %cst_36 = arith.constant dense<0.000000e+00> : vector<8x8xf32>
    %124 = tpu.matmul %121, %122, %cst_36 {dimension_numbers = #tpu.dot_dimension_numbers<[1], [1], [0], [0], [0, 0, 1, 0], [], []>} : vector<8x4xbf16>, vector<8x4xbf16>, vector<8x8xf32> -> vector<8x8xf32>
    %cst_37 = arith.constant 5.000000e-01 : f32
    %125 = vector.broadcast %cst_37 : f32 to vector<8x8xf32>
    %126 = arith.mulf %124, %125 : vector<8x8xf32>
    %cst_38 = arith.constant dense<0xFF800000> : vector<8xf32>
    %127 = vector.multi_reduction <maximumf>, %126, %cst_38 [1] : vector<8x8xf32> to vector<8xf32>
    %128 = vector.shape_cast %127 : vector<8xf32> to vector<8x1xf32>
    %129 = vector.broadcast %128 : vector<8x1xf32> to vector<8x8xf32>
    %130 = arith.subf %126, %129 : vector<8x8xf32>
    %131 = math.exp %130 : vector<8x8xf32>
    %cst_39 = arith.constant dense<0.000000e+00> : vector<8xf32>
    %132 = vector.multi_reduction <add>, %131, %cst_39 [1] : vector<8x8xf32> to vector<8xf32>
    %133 = vector.shape_cast %132 : vector<8xf32> to vector<8x1xf32>
    %134 = tpu.reciprocal %133 {approx = true} : vector<8x1xf32> -> vector<8x1xf32>
    %135 = vector.broadcast %134 : vector<8x1xf32> to vector<8x8xf32>
    %136 = arith.mulf %131, %135 : vector<8x8xf32>
    %137 = arith.truncf %136 : vector<8x8xf32> to vector<8x8xbf16>
    %cst_40 = arith.constant dense<0.000000e+00> : vector<8x4xf32>
    %138 = tpu.matmul %137, %123, %cst_40 {dimension_numbers = #tpu.dot_dimension_numbers<[1], [0], [0], [1], [0, 0, 1, 1], [], []>} : vector<8x8xbf16>, vector<8x4xbf16>, vector<8x4xf32> -> vector<8x4xf32>
    %139 = vector.extract_strided_slice %8 {offsets = [0, 28], sizes = [8, 4], strides = [1, 1]} : vector<8x32xbf16> to vector<8x4xbf16>
    %140 = vector.extract_strided_slice %10 {offsets = [0, 28], sizes = [8, 4], strides = [1, 1]} : vector<8x32xbf16> to vector<8x4xbf16>
    %141 = vector.extract_strided_slice %12 {offsets = [0, 28], sizes = [8, 4], strides = [1, 1]} : vector<8x32xbf16> to vector<8x4xbf16>
    %cst_41 = arith.constant dense<0.000000e+00> : vector<8x8xf32>
    %142 = tpu.matmul %139, %140, %cst_41 {dimension_numbers = #tpu.dot_dimension_numbers<[1], [1], [0], [0], [0, 0, 1, 0], [], []>} : vector<8x4xbf16>, vector<8x4xbf16>, vector<8x8xf32> -> vector<8x8xf32>
    %cst_42 = arith.constant 5.000000e-01 : f32
    %143 = vector.broadcast %cst_42 : f32 to vector<8x8xf32>
    %144 = arith.mulf %142, %143 : vector<8x8xf32>
    %cst_43 = arith.constant dense<0xFF800000> : vector<8xf32>
    %145 = vector.multi_reduction <maximumf>, %144, %cst_43 [1] : vector<8x8xf32> to vector<8xf32>
    %146 = vector.shape_cast %145 : vector<8xf32> to vector<8x1xf32>
    %147 = vector.broadcast %146 : vector<8x1xf32> to vector<8x8xf32>
    %148 = arith.subf %144, %147 : vector<8x8xf32>
    %149 = math.exp %148 : vector<8x8xf32>
    %cst_44 = arith.constant dense<0.000000e+00> : vector<8xf32>
    %150 = vector.multi_reduction <add>, %149, %cst_44 [1] : vector<8x8xf32> to vector<8xf32>
    %151 = vector.shape_cast %150 : vector<8xf32> to vector<8x1xf32>
    %152 = tpu.reciprocal %151 {approx = true} : vector<8x1xf32> -> vector<8x1xf32>
    %153 = vector.broadcast %152 : vector<8x1xf32> to vector<8x8xf32>
    %154 = arith.mulf %149, %153 : vector<8x8xf32>
    %155 = arith.truncf %154 : vector<8x8xf32> to vector<8x8xbf16>
    %cst_45 = arith.constant dense<0.000000e+00> : vector<8x4xf32>
    %156 = tpu.matmul %155, %141, %cst_45 {dimension_numbers = #tpu.dot_dimension_numbers<[1], [0], [0], [1], [0, 0, 1, 1], [], []>} : vector<8x8xbf16>, vector<8x4xbf16>, vector<8x4xf32> -> vector<8x4xf32>
    %157 = tpu.concatenate %30, %48, %66, %84, %102, %120, %138, %156 in 1 : vector<8x4xf32>, vector<8x4xf32>, vector<8x4xf32>, vector<8x4xf32>, vector<8x4xf32>, vector<8x4xf32>, vector<8x4xf32>, vector<8x4xf32> -> vector<8x32xf32>
    %158 = arith.truncf %157 : vector<8x32xf32> to vector<8x32xbf16>
    %c0_46 = arith.constant 0 : index
    %c0_47 = arith.constant 0 : index
    %159 = vector.load %arg4[%c0_46, %c0_47] : memref<32x32xbf16, #tpu.memory_space<vmem>>, vector<32x32xbf16>
    %cst_48 = arith.constant dense<0.000000e+00> : vector<8x32xf32>
    %160 = tpu.matmul %158, %159, %cst_48 {dimension_numbers = #tpu.dot_dimension_numbers<[1], [0], [0], [1], [0, 0, 1, 1], [], []>} : vector<8x32xbf16>, vector<32x32xbf16>, vector<8x32xf32> -> vector<8x32xf32>
    %c0_49 = arith.constant 0 : index
    %c0_50 = arith.constant 0 : index
    %161 = vector.load %arg5[%c0_49, %c0_50] : memref<1x32xf32, #tpu.memory_space<vmem>>, vector<1x32xf32>
    %162 = vector.broadcast %161 : vector<1x32xf32> to vector<8x32xf32>
    %163 = arith.addf %160, %162 : vector<8x32xf32>
    %164 = arith.extf %1 : vector<8x32xbf16> to vector<8x32xf32>
    %165 = arith.addf %163, %164 : vector<8x32xf32>
    %cst_51 = arith.constant dense<0.000000e+00> : vector<8xf32>
    %166 = vector.multi_reduction <add>, %165, %cst_51 [1] : vector<8x32xf32> to vector<8xf32>
    %167 = vector.shape_cast %166 : vector<8xf32> to vector<8x1xf32>
    %cst_52 = arith.constant 3.200000e+01 : f32
    %168 = vector.broadcast %cst_52 : f32 to vector<8x1xf32>
    %169 = arith.divf %167, %168 : vector<8x1xf32>
    %170 = vector.broadcast %169 : vector<8x1xf32> to vector<8x32xf32>
    %171 = arith.subf %165, %170 : vector<8x32xf32>
    %172 = arith.mulf %171, %171 : vector<8x32xf32>
    %cst_53 = arith.constant dense<0.000000e+00> : vector<8xf32>
    %173 = vector.multi_reduction <add>, %172, %cst_53 [1] : vector<8x32xf32> to vector<8xf32>
    %174 = vector.shape_cast %173 : vector<8xf32> to vector<8x1xf32>
    %cst_54 = arith.constant 3.200000e+01 : f32
    %175 = vector.broadcast %cst_54 : f32 to vector<8x1xf32>
    %176 = arith.divf %174, %175 : vector<8x1xf32>
    %177 = vector.broadcast %169 : vector<8x1xf32> to vector<8x32xf32>
    %178 = arith.subf %165, %177 : vector<8x32xf32>
    %cst_55 = arith.constant 9.99999974E-6 : f32
    %179 = vector.broadcast %cst_55 : f32 to vector<8x1xf32>
    %180 = arith.addf %176, %179 : vector<8x1xf32>
    %181 = math.rsqrt %180 : vector<8x1xf32>
    %182 = vector.broadcast %181 : vector<8x1xf32> to vector<8x32xf32>
    %183 = arith.mulf %178, %182 : vector<8x32xf32>
    %c0_56 = arith.constant 0 : index
    %c0_57 = arith.constant 0 : index
    %184 = vector.load %arg6[%c0_56, %c0_57] : memref<1x32xf32, #tpu.memory_space<vmem>>, vector<1x32xf32>
    %185 = vector.broadcast %184 : vector<1x32xf32> to vector<8x32xf32>
    %186 = arith.mulf %183, %185 : vector<8x32xf32>
    %c0_58 = arith.constant 0 : index
    %c0_59 = arith.constant 0 : index
    %187 = vector.load %arg7[%c0_58, %c0_59] : memref<1x32xf32, #tpu.memory_space<vmem>>, vector<1x32xf32>
    %188 = vector.broadcast %187 : vector<1x32xf32> to vector<8x32xf32>
    %189 = arith.addf %186, %188 : vector<8x32xf32>
    %190 = arith.truncf %189 : vector<8x32xf32> to vector<8x32xbf16>
    %c0_60 = arith.constant 0 : index
    %c0_61 = arith.constant 0 : index
    %c0_62 = arith.constant 0 : index
    %191 = vector.load %arg8[%c0_60, %c0_61, %c0_62] : memref<1x8x32xbf16, #tpu.memory_space<vmem>>, vector<1x8x32xbf16>
    %192 = vector.shape_cast %191 : vector<1x8x32xbf16> to vector<8x32xbf16>
    %193 = vector.shape_cast %190 : vector<8x32xbf16> to vector<1x8x32xbf16>
    tpu.vector_store %arg8[%c0_60, %c0_61, %c0_62], %193 {strides = array<i32>} : memref<1x8x32xbf16, #tpu.memory_space<vmem>>, vector<1x8x32xbf16>,
    return
  }
  func.func @transform_0(%arg0: i32) -> (i32, i32, i32) {
    %c0_i32 = arith.constant 0 : i32
    %c0_i32_0 = arith.constant 0 : i32
    %c0_i32_1 = arith.constant 0 : i32
    return %arg0, %c0_i32, %c0_i32_0 : i32, i32, i32
  }
  func.func @transform_1(%arg0: i32) -> (i32, i32) {
    %c0_i32 = arith.constant 0 : i32
    %c0_i32_0 = arith.constant 0 : i32
    %c0_i32_1 = arith.constant 0 : i32
    return %c0_i32, %c0_i32_0 : i32, i32
  }
  func.func @transform_2(%arg0: i32) -> (i32, i32) {
    %c0_i32 = arith.constant 0 : i32
    %c0_i32_0 = arith.constant 0 : i32
    %c0_i32_1 = arith.constant 0 : i32
    return %c0_i32, %c0_i32_0 : i32, i32
  }
  func.func @transform_3(%arg0: i32) -> (i32, i32) {
    %c0_i32 = arith.constant 0 : i32
    %c0_i32_0 = arith.constant 0 : i32
    %c0_i32_1 = arith.constant 0 : i32
    return %c0_i32, %c0_i32_0 : i32, i32
  }
  func.func @transform_4(%arg0: i32) -> (i32, i32) {
    %c0_i32 = arith.constant 0 : i32
    %c0_i32_0 = arith.constant 0 : i32
    %c0_i32_1 = arith.constant 0 : i32
    return %c0_i32, %c0_i32_0 : i32, i32
  }
  func.func @transform_5(%arg0: i32) -> (i32, i32) {
    %c0_i32 = arith.constant 0 : i32
    %c0_i32_0 = arith.constant 0 : i32
    %c0_i32_1 = arith.constant 0 : i32
    return %c0_i32, %c0_i32_0 : i32, i32
  }
  func.func @transform_6(%arg0: i32) -> (i32, i32) {
    %c0_i32 = arith.constant 0 : i32
    %c0_i32_0 = arith.constant 0 : i32
    %c0_i32_1 = arith.constant 0 : i32
    return %c0_i32, %c0_i32_0 : i32, i32
  }
  func.func @transform_7(%arg0: i32) -> (i32, i32, i32) {
    %c0_i32 = arith.constant 0 : i32
    %c0_i32_0 = arith.constant 0 : i32
    %c0_i32_1 = arith.constant 0 : i32
    return %arg0, %c0_i32, %c0_i32_0 : i32, i32, i32
  }
}

module attributes {stable_mosaic.version = 11 : i64} {
  func.func @_ffn_block_kernel(%arg0: i32, %arg1: memref<1x8x32xbf16, #tpu.memory_space<vmem>>, %arg2: memref<32x2048xbf16, #tpu.memory_space<vmem>>, %arg3: memref<1x2048xf32, #tpu.memory_space<vmem>>, %arg4: memref<2048x32xbf16, #tpu.memory_space<vmem>>, %arg5: memref<1x32xf32, #tpu.memory_space<vmem>>, %arg6: memref<1x32xf32, #tpu.memory_space<vmem>>, %arg7: memref<1x32xf32, #tpu.memory_space<vmem>>, %arg8: memref<1x8x32xbf16, #tpu.memory_space<vmem>>) attributes {dimension_semantics = [#tpu.dimension_semantics<parallel>], iteration_bounds = array<i64: 2>, scalar_prefetch = 0 : i64, scratch_operands = 0 : i64, tpu.core_type = #tpu.core_type<tc>, window_params = [{transform_indices = @transform_0, window_bounds = array<i64: 1, 8, 32>}, {pipeline_mode = #tpu.pipeline_mode<synchronous>, transform_indices = @transform_1, window_bounds = array<i64: 32, 2048>}, {pipeline_mode = #tpu.pipeline_mode<synchronous>, transform_indices = @transform_2, window_bounds = array<i64: 1, 2048>}, {pipeline_mode = #tpu.pipeline_mode<synchronous>, transform_indices = @transform_3, window_bounds = array<i64: 2048, 32>}, {pipeline_mode = #tpu.pipeline_mode<synchronous>, transform_indices = @transform_4, window_bounds = array<i64: 1, 32>}, {pipeline_mode = #tpu.pipeline_mode<synchronous>, transform_indices = @transform_5, window_bounds = array<i64: 1, 32>}, {pipeline_mode = #tpu.pipeline_mode<synchronous>, transform_indices = @transform_6, window_bounds = array<i64: 1, 32>}, {transform_indices = @transform_7, window_bounds = array<i64: 1, 8, 32>}]} {
    %c0 = arith.constant 0 : index
    %c0_0 = arith.constant 0 : index
    %c0_1 = arith.constant 0 : index
    %0 = vector.load %arg1[%c0, %c0_0, %c0_1] : memref<1x8x32xbf16, #tpu.memory_space<vmem>>, vector<1x8x32xbf16>
    %1 = vector.shape_cast %0 : vector<1x8x32xbf16> to vector<8x32xbf16>
    %c0_2 = arith.constant 0 : index
    %c0_3 = arith.constant 0 : index
    %2 = vector.load %arg2[%c0_2, %c0_3] : memref<32x2048xbf16, #tpu.memory_space<vmem>>, vector<32x2048xbf16>
    %cst = arith.constant dense<0.000000e+00> : vector<8x2048xf32>
    %3 = tpu.matmul %1, %2, %cst {dimension_numbers = #tpu.dot_dimension_numbers<[1], [0], [0], [1], [0, 0, 1, 1], [], []>} : vector<8x32xbf16>, vector<32x2048xbf16>, vector<8x2048xf32> -> vector<8x2048xf32>
    %c0_4 = arith.constant 0 : index
    %c0_5 = arith.constant 0 : index
    %4 = vector.load %arg3[%c0_4, %c0_5] : memref<1x2048xf32, #tpu.memory_space<vmem>>, vector<1x2048xf32>
    %5 = vector.broadcast %4 : vector<1x2048xf32> to vector<8x2048xf32>
    %6 = arith.addf %3, %5 : vector<8x2048xf32>
    %cst_6 = arith.constant 0.000000e+00 : f32
    %7 = vector.broadcast %cst_6 : f32 to vector<8x2048xf32>
    %8 = arith.maximumf %6, %7 : vector<8x2048xf32>
    %9 = arith.truncf %8 : vector<8x2048xf32> to vector<8x2048xbf16>
    %c0_7 = arith.constant 0 : index
    %c0_8 = arith.constant 0 : index
    %10 = vector.load %arg4[%c0_7, %c0_8] : memref<2048x32xbf16, #tpu.memory_space<vmem>>, vector<2048x32xbf16>
    %cst_9 = arith.constant dense<0.000000e+00> : vector<8x32xf32>
    %11 = tpu.matmul %9, %10, %cst_9 {dimension_numbers = #tpu.dot_dimension_numbers<[1], [0], [0], [1], [0, 0, 1, 1], [], []>} : vector<8x2048xbf16>, vector<2048x32xbf16>, vector<8x32xf32> -> vector<8x32xf32>
    %c0_10 = arith.constant 0 : index
    %c0_11 = arith.constant 0 : index
    %12 = vector.load %arg5[%c0_10, %c0_11] : memref<1x32xf32, #tpu.memory_space<vmem>>, vector<1x32xf32>
    %13 = vector.broadcast %12 : vector<1x32xf32> to vector<8x32xf32>
    %14 = arith.addf %11, %13 : vector<8x32xf32>
    %15 = arith.extf %1 : vector<8x32xbf16> to vector<8x32xf32>
    %16 = arith.addf %14, %15 : vector<8x32xf32>
    %cst_12 = arith.constant dense<0.000000e+00> : vector<8xf32>
    %17 = vector.multi_reduction <add>, %16, %cst_12 [1] : vector<8x32xf32> to vector<8xf32>
    %18 = vector.shape_cast %17 : vector<8xf32> to vector<8x1xf32>
    %cst_13 = arith.constant 3.200000e+01 : f32
    %19 = vector.broadcast %cst_13 : f32 to vector<8x1xf32>
    %20 = arith.divf %18, %19 : vector<8x1xf32>
    %21 = vector.broadcast %20 : vector<8x1xf32> to vector<8x32xf32>
    %22 = arith.subf %16, %21 : vector<8x32xf32>
    %23 = arith.mulf %22, %22 : vector<8x32xf32>
    %cst_14 = arith.constant dense<0.000000e+00> : vector<8xf32>
    %24 = vector.multi_reduction <add>, %23, %cst_14 [1] : vector<8x32xf32> to vector<8xf32>
    %25 = vector.shape_cast %24 : vector<8xf32> to vector<8x1xf32>
    %cst_15 = arith.constant 3.200000e+01 : f32
    %26 = vector.broadcast %cst_15 : f32 to vector<8x1xf32>
    %27 = arith.divf %25, %26 : vector<8x1xf32>
    %28 = vector.broadcast %20 : vector<8x1xf32> to vector<8x32xf32>
    %29 = arith.subf %16, %28 : vector<8x32xf32>
    %cst_16 = arith.constant 9.99999974E-6 : f32
    %30 = vector.broadcast %cst_16 : f32 to vector<8x1xf32>
    %31 = arith.addf %27, %30 : vector<8x1xf32>
    %32 = math.rsqrt %31 : vector<8x1xf32>
    %33 = vector.broadcast %32 : vector<8x1xf32> to vector<8x32xf32>
    %34 = arith.mulf %29, %33 : vector<8x32xf32>
    %c0_17 = arith.constant 0 : index
    %c0_18 = arith.constant 0 : index
    %35 = vector.load %arg6[%c0_17, %c0_18] : memref<1x32xf32, #tpu.memory_space<vmem>>, vector<1x32xf32>
    %36 = vector.broadcast %35 : vector<1x32xf32> to vector<8x32xf32>
    %37 = arith.mulf %34, %36 : vector<8x32xf32>
    %c0_19 = arith.constant 0 : index
    %c0_20 = arith.constant 0 : index
    %38 = vector.load %arg7[%c0_19, %c0_20] : memref<1x32xf32, #tpu.memory_space<vmem>>, vector<1x32xf32>
    %39 = vector.broadcast %38 : vector<1x32xf32> to vector<8x32xf32>
    %40 = arith.addf %37, %39 : vector<8x32xf32>
    %41 = arith.truncf %40 : vector<8x32xf32> to vector<8x32xbf16>
    %c0_21 = arith.constant 0 : index
    %c0_22 = arith.constant 0 : index
    %c0_23 = arith.constant 0 : index
    %42 = vector.load %arg8[%c0_21, %c0_22, %c0_23] : memref<1x8x32xbf16, #tpu.memory_space<vmem>>, vector<1x8x32xbf16>
    %43 = vector.shape_cast %42 : vector<1x8x32xbf16> to vector<8x32xbf16>
    %44 = vector.shape_cast %41 : vector<8x32xbf16> to vector<1x8x32xbf16>
    tpu.vector_store %arg8[%c0_21, %c0_22, %c0_23], %44 {strides = array<i32>} : memref<1x8x32xbf16, #tpu.memory_space<vmem>>, vector<1x8x32xbf16>,
    return
  }
  func.func @transform_0(%arg0: i32) -> (i32, i32, i32) {
    %c0_i32 = arith.constant 0 : i32
    %c0_i32_0 = arith.constant 0 : i32
    %c0_i32_1 = arith.constant 0 : i32
    return %arg0, %c0_i32, %c0_i32_0 : i32, i32, i32
  }
  func.func @transform_1(%arg0: i32) -> (i32, i32) {
    %c0_i32 = arith.constant 0 : i32
    %c0_i32_0 = arith.constant 0 : i32
    %c0_i32_1 = arith.constant 0 : i32
    return %c0_i32, %c0_i32_0 : i32, i32
  }
  func.func @transform_2(%arg0: i32) -> (i32, i32) {
    %c0_i32 = arith.constant 0 : i32
    %c0_i32_0 = arith.constant 0 : i32
    %c0_i32_1 = arith.constant 0 : i32
    return %c0_i32, %c0_i32_0 : i32, i32
  }
  func.func @transform_3(%arg0: i32) -> (i32, i32) {
    %c0_i32 = arith.constant 0 : i32
    %c0_i32_0 = arith.constant 0 : i32
    %c0_i32_1 = arith.constant 0 : i32
    return %c0_i32, %c0_i32_0 : i32, i32
  }
  func.func @transform_4(%arg0: i32) -> (i32, i32) {
    %c0_i32 = arith.constant 0 : i32
    %c0_i32_0 = arith.constant 0 : i32
    %c0_i32_1 = arith.constant 0 : i32
    return %c0_i32, %c0_i32_0 : i32, i32
  }
  func.func @transform_5(%arg0: i32) -> (i32, i32) {
    %c0_i32 = arith.constant 0 : i32
    %c0_i32_0 = arith.constant 0 : i32
    %c0_i32_1 = arith.constant 0 : i32
    return %c0_i32, %c0_i32_0 : i32, i32
  }
  func.func @transform_6(%arg0: i32) -> (i32, i32) {
    %c0_i32 = arith.constant 0 : i32
    %c0_i32_0 = arith.constant 0 : i32
    %c0_i32_1 = arith.constant 0 : i32
    return %c0_i32, %c0_i32_0 : i32, i32
  }
  func.func @transform_7(%arg0: i32) -> (i32, i32, i32) {
    %c0_i32 = arith.constant 0 : i32
    %c0_i32_0 = arith.constant 0 : i32
    %c0_i32_1 = arith.constant 0 : i32
    return %arg0, %c0_i32, %c0_i32_0 : i32, i32, i32
  }
}

module attributes {stable_mosaic.version = 11 : i64} {
  func.func @_linear_kernel(%arg0: i32, %arg1: i32, %arg2: i32, %arg3: memref<2x256xbf16, #tpu.memory_space<vmem>>, %arg4: memref<256x256xbf16, #tpu.memory_space<vmem>>, %arg5: memref<1x256xf32, #tpu.memory_space<vmem>>, %arg6: memref<2x256xf32, #tpu.memory_space<vmem>>, %arg7: memref<2x256xf32, #tpu.memory_space<vmem>>) attributes {dimension_semantics = [#tpu.dimension_semantics<parallel>, #tpu.dimension_semantics<parallel>, #tpu.dimension_semantics<arbitrary>], iteration_bounds = array<i64: 1, 1, 1>, scalar_prefetch = 0 : i64, scratch_operands = 1 : i64, tpu.core_type = #tpu.core_type<tc>, window_params = [{transform_indices = @transform_0, window_bounds = array<i64: 2, 256>}, {transform_indices = @transform_1, window_bounds = array<i64: 256, 256>}, {transform_indices = @transform_2, window_bounds = array<i64: 1, 256>}, {transform_indices = @transform_3, window_bounds = array<i64: 2, 256>}]} {
    %c0_i32 = arith.constant 0 : i32
    %0 = arith.cmpi eq, %arg2, %c0_i32 : i32
    %1 = arith.extui %0 : i1 to i32
    %c0_i32_0 = arith.constant 0 : i32
    %2 = arith.cmpi ne, %1, %c0_i32_0 : i32
    scf.if %2 {
      %cst_10 = arith.constant 0.000000e+00 : f32
      %12 = vector.broadcast %cst_10 : f32 to vector<2x256xf32>
      %c0_11 = arith.constant 0 : index
      %c0_12 = arith.constant 0 : index
      %13 = vector.load %arg7[%c0_11, %c0_12] : memref<2x256xf32, #tpu.memory_space<vmem>>, vector<2x256xf32>
      tpu.vector_store %arg7[%c0_11, %c0_12], %12 {strides = array<i32>} : memref<2x256xf32, #tpu.memory_space<vmem>>, vector<2x256xf32>,
    } else {
    }
    %c0 = arith.constant 0 : index
    %c0_1 = arith.constant 0 : index
    %3 = vector.load %arg7[%c0, %c0_1] : memref<2x256xf32, #tpu.memory_space<vmem>>, vector<2x256xf32>
    %c0_2 = arith.constant 0 : index
    %c0_3 = arith.constant 0 : index
    %4 = vector.load %arg3[%c0_2, %c0_3] : memref<2x256xbf16, #tpu.memory_space<vmem>>, vector<2x256xbf16>
    %c0_4 = arith.constant 0 : index
    %c0_5 = arith.constant 0 : index
    %5 = vector.load %arg4[%c0_4, %c0_5] : memref<256x256xbf16, #tpu.memory_space<vmem>>, vector<256x256xbf16>
    %cst = arith.constant dense<0.000000e+00> : vector<2x256xf32>
    %6 = tpu.matmul %4, %5, %cst {dimension_numbers = #tpu.dot_dimension_numbers<[1], [0], [0], [1], [0, 0, 1, 1], [], []>} : vector<2x256xbf16>, vector<256x256xbf16>, vector<2x256xf32> -> vector<2x256xf32>
    %7 = arith.addf %3, %6 : vector<2x256xf32>
    %c0_6 = arith.constant 0 : index
    %c0_7 = arith.constant 0 : index
    %8 = vector.load %arg7[%c0_6, %c0_7] : memref<2x256xf32, #tpu.memory_space<vmem>>, vector<2x256xf32>
    tpu.vector_store %arg7[%c0_6, %c0_7], %7 {strides = array<i32>} : memref<2x256xf32, #tpu.memory_space<vmem>>, vector<2x256xf32>,
    %c0_i32_8 = arith.constant 0 : i32
    %9 = arith.cmpi eq, %arg2, %c0_i32_8 : i32
    %10 = arith.extui %9 : i1 to i32
    %c0_i32_9 = arith.constant 0 : i32
    %11 = arith.cmpi ne, %10, %c0_i32_9 : i32
    scf.if %11 {
      %c0_10 = arith.constant 0 : index
      %c0_11 = arith.constant 0 : index
      %12 = vector.load %arg7[%c0_10, %c0_11] : memref<2x256xf32, #tpu.memory_space<vmem>>, vector<2x256xf32>
      %c0_12 = arith.constant 0 : index
      %c0_13 = arith.constant 0 : index
      %13 = vector.load %arg5[%c0_12, %c0_13] : memref<1x256xf32, #tpu.memory_space<vmem>>, vector<1x256xf32>
      %14 = vector.broadcast %13 : vector<1x256xf32> to vector<2x256xf32>
      %15 = arith.addf %12, %14 : vector<2x256xf32>
      %c0_14 = arith.constant 0 : index
      %c0_15 = arith.constant 0 : index
      %16 = vector.load %arg6[%c0_14, %c0_15] : memref<2x256xf32, #tpu.memory_space<vmem>>, vector<2x256xf32>
      tpu.vector_store %arg6[%c0_14, %c0_15], %15 {strides = array<i32>} : memref<2x256xf32, #tpu.memory_space<vmem>>, vector<2x256xf32>,
    } else {
    }
    return
  }
  func.func @transform_0(%arg0: i32, %arg1: i32, %arg2: i32) -> (i32, i32) {
    %c0_i32 = arith.constant 0 : i32
    return %arg0, %arg2 : i32, i32
  }
  func.func @transform_1(%arg0: i32, %arg1: i32, %arg2: i32) -> (i32, i32) {
    %c0_i32 = arith.constant 0 : i32
    return %arg2, %arg1 : i32, i32
  }
  func.func @transform_2(%arg0: i32, %arg1: i32, %arg2: i32) -> (i32, i32) {
    %c0_i32 = arith.constant 0 : i32
    %c0_i32_0 = arith.constant 0 : i32
    return %c0_i32, %arg1 : i32, i32
  }
  func.func @transform_3(%arg0: i32, %arg1: i32, %arg2: i32) -> (i32, i32) {
    %c0_i32 = arith.constant 0 : i32
    return %arg0, %arg1 : i32, i32
  }
}

</mosaic_0001>

<llo_original>
// kernel: transformer_forward.6
$region0: #{transformer_forward.6}
  #allocation0 [shape = 'u32[]', space=smem, size = 0x4, offset = 0x4, fixed_abs, tag = 'smem constant byte address 0x4 - core index']
  #allocation1 [shape = 'u32[144,128]{1,0:T(1,128)}', space=vmem, size = 0x12000, scoped, tag = 'internal scratch']
  #allocation2 [shape = 'f32[16,32]{1,0:T(8,128)}', space=vmem, size = 0x2000, scoped, tag = 'scratch operand']
  %s0 = inlined_call_operand.vmem [shape: bf16[16,16], index: 0, kind: input, shape index: {}]
  %s1 = inlined_call_operand.vmem [shape: bf16[16,32], index: 1, kind: input, shape index: {}]
  %s2 = inlined_call_operand.vmem [shape: f32[1,32], index: 2, kind: input, shape index: {}]
  %s3 = inlined_call_operand.vmem [shape: bf16[16,32], index: 3, kind: output, shape index: {}]
  %s4 = sld [smem:[#allocation0]]
  $region30: #{transformer_forward.6} parent=0
    _
  %s6 = ssub.s32 1, %s4
  %s7 = scalar_select 0, %s6, %s4
  // Predicated region
  $region2: #{transformer_forward.6} parent=0 // pred_check
    _
  $region3: #{transformer_forward.6} parent=0 // pred_check_branch
    %9 = sbr.rel (0) target = $region5
  $region4: #{transformer_forward.6} parent=0 // pred_region
    _
  $region5: #{transformer_forward.6} parent=0 // pred_fallthru
    _
  // Predicated region
  $region6: #{transformer_forward.6} parent=0 // pred_check
    _
  $region7: #{transformer_forward.6} parent=0 // pred_check_branch
    %11 = sbr.rel (0) target = $region9
  $region8: #{transformer_forward.6} parent=0 // pred_region
    _
  $region9: #{transformer_forward.6} parent=0 // pred_fallthru
    _
  // Predicated region
  $region10: #{transformer_forward.6} parent=0 // pred_check
    _
  $region11: #{transformer_forward.6} parent=0 // pred_check_branch
    %13 = sbr.rel (0) target = $region13
  $region12: #{transformer_forward.6} parent=0 // pred_region
    _
  $region13: #{transformer_forward.6} parent=0 // pred_fallthru
    _
  %p15 = scmp.eq.s32.totalorder 0, 0
  // Predicated region
  $region14: #{transformer_forward.6} parent=0 // pred_check
    %p16 = pneg %p15
  $region15: #{transformer_forward.6} parent=0 // pred_check_branch
    %18 = sbr.rel (%p16) target = $region17
  $region16: #{transformer_forward.6} parent=0 // pred_region
    %vm19 = vcmask 261120
    %20 = vst.msk [vmem:[#allocation2] sm:$0xff] %vm19, 0.0
    %21 = vst.msk [vmem:[#allocation2 + $0x8] sm:$0xff] %vm19, 0.0
  $region17: #{transformer_forward.6} parent=0 // pred_fallthru
    _
  %v22 = vld [vmem:[#allocation2] sm:$0xff]
  %v23 = vld [vmem:[#allocation2 + $0x8] sm:$0xff]
  %v24 = vld [vmem:[%s0] sm:$0xf]
  %v25 = vld [vmem:[%s0 + $0x4] sm:$0xf]
  %v26 = vld [vmem:[%s1] sm:$0xf]
  %v27 = vld [vmem:[%s1 + $0x4] sm:$0xf]
  %v30 = vunpack.c.l.b16 %v24
  %v31 = vunpack.c.l.b16 %v25
  %v32 = vpack.c.b16 %v31, %v30
  %v35 = vunpack.c.l.b16 %v26
  %v36 = vunpack.c.l.b16 %v27
  %v37 = vpack.c.b16 %v36, %v35
  %vm39 = vcmask 130048
  %v41 = vsel %vm39, %v32, 0
  %43 = vmatprep.subr.bf16.mxu0 0
  %44 = vmatpush1.bf16.msra.mxu0 0
  %45 = vmatprep.subr.bf16.mxu0 0
  %46 = vmatpush1.bf16.msra.mxu0 0
  %47 = vmatprep.subr.bf16.mxu0 0
  %48 = vmatpush1.bf16.msra.mxu0 0
  %49 = vmatprep.subr.bf16.mxu0 0
  %50 = vmatpush1.bf16.msra.mxu0 0
  %51 = vmatprep.subr.bf16.mxu0 0
  %52 = vmatpush1.bf16.msra.mxu0 0
  %53 = vmatprep.subr.bf16.mxu0 0
  %54 = vmatpush1.bf16.msra.mxu0 0
  %55 = vmatprep.subr.bf16.mxu0 0
  %56 = vmatpush1.bf16.msra.mxu0 0
  %57 = vmatprep.subr.bf16.mxu0 0
  %58 = vmatpush1.bf16.msra.mxu0 %v37
  %59 = vmatprep.subr.bf16.mxu0 0
  %60 = vmatpush2.bf16.msra.mxu0 0
  %61 = vmatprep.subr.bf16.mxu0 0
  %62 = vmatpush2.bf16.msra.mxu0 0
  %63 = vmatprep.subr.bf16.mxu0 0
  %64 = vmatpush2.bf16.msra.mxu0 0
  %65 = vmatprep.subr.bf16.mxu0 0
  %66 = vmatpush2.bf16.msra.mxu0 0
  %67 = vmatprep.subr.bf16.mxu0 0
  %68 = vmatpush2.bf16.msra.mxu0 0
  %69 = vmatprep.subr.bf16.mxu0 0
  %70 = vmatpush2.bf16.msra.mxu0 0
  %71 = vmatprep.subr.bf16.mxu0 0
  %72 = vmatpush2.bf16.msra.mxu0 0
  %73 = vmatprep.subr.bf16.mxu0 0
  %74 = vmatpush2.bf16.msra.mxu0 0
  %75 = vmatprep.mubr.bf16.mxu0 0
  %76 = vmatmul.mubr.bf16.gmra.mxu0 %v41
  %v77 = vpop.f32.mrf.mxu0
  %v78 = vadd.f32 0.0, %v77
  %v79 = vpop.f32.mrf.mxu0
  %v80 = vpop.f32.mrf.mxu0
  %v81 = vadd.f32 0.0, %v80
  %v82 = vpop.f32.mrf.mxu0
  %83 = vdwg.mxu0
  %v84 = vadd.f32 %v22, %v78
  %v85 = vadd.f32 %v23, %v81
  %vm86 = vcmask 261120
  %87 = vst.msk [vmem:[#allocation2] sm:$0xff] %vm86, %v84
  %88 = vst.msk [vmem:[#allocation2 + $0x8] sm:$0xff] %vm86, %v85
  // Predicated region
  $region18: #{transformer_forward.6} parent=0 // pred_check
    %p89 = pneg %p15
  $region19: #{transformer_forward.6} parent=0 // pred_check_branch
    %91 = sbr.rel (%p89) target = $region21
  $region20: #{transformer_forward.6} parent=0 // pred_region
    %v92 = vld [vmem:[#allocation2] sm:$0xff]
    %v93 = vld [vmem:[#allocation2 + $0x8] sm:$0xff]
    %v94 = vld [vmem:[%s2] sm:$0x1]
    %v96 = vlaneseq
    %v97 = vshrl.u32 %v96, 7
    %v98 = vsub.s32 0, %v97
    %v99 = vrot.slane %v94, %v98
    %v101 = vadd.f32 %v92, %v99
    %v102 = vadd.f32 %v93, %v99
    %v103 = vpack.c.bf16 %v102, %v101
    %v105 = vunpack.c.l.b16 %v103
    %v106 = vunpack.c.h.b16 %v103
    %v107 = vpack.c.b16 %v105, %v105
    %v108 = vpack.c.b16 %v106, %v106
    %vm111 = vcmask 257024
    %112 = vst.msk [vmem:[%s3] sm:$0xf] %vm111, %v107
    %113 = vst.msk [vmem:[%s3 + $0x4] sm:$0xf] %vm111, %v108
  $region21: #{transformer_forward.6} parent=0 // pred_fallthru
    _
  // Predicated region
  $region22: #{transformer_forward.6} parent=0 // pred_check
    _
  $region23: #{transformer_forward.6} parent=0 // pred_check_branch
    %115 = sbr.rel (0) target = $region25
  $region24: #{transformer_forward.6} parent=0 // pred_region
    _
  $region25: #{transformer_forward.6} parent=0 // pred_fallthru
    _
  // Predicated region
  $region26: #{transformer_forward.6} parent=0 // pred_check
    _
  $region27: #{transformer_forward.6} parent=0 // pred_check_branch
    %117 = sbr.rel (0) target = $region29
  $region28: #{transformer_forward.6} parent=0 // pred_region
    _
  $region29: #{transformer_forward.6} parent=0 // pred_fallthru
    _

// kernel: transformer_forward.7
$region0: #{transformer_forward.7}
  #allocation0 [shape = 'u32[]', space=smem, size = 0x4, offset = 0x4, fixed_abs, tag = 'smem constant byte address 0x4 - core index']
  #allocation1 [shape = 'u32[144,128]{1,0:T(1,128)}', space=vmem, size = 0x12000, scoped, tag = 'internal scratch']
  %s0 = inlined_call_operand.vmem [shape: bf16[2,8,32], index: 0, kind: input, shape index: {}]
  %s1 = inlined_call_operand.vmem [shape: bf16[32,96], index: 1, kind: input, shape index: {}]
  %s2 = inlined_call_operand.vmem [shape: f32[1,96], index: 2, kind: input, shape index: {}]
  %s3 = inlined_call_operand.vmem [shape: bf16[32,32], index: 3, kind: input, shape index: {}]
  %s4 = inlined_call_operand.vmem [shape: f32[1,32], index: 4, kind: input, shape index: {}]
  %s5 = inlined_call_operand.vmem [shape: f32[1,32], index: 5, kind: input, shape index: {}]
  %s6 = inlined_call_operand.vmem [shape: f32[1,32], index: 6, kind: input, shape index: {}]
  %s7 = inlined_call_operand.vmem [shape: bf16[2,8,32], index: 7, kind: output, shape index: {}]
  %s8 = sld [smem:[#allocation0]]
  $region61: #{transformer_forward.7} parent=0
    _
  %s10 = ssub.s32 1, %s8
  %s11 = scalar_select 0, %s10, %s8
  loop: start=0, step=1, limit=4
  $region2: #{transformer_forward.7} parent=0 // loop_pre_header
    _
  $region3: #{transformer_forward.7} parent=0 // loop_header
    %s13 = sphi 0, %s17
    %p14 = scmp.ge.s32.totalorder %s13, 4
    %s23 = sphi 0, %s25
    %s26 = sphi 0, %s23
    %s27 = sphi 0, %s26
    %s43 = sphi 0, %s27
    %s47 = sphi 0, %s47
    %s49 = sphi 0, %s47
    %s50 = sphi 0, %s49
    %s64 = sphi 0, %s50
    %s68 = sphi 0, %s68
    %s70 = sphi 0, %s68
    %s71 = sphi 0, %s70
    %s85 = sphi 0, %s71
    %s89 = sphi 0, %s89
    %s91 = sphi 0, %s89
    %s92 = sphi 0, %s91
    %s106 = sphi 0, %s92
    %s110 = sphi 0, %s110
    %s112 = sphi 0, %s110
    %s113 = sphi 0, %s112
    %s127 = sphi 0, %s113
    %s131 = sphi 0, %s131
    %s133 = sphi 0, %s131
    %s134 = sphi 0, %s133
    %s148 = sphi 0, %s134
    %s152 = sphi 0, %s152
    %s154 = sphi 0, %s152
    %s155 = sphi 0, %s154
    %s169 = sphi 0, %s155
    %s175 = sphi 0, %s177
    %s178 = sphi 0, %s175
    %s179 = sphi 0, %s178
    %s195 = sphi 0, %s179
  $region4: #{transformer_forward.7} parent=0 // loop_header_branch
    %16 = sbr.rel (%p14) target = $region8
  $region5: #{transformer_forward.7} parent=0 // loop_body
    %s18 = ssub.s32 %s13, 1
    %s19 = ssub.s32 %s13, 2
    %s20 = sadd.s32 %s13, 1
    %s21 = ssub.s32 %s13, %s20
    %p22 = scmp.eq.s32.totalorder %s21, 0
    %s24 = sadd.s32 %s23, 1
    %s25 = scalar_select %p22, %s23, %s24
    %p28 = pneg %p22
    %p29 = scmp.eq.s32.totalorder %s13, 1
    %p30 = por %p28, %p29
    %p31 = scmp.ne.s32.totalorder %s23, %s26
    %p32 = scmp.eq.s32.totalorder %s13, 0
    %p33 = por %p31, %p32
    %p34 = scmp.ne.s32.totalorder %s23, %s26
    %p35 = scmp.eq.s32.totalorder %s18, 1
    %p36 = por %p34, %p35
    %p37 = scmp.ne.s32.totalorder %s26, %s27
    %p38 = scmp.eq.s32.totalorder %s18, 0
    %p39 = por %p37, %p38
    %p40 = scmp.ne.s32.totalorder %s26, %s27
    %p41 = scmp.eq.s32.totalorder %s19, 1
    %p42 = por %p40, %p41
    %p44 = scmp.ne.s32.totalorder %s27, %s43
    %p45 = scmp.eq.s32.totalorder %s19, 0
    %p46 = por %p44, %p45
    %s48 = sadd.s32 %s47, 1
    %p51 = scmp.eq.s32.totalorder %s13, 1
    %p52 = scmp.ne.s32.totalorder %s47, %s49
    %p53 = scmp.eq.s32.totalorder %s13, 0
    %p54 = por %p52, %p53
    %p55 = scmp.ne.s32.totalorder %s47, %s49
    %p56 = scmp.eq.s32.totalorder %s18, 1
    %p57 = por %p55, %p56
    %p58 = scmp.ne.s32.totalorder %s49, %s50
    %p59 = scmp.eq.s32.totalorder %s18, 0
    %p60 = por %p58, %p59
    %p61 = scmp.ne.s32.totalorder %s49, %s50
    %p62 = scmp.eq.s32.totalorder %s19, 1
    %p63 = por %p61, %p62
    %p65 = scmp.ne.s32.totalorder %s50, %s64
    %p66 = scmp.eq.s32.totalorder %s19, 0
    %p67 = por %p65, %p66
    %s69 = sadd.s32 %s68, 1
    %p72 = scmp.eq.s32.totalorder %s13, 1
    %p73 = scmp.ne.s32.totalorder %s68, %s70
    %p74 = scmp.eq.s32.totalorder %s13, 0
    %p75 = por %p73, %p74
    %p76 = scmp.ne.s32.totalorder %s68, %s70
    %p77 = scmp.eq.s32.totalorder %s18, 1
    %p78 = por %p76, %p77
    %p79 = scmp.ne.s32.totalorder %s70, %s71
    %p80 = scmp.eq.s32.totalorder %s18, 0
    %p81 = por %p79, %p80
    %p82 = scmp.ne.s32.totalorder %s70, %s71
    %p83 = scmp.eq.s32.totalorder %s19, 1
    %p84 = por %p82, %p83
    %p86 = scmp.ne.s32.totalorder %s71, %s85
    %p87 = scmp.eq.s32.totalorder %s19, 0
    %p88 = por %p86, %p87
    %s90 = sadd.s32 %s89, 1
    %p93 = scmp.eq.s32.totalorder %s13, 1
    %p94 = scmp.ne.s32.totalorder %s89, %s91
    %p95 = scmp.eq.s32.totalorder %s13, 0
    %p96 = por %p94, %p95
    %p97 = scmp.ne.s32.totalorder %s89, %s91
    %p98 = scmp.eq.s32.totalorder %s18, 1
    %p99 = por %p97, %p98
    %p100 = scmp.ne.s32.totalorder %s91, %s92
    %p101 = scmp.eq.s32.totalorder %s18, 0
    %p102 = por %p100, %p101
    %p103 = scmp.ne.s32.totalorder %s91, %s92
    %p104 = scmp.eq.s32.totalorder %s19, 1
    %p105 = por %p103, %p104
    %p107 = scmp.ne.s32.totalorder %s92, %s106
    %p108 = scmp.eq.s32.totalorder %s19, 0
    %p109 = por %p107, %p108
    %s111 = sadd.s32 %s110, 1
    %p114 = scmp.eq.s32.totalorder %s13, 1
    %p115 = scmp.ne.s32.totalorder %s110, %s112
    %p116 = scmp.eq.s32.totalorder %s13, 0
    %p117 = por %p115, %p116
    %p118 = scmp.ne.s32.totalorder %s110, %s112
    %p119 = scmp.eq.s32.totalorder %s18, 1
    %p120 = por %p118, %p119
    %p121 = scmp.ne.s32.totalorder %s112, %s113
    %p122 = scmp.eq.s32.totalorder %s18, 0
    %p123 = por %p121, %p122
    %p124 = scmp.ne.s32.totalorder %s112, %s113
    %p125 = scmp.eq.s32.totalorder %s19, 1
    %p126 = por %p124, %p125
    %p128 = scmp.ne.s32.totalorder %s113, %s127
    %p129 = scmp.eq.s32.totalorder %s19, 0
    %p130 = por %p128, %p129
    %s132 = sadd.s32 %s131, 1
    %p135 = scmp.eq.s32.totalorder %s13, 1
    %p136 = scmp.ne.s32.totalorder %s131, %s133
    %p137 = scmp.eq.s32.totalorder %s13, 0
    %p138 = por %p136, %p137
    %p139 = scmp.ne.s32.totalorder %s131, %s133
    %p140 = scmp.eq.s32.totalorder %s18, 1
    %p141 = por %p139, %p140
    %p142 = scmp.ne.s32.totalorder %s133, %s134
    %p143 = scmp.eq.s32.totalorder %s18, 0
    %p144 = por %p142, %p143
    %p145 = scmp.ne.s32.totalorder %s133, %s134
    %p146 = scmp.eq.s32.totalorder %s19, 1
    %p147 = por %p145, %p146
    %p149 = scmp.ne.s32.totalorder %s134, %s148
    %p150 = scmp.eq.s32.totalorder %s19, 0
    %p151 = por %p149, %p150
    %s153 = sadd.s32 %s152, 1
    %p156 = scmp.eq.s32.totalorder %s13, 1
    %p157 = scmp.ne.s32.totalorder %s152, %s154
    %p158 = scmp.eq.s32.totalorder %s13, 0
    %p159 = por %p157, %p158
    %p160 = scmp.ne.s32.totalorder %s152, %s154
    %p161 = scmp.eq.s32.totalorder %s18, 1
    %p162 = por %p160, %p161
    %p163 = scmp.ne.s32.totalorder %s154, %s155
    %p164 = scmp.eq.s32.totalorder %s18, 0
    %p165 = por %p163, %p164
    %p166 = scmp.ne.s32.totalorder %s154, %s155
    %p167 = scmp.eq.s32.totalorder %s19, 1
    %p168 = por %p166, %p167
    %p170 = scmp.ne.s32.totalorder %s155, %s169
    %p171 = scmp.eq.s32.totalorder %s19, 0
    %p172 = por %p170, %p171
    %s173 = ssub.s32 %s13, %s20
    %p174 = scmp.eq.s32.totalorder %s173, 0
    %s176 = sadd.s32 %s175, 1
    %s177 = scalar_select %p174, %s175, %s176
    %p180 = pneg %p174
    %p181 = scmp.eq.s32.totalorder %s13, 1
    %p182 = por %p180, %p181
    %p183 = scmp.ne.s32.totalorder %s175, %s178
    %p184 = scmp.eq.s32.totalorder %s13, 0
    %p185 = por %p183, %p184
    %p186 = scmp.ne.s32.totalorder %s175, %s178
    %p187 = scmp.eq.s32.totalorder %s18, 1
    %p188 = por %p186, %p187
    %p189 = scmp.ne.s32.totalorder %s178, %s179
    %p190 = scmp.eq.s32.totalorder %s18, 0
    %p191 = por %p189, %p190
    %p192 = scmp.ne.s32.totalorder %s178, %s179
    %p193 = scmp.eq.s32.totalorder %s19, 1
    %p194 = por %p192, %p193
    %p196 = scmp.ne.s32.totalorder %s179, %s195
    %p197 = scmp.eq.s32.totalorder %s19, 0
    %p198 = por %p196, %p197
    %p199 = scmp.le.s32.totalorder 1, %s13
    %p200 = scmp.lt.s32.totalorder %s13, 3
    %p201 = pnand %p199, %p200
    %p202 = pneg %p201
    // Predicated region
    $region9: #{transformer_forward.7} parent=5 // pred_check
      _
    $region10: #{transformer_forward.7} parent=5 // pred_check_branch
      %204 = sbr.rel (%p201) target = $region12
    $region11: #{transformer_forward.7} parent=5 // pred_region
      %s205 = ssub.s32 %s13, 1
      // Predicated region
      $region13: #{transformer_forward.7} parent=11 // pred_check
        %p206 = pneg %p60
      $region14: #{transformer_forward.7} parent=11 // pred_check_branch
        %208 = sbr.rel (%p206) target = $region16
      $region15: #{transformer_forward.7} parent=11 // pred_region
        _
      $region16: #{transformer_forward.7} parent=11 // pred_fallthru
        _
      // Predicated region
      $region17: #{transformer_forward.7} parent=11 // pred_check
        %p209 = pneg %p81
      $region18: #{transformer_forward.7} parent=11 // pred_check_branch
        %211 = sbr.rel (%p209) target = $region20
      $region19: #{transformer_forward.7} parent=11 // pred_region
        _
      $region20: #{transformer_forward.7} parent=11 // pred_fallthru
        _
      // Predicated region
      $region21: #{transformer_forward.7} parent=11 // pred_check
        %p212 = pneg %p102
      $region22: #{transformer_forward.7} parent=11 // pred_check_branch
        %214 = sbr.rel (%p212) target = $region24
      $region23: #{transformer_forward.7} parent=11 // pred_region
        _
      $region24: #{transformer_forward.7} parent=11 // pred_fallthru
        _
      // Predicated region
      $region25: #{transformer_forward.7} parent=11 // pred_check
        %p215 = pneg %p123
      $region26: #{transformer_forward.7} parent=11 // pred_check_branch
        %217 = sbr.rel (%p215) target = $region28
      $region27: #{transformer_forward.7} parent=11 // pred_region
        _
      $region28: #{transformer_forward.7} parent=11 // pred_fallthru
        _
      // Predicated region
      $region29: #{transformer_forward.7} parent=11 // pred_check
        %p218 = pneg %p144
      $region30: #{transformer_forward.7} parent=11 // pred_check_branch
        %220 = sbr.rel (%p218) target = $region32
      $region31: #{transformer_forward.7} parent=11 // pred_region
        _
      $region32: #{transformer_forward.7} parent=11 // pred_fallthru
        _
      // Predicated region
      $region33: #{transformer_forward.7} parent=11 // pred_check
        %p221 = pneg %p165
      $region34: #{transformer_forward.7} parent=11 // pred_check_branch
        %223 = sbr.rel (%p221) target = $region36
      $region35: #{transformer_forward.7} parent=11 // pred_region
        _
      $region36: #{transformer_forward.7} parent=11 // pred_fallthru
        _
    $region12: #{transformer_forward.7} parent=5 // pred_fallthru
      _
    %p224 = scmp.lt.s32.totalorder %s13, 2
    // Predicated region
    $region37: #{transformer_forward.7} parent=5 // pred_check
      %p225 = pneg %p224
    $region38: #{transformer_forward.7} parent=5 // pred_check_branch
      %227 = sbr.rel (%p225) target = $region40
    $region39: #{transformer_forward.7} parent=5 // pred_region
      // Predicated region
      $region41: #{transformer_forward.7} parent=39 // pred_check
        %p228 = pneg %p33
      $region42: #{transformer_forward.7} parent=39 // pred_check_branch
        %230 = sbr.rel (%p228) target = $region44
      $region43: #{transformer_forward.7} parent=39 // pred_region
        %p231 = scmp.lt.s32.totalorder %s13, 1
        %s232 = scalar_select %p231, %s13, 1
        %s233 = smul.addr %s232, 4
        %s234 = scalar_lea.vmem %s0, %s233
      $region44: #{transformer_forward.7} parent=39 // pred_fallthru
        _
    $region40: #{transformer_forward.7} parent=5 // pred_fallthru
      _
    %p235 = scmp.le.s32.totalorder 1, %s13
    %p236 = scmp.lt.s32.totalorder %s13, 3
    %p237 = pnand %p235, %p236
    %p238 = pneg %p237
    // Predicated region
    $region45: #{transformer_forward.7} parent=5 // pred_check
      _
    $region46: #{transformer_forward.7} parent=5 // pred_check_branch
      %240 = sbr.rel (%p237) target = $region48
    $region47: #{transformer_forward.7} parent=5 // pred_region
      %s241 = ssub.s32 %s13, 1
      %p242 = scmp.lt.s32.totalorder %s18, 1
      %s243 = scalar_select %p242, %s18, 1
      %s244 = smul.addr %s243, 4
      %s245 = scalar_lea.vmem %s0, %s244
      %p246 = pneg %p39
      %p247 = pneg %p36
      %p248 = pneg %p60
      %p249 = pneg %p57
      %p250 = pneg %p81
      %p251 = pneg %p78
      %p252 = pneg %p102
      %p253 = pneg %p99
      %p254 = pneg %p123
      %p255 = pneg %p120
      %p256 = pneg %p144
      %p257 = pneg %p141
      %p258 = pneg %p165
      %p259 = pneg %p162
      %p260 = pneg %p191
      %p261 = pneg %p188
      %p262 = scmp.lt.s32.totalorder %s18, 1
      %s263 = scalar_select %p262, %s18, 1
      %s264 = smul.addr %s263, 4
      %s265 = scalar_lea.vmem %s7, %s264
      %p266 = scmp.lt.s32.totalorder %s18, 1
      %s267 = scalar_select %p266, %s18, 1
      %s268 = smul.addr %s267, 4
      %s269 = scalar_lea.vmem %s0, %s268
      %p270 = scmp.lt.s32.totalorder %s18, 1
      %s271 = scalar_select %p270, %s18, 1
      %s272 = smul.addr %s271, 4
      %s273 = scalar_lea.vmem %s7, %s272
      %v275 = vld [vmem:[%s269] sm:$0xf]
      %v276 = vld [vmem:[%s1] sm:$0xf]
      %v277 = vld [vmem:[%s1 + $0x4] sm:$0xf]
      %v278 = vld [vmem:[%s1 + $0x8] sm:$0xf]
      %v279 = vld [vmem:[%s1 + $0xc] sm:$0xf]
      %v280 = vld [vmem:[%s2] sm:$0x1]
      %v282 = vlaneseq
      %v283 = vshrl.u32 %v282, 7
      %v284 = vsub.s32 0, %v283
      %v285 = vrot.slane %v280, %v284
      %v291 = vunpack.c.l.b16 %v276
      %v292 = vunpack.c.l.b16 %v277
      %v293 = vunpack.c.l.b16 %v278
      %v294 = vunpack.c.l.b16 %v279
      %v295 = vpack.c.b16 %v292, %v291
      %v296 = vpack.c.b16 %v294, %v293
      %vm299 = vcmask 261120
      %v301 = vsel %vm299, %v275, 0
      %303 = vmatprep.subr.bf16.mxu0 0
      %304 = vmatpush1.bf16.msra.mxu0 0
      %305 = vmatprep.subr.bf16.mxu0 0
      %306 = vmatpush1.bf16.msra.mxu0 0
      %307 = vmatprep.subr.bf16.mxu0 0
      %308 = vmatpush1.bf16.msra.mxu0 0
      %309 = vmatprep.subr.bf16.mxu0 0
      %310 = vmatpush1.bf16.msra.mxu0 0
      %311 = vmatprep.subr.bf16.mxu0 0
      %312 = vmatpush1.bf16.msra.mxu0 0
      %313 = vmatprep.subr.bf16.mxu0 0
      %314 = vmatpush1.bf16.msra.mxu0 0
      %315 = vmatprep.subr.bf16.mxu0 0
      %316 = vmatpush1.bf16.msra.mxu0 %v296
      %317 = vmatprep.subr.bf16.mxu0 0
      %318 = vmatpush1.bf16.msra.mxu0 %v295
      %319 = vmatprep.subr.bf16.mxu0 0
      %320 = vmatpush2.bf16.msra.mxu0 0
      %321 = vmatprep.subr.bf16.mxu0 0
      %322 = vmatpush2.bf16.msra.mxu0 0
      %323 = vmatprep.subr.bf16.mxu0 0
      %324 = vmatpush2.bf16.msra.mxu0 0
      %325 = vmatprep.subr.bf16.mxu0 0
      %326 = vmatpush2.bf16.msra.mxu0 0
      %327 = vmatprep.subr.bf16.mxu0 0
      %328 = vmatpush2.bf16.msra.mxu0 0
      %329 = vmatprep.subr.bf16.mxu0 0
      %330 = vmatpush2.bf16.msra.mxu0 0
      %331 = vmatprep.subr.bf16.mxu0 0
      %332 = vmatpush2.bf16.msra.mxu0 0
      %333 = vmatprep.subr.bf16.mxu0 0
      %334 = vmatpush2.bf16.msra.mxu0 0
      %335 = vmatprep.mubr.bf16.mxu0 0
      %336 = vmatmul.mubr.bf16.gmra.mxu0 %v301
      %v337 = vpop.f32.mrf.mxu0
      %v338 = vadd.f32 %v285, %v337
      %v339 = vpop.f32.mrf.mxu0
      %v340 = vpop.f32.mrf.mxu0
      %v341 = vpop.f32.mrf.mxu0
      %342 = vdwg.mxu0
      %v343 = vpack.c.bf16 %v338, %v338
      %345 = vrot.lane.b32.xlu0 %v343, 96
      %v346 = vpop.permute.xlu0 %345
      %vm347 = vcmask 31744
      %v349 = vsel %vm347, %v343, 0
      %v352 = vsel %vm347, %v346, 0
      %354 = vmatprep.subr.bf16.mxu0 0
      %355 = vmatpush1.bf16.xpose.msra.mxu0 0
      %356 = vmatprep.subr.bf16.mxu0 0
      %357 = vmatpush1.bf16.xpose.msra.mxu0 0
      %358 = vmatprep.subr.bf16.mxu0 0
      %359 = vmatpush1.bf16.xpose.msra.mxu0 0
      %360 = vmatprep.subr.bf16.mxu0 0
      %361 = vmatpush1.bf16.xpose.msra.mxu0 0
      %362 = vmatprep.subr.bf16.mxu0 0
      %363 = vmatpush1.bf16.xpose.msra.mxu0 0
      %364 = vmatprep.subr.bf16.mxu0 0
      %365 = vmatpush1.bf16.xpose.msra.mxu0 0
      %366 = vmatprep.subr.bf16.mxu0 0
      %367 = vmatpush1.bf16.xpose.msra.mxu0 0
      %368 = vmatprep.subr.bf16.mxu0 0
      %369 = vmatpush1.bf16.xpose.msra.mxu0 %v352
      %370 = vmatprep.subr.bf16.mxu0 0
      %371 = vmatpush2.bf16.xpose.msra.mxu0 0
      %372 = vmatprep.subr.bf16.mxu0 0
      %373 = vmatpush2.bf16.xpose.msra.mxu0 0
      %374 = vmatprep.subr.bf16.mxu0 0
      %375 = vmatpush2.bf16.xpose.msra.mxu0 0
      %376 = vmatprep.subr.bf16.mxu0 0
      %377 = vmatpush2.bf16.xpose.msra.mxu0 0
      %378 = vmatprep.subr.bf16.mxu0 0
      %379 = vmatpush2.bf16.xpose.msra.mxu0 0
      %380 = vmatprep.subr.bf16.mxu0 0
      %381 = vmatpush2.bf16.xpose.msra.mxu0 0
      %382 = vmatprep.subr.bf16.mxu0 0
      %383 = vmatpush2.bf16.xpose.msra.mxu0 0
      %384 = vmatprep.subr.bf16.mxu0 0
      %385 = vmatpush2.bf16.xpose.msra.mxu0 0
      %386 = vmatprep.mubr.bf16.mxu0 0
      %387 = vmatmul.mubr.bf16.gmra.mxu0 %v349
      %v388 = vpop.f32.mrf.mxu0
      %v389 = vadd.f32 0.0, %v388
      %v390 = vpop.f32.mrf.mxu0
      %v391 = vpop.f32.mrf.mxu0
      %v392 = vpop.f32.mrf.mxu0
      %393 = vdwg.mxu0
      %v394 = vmul.f32 %v389, 0.5
      %vm395 = vcmask 64512
      %v396 = vsel %vm395, %v394, -inf
      %397 = vmax.xlane.f32.xlu0 %v396
      %v398 = vpop.xlane.xlu0 %397
      %v399 = vsub.f32 %v394, %v398
      %v400 = vmul.f32 %v399, 1.442695
      %v401 = vpow.pop %v400
      %v402 = vsel %vm395, %v401, 0.0
      %403 = vadd.xlane.f32.xlu0 %v402
      %v404 = vpop.xlane.xlu0 %403
      %v405 = vrcp.pop %v404
      %v406 = vmul.f32 %v401, %v405
      %v407 = vpack.c.bf16 %v406, %v406
      %408 = vrot.lane.b32.xlu0 %v343, 64
      %v409 = vpop.permute.xlu0 %408
      %v411 = vsel %vm395, %v407, 0
      %vm413 = vcmask 1043456
      %v415 = vsel %vm413, %v409, 0
      %417 = vmatprep.subr.bf16.mxu0 0
      %418 = vmatpush1.bf16.msra.mxu0 0
      %419 = vmatprep.subr.bf16.mxu0 0
      %420 = vmatpush1.bf16.msra.mxu0 0
      %421 = vmatprep.subr.bf16.mxu0 0
      %422 = vmatpush1.bf16.msra.mxu0 0
      %423 = vmatprep.subr.bf16.mxu0 0
      %424 = vmatpush1.bf16.msra.mxu0 0
      %425 = vmatprep.subr.bf16.mxu0 0
      %426 = vmatpush1.bf16.msra.mxu0 0
      %427 = vmatprep.subr.bf16.mxu0 0
      %428 = vmatpush1.bf16.msra.mxu0 0
      %429 = vmatprep.subr.bf16.mxu0 0
      %430 = vmatpush1.bf16.msra.mxu0 0
      %431 = vmatprep.subr.bf16.mxu0 0
      %432 = vmatpush1.bf16.msra.mxu0 %v415
      %433 = vmatprep.subr.bf16.mxu0 0
      %434 = vmatpush2.bf16.msra.mxu0 0
      %435 = vmatprep.subr.bf16.mxu0 0
      %436 = vmatpush2.bf16.msra.mxu0 0
      %437 = vmatprep.subr.bf16.mxu0 0
      %438 = vmatpush2.bf16.msra.mxu0 0
      %439 = vmatprep.subr.bf16.mxu0 0
      %440 = vmatpush2.bf16.msra.mxu0 0
      %441 = vmatprep.subr.bf16.mxu0 0
      %442 = vmatpush2.bf16.msra.mxu0 0
      %443 = vmatprep.subr.bf16.mxu0 0
      %444 = vmatpush2.bf16.msra.mxu0 0
      %445 = vmatprep.subr.bf16.mxu0 0
      %446 = vmatpush2.bf16.msra.mxu0 0
      %447 = vmatprep.subr.bf16.mxu0 0
      %448 = vmatpush2.bf16.msra.mxu0 0
      %449 = vmatprep.mubr.bf16.mxu0 0
      %450 = vmatmul.mubr.bf16.gmra.mxu0 %v411
      %v451 = vpop.f32.mrf.mxu0
      %v452 = vadd.f32 0.0, %v451
      %v453 = vpop.f32.mrf.mxu0
      %v454 = vpop.f32.mrf.mxu0
      %v455 = vpop.f32.mrf.mxu0
      %456 = vdwg.mxu0
      %457 = vrot.lane.b32.xlu0 %v343, 124
      %v458 = vpop.permute.xlu0 %457
      %459 = vrot.lane.b32.xlu0 %v343, 92
      %v460 = vpop.permute.xlu0 %459
      %v462 = vsel %vm347, %v458, 0
      %v465 = vsel %vm347, %v460, 0
      %467 = vmatprep.subr.bf16.mxu0 0
      %468 = vmatpush1.bf16.xpose.msra.mxu0 0
      %469 = vmatprep.subr.bf16.mxu0 0
      %470 = vmatpush1.bf16.xpose.msra.mxu0 0
      %471 = vmatprep.subr.bf16.mxu0 0
      %472 = vmatpush1.bf16.xpose.msra.mxu0 0
      %473 = vmatprep.subr.bf16.mxu0 0
      %474 = vmatpush1.bf16.xpose.msra.mxu0 0
      %475 = vmatprep.subr.bf16.mxu0 0
      %476 = vmatpush1.bf16.xpose.msra.mxu0 0
      %477 = vmatprep.subr.bf16.mxu0 0
      %478 = vmatpush1.bf16.xpose.msra.mxu0 0
      %479 = vmatprep.subr.bf16.mxu0 0
      %480 = vmatpush1.bf16.xpose.msra.mxu0 0
      %481 = vmatprep.subr.bf16.mxu0 0
      %482 = vmatpush1.bf16.xpose.msra.mxu0 %v465
      %483 = vmatprep.subr.bf16.mxu0 0
      %484 = vmatpush2.bf16.xpose.msra.mxu0 0
      %485 = vmatprep.subr.bf16.mxu0 0
      %486 = vmatpush2.bf16.xpose.msra.mxu0 0
      %487 = vmatprep.subr.bf16.mxu0 0
      %488 = vmatpush2.bf16.xpose.msra.mxu0 0
      %489 = vmatprep.subr.bf16.mxu0 0
      %490 = vmatpush2.bf16.xpose.msra.mxu0 0
      %491 = vmatprep.subr.bf16.mxu0 0
      %492 = vmatpush2.bf16.xpose.msra.mxu0 0
      %493 = vmatprep.subr.bf16.mxu0 0
      %494 = vmatpush2.bf16.xpose.msra.mxu0 0
      %495 = vmatprep.subr.bf16.mxu0 0
      %496 = vmatpush2.bf16.xpose.msra.mxu0 0
      %497 = vmatprep.subr.bf16.mxu0 0
      %498 = vmatpush2.bf16.xpose.msra.mxu0 0
      %499 = vmatprep.mubr.bf16.mxu0 0
      %500 = vmatmul.mubr.bf16.gmra.mxu0 %v462
      %v501 = vpop.f32.mrf.mxu0
      %v502 = vadd.f32 0.0, %v501
      %v503 = vpop.f32.mrf.mxu0
      %v504 = vpop.f32.mrf.mxu0
      %v505 = vpop.f32.mrf.mxu0
      %506 = vdwg.mxu0
      %v507 = vmul.f32 %v502, 0.5
      %v508 = vsel %vm395, %v507, -inf
      %509 = vmax.xlane.f32.xlu0 %v508
      %v510 = vpop.xlane.xlu0 %509
      %v511 = vsub.f32 %v507, %v510
      %v512 = vmul.f32 %v511, 1.442695
      %v513 = vpow.pop %v512
      %v514 = vsel %vm395, %v513, 0.0
      %515 = vadd.xlane.f32.xlu0 %v514
      %v516 = vpop.xlane.xlu0 %515
      %v517 = vrcp.pop %v516
      %v518 = vmul.f32 %v513, %v517
      %v519 = vpack.c.bf16 %v518, %v518
      %520 = vrot.lane.b32.xlu0 %v343, 60
      %v521 = vpop.permute.xlu0 %520
      %v523 = vsel %vm395, %v519, 0
      %v526 = vsel %vm413, %v521, 0
      %528 = vmatprep.subr.bf16.mxu0 0
      %529 = vmatpush1.bf16.msra.mxu0 0
      %530 = vmatprep.subr.bf16.mxu0 0
      %531 = vmatpush1.bf16.msra.mxu0 0
      %532 = vmatprep.subr.bf16.mxu0 0
      %533 = vmatpush1.bf16.msra.mxu0 0
      %534 = vmatprep.subr.bf16.mxu0 0
      %535 = vmatpush1.bf16.msra.mxu0 0
      %536 = vmatprep.subr.bf16.mxu0 0
      %537 = vmatpush1.bf16.msra.mxu0 0
      %538 = vmatprep.subr.bf16.mxu0 0
      %539 = vmatpush1.bf16.msra.mxu0 0
      %540 = vmatprep.subr.bf16.mxu0 0
      %541 = vmatpush1.bf16.msra.mxu0 0
      %542 = vmatprep.subr.bf16.mxu0 0
      %543 = vmatpush1.bf16.msra.mxu0 %v526
      %544 = vmatprep.subr.bf16.mxu0 0
      %545 = vmatpush2.bf16.msra.mxu0 0
      %546 = vmatprep.subr.bf16.mxu0 0
      %547 = vmatpush2.bf16.msra.mxu0 0
      %548 = vmatprep.subr.bf16.mxu0 0
      %549 = vmatpush2.bf16.msra.mxu0 0
      %550 = vmatprep.subr.bf16.mxu0 0
      %551 = vmatpush2.bf16.msra.mxu0 0
      %552 = vmatprep.subr.bf16.mxu0 0
      %553 = vmatpush2.bf16.msra.mxu0 0
      %554 = vmatprep.subr.bf16.mxu0 0
      %555 = vmatpush2.bf16.msra.mxu0 0
      %556 = vmatprep.subr.bf16.mxu0 0
      %557 = vmatpush2.bf16.msra.mxu0 0
      %558 = vmatprep.subr.bf16.mxu0 0
      %559 = vmatpush2.bf16.msra.mxu0 0
      %560 = vmatprep.mubr.bf16.mxu0 0
      %561 = vmatmul.mubr.bf16.gmra.mxu0 %v523
      %v562 = vpop.f32.mrf.mxu0
      %v563 = vadd.f32 0.0, %v562
      %v564 = vpop.f32.mrf.mxu0
      %v565 = vpop.f32.mrf.mxu0
      %v566 = vpop.f32.mrf.mxu0
      %567 = vdwg.mxu0
      %568 = vrot.lane.b32.xlu0 %v343, 120
      %v569 = vpop.permute.xlu0 %568
      %570 = vrot.lane.b32.xlu0 %v343, 88
      %v571 = vpop.permute.xlu0 %570
      %v573 = vsel %vm347, %v569, 0
      %v576 = vsel %vm347, %v571, 0
      %578 = vmatprep.subr.bf16.mxu0 0
      %579 = vmatpush1.bf16.xpose.msra.mxu0 0
      %580 = vmatprep.subr.bf16.mxu0 0
      %581 = vmatpush1.bf16.xpose.msra.mxu0 0
      %582 = vmatprep.subr.bf16.mxu0 0
      %583 = vmatpush1.bf16.xpose.msra.mxu0 0
      %584 = vmatprep.subr.bf16.mxu0 0
      %585 = vmatpush1.bf16.xpose.msra.mxu0 0
      %586 = vmatprep.subr.bf16.mxu0 0
      %587 = vmatpush1.bf16.xpose.msra.mxu0 0
      %588 = vmatprep.subr.bf16.mxu0 0
      %589 = vmatpush1.bf16.xpose.msra.mxu0 0
      %590 = vmatprep.subr.bf16.mxu0 0
      %591 = vmatpush1.bf16.xpose.msra.mxu0 0
      %592 = vmatprep.subr.bf16.mxu0 0
      %593 = vmatpush1.bf16.xpose.msra.mxu0 %v576
      %594 = vmatprep.subr.bf16.mxu0 0
      %595 = vmatpush2.bf16.xpose.msra.mxu0 0
      %596 = vmatprep.subr.bf16.mxu0 0
      %597 = vmatpush2.bf16.xpose.msra.mxu0 0
      %598 = vmatprep.subr.bf16.mxu0 0
      %599 = vmatpush2.bf16.xpose.msra.mxu0 0
      %600 = vmatprep.subr.bf16.mxu0 0
      %601 = vmatpush2.bf16.xpose.msra.mxu0 0
      %602 = vmatprep.subr.bf16.mxu0 0
      %603 = vmatpush2.bf16.xpose.msra.mxu0 0
      %604 = vmatprep.subr.bf16.mxu0 0
      %605 = vmatpush2.bf16.xpose.msra.mxu0 0
      %606 = vmatprep.subr.bf16.mxu0 0
      %607 = vmatpush2.bf16.xpose.msra.mxu0 0
      %608 = vmatprep.subr.bf16.mxu0 0
      %609 = vmatpush2.bf16.xpose.msra.mxu0 0
      %610 = vmatprep.mubr.bf16.mxu0 0
      %611 = vmatmul.mubr.bf16.gmra.mxu0 %v573
      %v612 = vpop.f32.mrf.mxu0
      %v613 = vadd.f32 0.0, %v612
      %v614 = vpop.f32.mrf.mxu0
      %v615 = vpop.f32.mrf.mxu0
      %v616 = vpop.f32.mrf.mxu0
      %617 = vdwg.mxu0
      %v618 = vmul.f32 %v613, 0.5
      %v619 = vsel %vm395, %v618, -inf
      %620 = vmax.xlane.f32.xlu0 %v619
      %v621 = vpop.xlane.xlu0 %620
      %v622 = vsub.f32 %v618, %v621
      %v623 = vmul.f32 %v622, 1.442695
      %v624 = vpow.pop %v623
      %v625 = vsel %vm395, %v624, 0.0
      %626 = vadd.xlane.f32.xlu0 %v625
      %v627 = vpop.xlane.xlu0 %626
      %v628 = vrcp.pop %v627
      %v629 = vmul.f32 %v624, %v628
      %v630 = vpack.c.bf16 %v629, %v629
      %631 = vrot.lane.b32.xlu0 %v343, 56
      %v632 = vpop.permute.xlu0 %631
      %v634 = vsel %vm395, %v630, 0
      %v637 = vsel %vm413, %v632, 0
      %639 = vmatprep.subr.bf16.mxu0 0
      %640 = vmatpush1.bf16.msra.mxu0 0
      %641 = vmatprep.subr.bf16.mxu0 0
      %642 = vmatpush1.bf16.msra.mxu0 0
      %643 = vmatprep.subr.bf16.mxu0 0
      %644 = vmatpush1.bf16.msra.mxu0 0
      %645 = vmatprep.subr.bf16.mxu0 0
      %646 = vmatpush1.bf16.msra.mxu0 0
      %647 = vmatprep.subr.bf16.mxu0 0
      %648 = vmatpush1.bf16.msra.mxu0 0
      %649 = vmatprep.subr.bf16.mxu0 0
      %650 = vmatpush1.bf16.msra.mxu0 0
      %651 = vmatprep.subr.bf16.mxu0 0
      %652 = vmatpush1.bf16.msra.mxu0 0
      %653 = vmatprep.subr.bf16.mxu0 0
      %654 = vmatpush1.bf16.msra.mxu0 %v637
      %655 = vmatprep.subr.bf16.mxu0 0
      %656 = vmatpush2.bf16.msra.mxu0 0
      %657 = vmatprep.subr.bf16.mxu0 0
      %658 = vmatpush2.bf16.msra.mxu0 0
      %659 = vmatprep.subr.bf16.mxu0 0
      %660 = vmatpush2.bf16.msra.mxu0 0
      %661 = vmatprep.subr.bf16.mxu0 0
      %662 = vmatpush2.bf16.msra.mxu0 0
      %663 = vmatprep.subr.bf16.mxu0 0
      %664 = vmatpush2.bf16.msra.mxu0 0
      %665 = vmatprep.subr.bf16.mxu0 0
      %666 = vmatpush2.bf16.msra.mxu0 0
      %667 = vmatprep.subr.bf16.mxu0 0
      %668 = vmatpush2.bf16.msra.mxu0 0
      %669 = vmatprep.subr.bf16.mxu0 0
      %670 = vmatpush2.bf16.msra.mxu0 0
      %671 = vmatprep.mubr.bf16.mxu0 0
      %672 = vmatmul.mubr.bf16.gmra.mxu0 %v634
      %v673 = vpop.f32.mrf.mxu0
      %v674 = vadd.f32 0.0, %v673
      %v675 = vpop.f32.mrf.mxu0
      %v676 = vpop.f32.mrf.mxu0
      %v677 = vpop.f32.mrf.mxu0
      %678 = vdwg.mxu0
      %679 = vrot.lane.b32.xlu0 %v343, 116
      %v680 = vpop.permute.xlu0 %679
      %681 = vrot.lane.b32.xlu0 %v343, 84
      %v682 = vpop.permute.xlu0 %681
      %v684 = vsel %vm347, %v680, 0
      %v687 = vsel %vm347, %v682, 0
      %689 = vmatprep.subr.bf16.mxu0 0
      %690 = vmatpush1.bf16.xpose.msra.mxu0 0
      %691 = vmatprep.subr.bf16.mxu0 0
      %692 = vmatpush1.bf16.xpose.msra.mxu0 0
      %693 = vmatprep.subr.bf16.mxu0 0
      %694 = vmatpush1.bf16.xpose.msra.mxu0 0
      %695 = vmatprep.subr.bf16.mxu0 0
      %696 = vmatpush1.bf16.xpose.msra.mxu0 0
      %697 = vmatprep.subr.bf16.mxu0 0
      %698 = vmatpush1.bf16.xpose.msra.mxu0 0
      %699 = vmatprep.subr.bf16.mxu0 0
      %700 = vmatpush1.bf16.xpose.msra.mxu0 0
      %701 = vmatprep.subr.bf16.mxu0 0
      %702 = vmatpush1.bf16.xpose.msra.mxu0 0
      %703 = vmatprep.subr.bf16.mxu0 0
      %704 = vmatpush1.bf16.xpose.msra.mxu0 %v687
      %705 = vmatprep.subr.bf16.mxu0 0
      %706 = vmatpush2.bf16.xpose.msra.mxu0 0
      %707 = vmatprep.subr.bf16.mxu0 0
      %708 = vmatpush2.bf16.xpose.msra.mxu0 0
      %709 = vmatprep.subr.bf16.mxu0 0
      %710 = vmatpush2.bf16.xpose.msra.mxu0 0
      %711 = vmatprep.subr.bf16.mxu0 0
      %712 = vmatpush2.bf16.xpose.msra.mxu0 0
      %713 = vmatprep.subr.bf16.mxu0 0
      %714 = vmatpush2.bf16.xpose.msra.mxu0 0
      %715 = vmatprep.subr.bf16.mxu0 0
      %716 = vmatpush2.bf16.xpose.msra.mxu0 0
      %717 = vmatprep.subr.bf16.mxu0 0
      %718 = vmatpush2.bf16.xpose.msra.mxu0 0
      %719 = vmatprep.subr.bf16.mxu0 0
      %720 = vmatpush2.bf16.xpose.msra.mxu0 0
      %721 = vmatprep.mubr.bf16.mxu0 0
      %722 = vmatmul.mubr.bf16.gmra.mxu0 %v684
      %v723 = vpop.f32.mrf.mxu0
      %v724 = vadd.f32 0.0, %v723
      %v725 = vpop.f32.mrf.mxu0
      %v726 = vpop.f32.mrf.mxu0
      %v727 = vpop.f32.mrf.mxu0
      %728 = vdwg.mxu0
      %v729 = vmul.f32 %v724, 0.5
      %v730 = vsel %vm395, %v729, -inf
      %731 = vmax.xlane.f32.xlu0 %v730
      %v732 = vpop.xlane.xlu0 %731
      %v733 = vsub.f32 %v729, %v732
      %v734 = vmul.f32 %v733, 1.442695
      %v735 = vpow.pop %v734
      %v736 = vsel %vm395, %v735, 0.0
      %737 = vadd.xlane.f32.xlu0 %v736
      %v738 = vpop.xlane.xlu0 %737
      %v739 = vrcp.pop %v738
      %v740 = vmul.f32 %v735, %v739
      %v741 = vpack.c.bf16 %v740, %v740
      %742 = vrot.lane.b32.xlu0 %v343, 52
      %v743 = vpop.permute.xlu0 %742
      %v745 = vsel %vm395, %v741, 0
      %v748 = vsel %vm413, %v743, 0
      %750 = vmatprep.subr.bf16.mxu0 0
      %751 = vmatpush1.bf16.msra.mxu0 0
      %752 = vmatprep.subr.bf16.mxu0 0
      %753 = vmatpush1.bf16.msra.mxu0 0
      %754 = vmatprep.subr.bf16.mxu0 0
      %755 = vmatpush1.bf16.msra.mxu0 0
      %756 = vmatprep.subr.bf16.mxu0 0
      %757 = vmatpush1.bf16.msra.mxu0 0
      %758 = vmatprep.subr.bf16.mxu0 0
      %759 = vmatpush1.bf16.msra.mxu0 0
      %760 = vmatprep.subr.bf16.mxu0 0
      %761 = vmatpush1.bf16.msra.mxu0 0
      %762 = vmatprep.subr.bf16.mxu0 0
      %763 = vmatpush1.bf16.msra.mxu0 0
      %764 = vmatprep.subr.bf16.mxu0 0
      %765 = vmatpush1.bf16.msra.mxu0 %v748
      %766 = vmatprep.subr.bf16.mxu0 0
      %767 = vmatpush2.bf16.msra.mxu0 0
      %768 = vmatprep.subr.bf16.mxu0 0
      %769 = vmatpush2.bf16.msra.mxu0 0
      %770 = vmatprep.subr.bf16.mxu0 0
      %771 = vmatpush2.bf16.msra.mxu0 0
      %772 = vmatprep.subr.bf16.mxu0 0
      %773 = vmatpush2.bf16.msra.mxu0 0
      %774 = vmatprep.subr.bf16.mxu0 0
      %775 = vmatpush2.bf16.msra.mxu0 0
      %776 = vmatprep.subr.bf16.mxu0 0
      %777 = vmatpush2.bf16.msra.mxu0 0
      %778 = vmatprep.subr.bf16.mxu0 0
      %779 = vmatpush2.bf16.msra.mxu0 0
      %780 = vmatprep.subr.bf16.mxu0 0
      %781 = vmatpush2.bf16.msra.mxu0 0
      %782 = vmatprep.mubr.bf16.mxu0 0
      %783 = vmatmul.mubr.bf16.gmra.mxu0 %v745
      %v784 = vpop.f32.mrf.mxu0
      %v785 = vadd.f32 0.0, %v784
      %v786 = vpop.f32.mrf.mxu0
      %v787 = vpop.f32.mrf.mxu0
      %v788 = vpop.f32.mrf.mxu0
      %789 = vdwg.mxu0
      %790 = vrot.lane.b32.xlu0 %v343, 112
      %v791 = vpop.permute.xlu0 %790
      %792 = vrot.lane.b32.xlu0 %v343, 80
      %v793 = vpop.permute.xlu0 %792
      %v795 = vsel %vm347, %v791, 0
      %v798 = vsel %vm347, %v793, 0
      %800 = vmatprep.subr.bf16.mxu0 0
      %801 = vmatpush1.bf16.xpose.msra.mxu0 0
      %802 = vmatprep.subr.bf16.mxu0 0
      %803 = vmatpush1.bf16.xpose.msra.mxu0 0
      %804 = vmatprep.subr.bf16.mxu0 0
      %805 = vmatpush1.bf16.xpose.msra.mxu0 0
      %806 = vmatprep.subr.bf16.mxu0 0
      %807 = vmatpush1.bf16.xpose.msra.mxu0 0
      %808 = vmatprep.subr.bf16.mxu0 0
      %809 = vmatpush1.bf16.xpose.msra.mxu0 0
      %810 = vmatprep.subr.bf16.mxu0 0
      %811 = vmatpush1.bf16.xpose.msra.mxu0 0
      %812 = vmatprep.subr.bf16.mxu0 0
      %813 = vmatpush1.bf16.xpose.msra.mxu0 0
      %814 = vmatprep.subr.bf16.mxu0 0
      %815 = vmatpush1.bf16.xpose.msra.mxu0 %v798
      %816 = vmatprep.subr.bf16.mxu0 0
      %817 = vmatpush2.bf16.xpose.msra.mxu0 0
      %818 = vmatprep.subr.bf16.mxu0 0
      %819 = vmatpush2.bf16.xpose.msra.mxu0 0
      %820 = vmatprep.subr.bf16.mxu0 0
      %821 = vmatpush2.bf16.xpose.msra.mxu0 0
      %822 = vmatprep.subr.bf16.mxu0 0
      %823 = vmatpush2.bf16.xpose.msra.mxu0 0
      %824 = vmatprep.subr.bf16.mxu0 0
      %825 = vmatpush2.bf16.xpose.msra.mxu0 0
      %826 = vmatprep.subr.bf16.mxu0 0
      %827 = vmatpush2.bf16.xpose.msra.mxu0 0
      %828 = vmatprep.subr.bf16.mxu0 0
      %829 = vmatpush2.bf16.xpose.msra.mxu0 0
      %830 = vmatprep.subr.bf16.mxu0 0
      %831 = vmatpush2.bf16.xpose.msra.mxu0 0
      %832 = vmatprep.mubr.bf16.mxu0 0
      %833 = vmatmul.mubr.bf16.gmra.mxu0 %v795
      %v834 = vpop.f32.mrf.mxu0
      %v835 = vadd.f32 0.0, %v834
      %v836 = vpop.f32.mrf.mxu0
      %v837 = vpop.f32.mrf.mxu0
      %v838 = vpop.f32.mrf.mxu0
      %839 = vdwg.mxu0
      %v840 = vmul.f32 %v835, 0.5
      %v841 = vsel %vm395, %v840, -inf
      %842 = vmax.xlane.f32.xlu0 %v841
      %v843 = vpop.xlane.xlu0 %842
      %v844 = vsub.f32 %v840, %v843
      %v845 = vmul.f32 %v844, 1.442695
      %v846 = vpow.pop %v845
      %v847 = vsel %vm395, %v846, 0.0
      %848 = vadd.xlane.f32.xlu0 %v847
      %v849 = vpop.xlane.xlu0 %848
      %v850 = vrcp.pop %v849
      %v851 = vmul.f32 %v846, %v850
      %v852 = vpack.c.bf16 %v851, %v851
      %853 = vrot.lane.b32.xlu0 %v343, 48
      %v854 = vpop.permute.xlu0 %853
      %v856 = vsel %vm395, %v852, 0
      %v859 = vsel %vm413, %v854, 0
      %861 = vmatprep.subr.bf16.mxu0 0
      %862 = vmatpush1.bf16.msra.mxu0 0
      %863 = vmatprep.subr.bf16.mxu0 0
      %864 = vmatpush1.bf16.msra.mxu0 0
      %865 = vmatprep.subr.bf16.mxu0 0
      %866 = vmatpush1.bf16.msra.mxu0 0
      %867 = vmatprep.subr.bf16.mxu0 0
      %868 = vmatpush1.bf16.msra.mxu0 0
      %869 = vmatprep.subr.bf16.mxu0 0
      %870 = vmatpush1.bf16.msra.mxu0 0
      %871 = vmatprep.subr.bf16.mxu0 0
      %872 = vmatpush1.bf16.msra.mxu0 0
      %873 = vmatprep.subr.bf16.mxu0 0
      %874 = vmatpush1.bf16.msra.mxu0 0
      %875 = vmatprep.subr.bf16.mxu0 0
      %876 = vmatpush1.bf16.msra.mxu0 %v859
      %877 = vmatprep.subr.bf16.mxu0 0
      %878 = vmatpush2.bf16.msra.mxu0 0
      %879 = vmatprep.subr.bf16.mxu0 0
      %880 = vmatpush2.bf16.msra.mxu0 0
      %881 = vmatprep.subr.bf16.mxu0 0
      %882 = vmatpush2.bf16.msra.mxu0 0
      %883 = vmatprep.subr.bf16.mxu0 0
      %884 = vmatpush2.bf16.msra.mxu0 0
      %885 = vmatprep.subr.bf16.mxu0 0
      %886 = vmatpush2.bf16.msra.mxu0 0
      %887 = vmatprep.subr.bf16.mxu0 0
      %888 = vmatpush2.bf16.msra.mxu0 0
      %889 = vmatprep.subr.bf16.mxu0 0
      %890 = vmatpush2.bf16.msra.mxu0 0
      %891 = vmatprep.subr.bf16.mxu0 0
      %892 = vmatpush2.bf16.msra.mxu0 0
      %893 = vmatprep.mubr.bf16.mxu0 0
      %894 = vmatmul.mubr.bf16.gmra.mxu0 %v856
      %v895 = vpop.f32.mrf.mxu0
      %v896 = vadd.f32 0.0, %v895
      %v897 = vpop.f32.mrf.mxu0
      %v898 = vpop.f32.mrf.mxu0
      %v899 = vpop.f32.mrf.mxu0
      %900 = vdwg.mxu0
      %901 = vrot.lane.b32.xlu0 %v343, 108
      %v902 = vpop.permute.xlu0 %901
      %903 = vrot.lane.b32.xlu0 %v343, 76
      %v904 = vpop.permute.xlu0 %903
      %v906 = vsel %vm347, %v902, 0
      %v909 = vsel %vm347, %v904, 0
      %911 = vmatprep.subr.bf16.mxu0 0
      %912 = vmatpush1.bf16.xpose.msra.mxu0 0
      %913 = vmatprep.subr.bf16.mxu0 0
      %914 = vmatpush1.bf16.xpose.msra.mxu0 0
      %915 = vmatprep.subr.bf16.mxu0 0
      %916 = vmatpush1.bf16.xpose.msra.mxu0 0
      %917 = vmatprep.subr.bf16.mxu0 0
      %918 = vmatpush1.bf16.xpose.msra.mxu0 0
      %919 = vmatprep.subr.bf16.mxu0 0
      %920 = vmatpush1.bf16.xpose.msra.mxu0 0
      %921 = vmatprep.subr.bf16.mxu0 0
      %922 = vmatpush1.bf16.xpose.msra.mxu0 0
      %923 = vmatprep.subr.bf16.mxu0 0
      %924 = vmatpush1.bf16.xpose.msra.mxu0 0
      %925 = vmatprep.subr.bf16.mxu0 0
      %926 = vmatpush1.bf16.xpose.msra.mxu0 %v909
      %927 = vmatprep.subr.bf16.mxu0 0
      %928 = vmatpush2.bf16.xpose.msra.mxu0 0
      %929 = vmatprep.subr.bf16.mxu0 0
      %930 = vmatpush2.bf16.xpose.msra.mxu0 0
      %931 = vmatprep.subr.bf16.mxu0 0
      %932 = vmatpush2.bf16.xpose.msra.mxu0 0
      %933 = vmatprep.subr.bf16.mxu0 0
      %934 = vmatpush2.bf16.xpose.msra.mxu0 0
      %935 = vmatprep.subr.bf16.mxu0 0
      %936 = vmatpush2.bf16.xpose.msra.mxu0 0
      %937 = vmatprep.subr.bf16.mxu0 0
      %938 = vmatpush2.bf16.xpose.msra.mxu0 0
      %939 = vmatprep.subr.bf16.mxu0 0
      %940 = vmatpush2.bf16.xpose.msra.mxu0 0
      %941 = vmatprep.subr.bf16.mxu0 0
      %942 = vmatpush2.bf16.xpose.msra.mxu0 0
      %943 = vmatprep.mubr.bf16.mxu0 0
      %944 = vmatmul.mubr.bf16.gmra.mxu0 %v906
      %v945 = vpop.f32.mrf.mxu0
      %v946 = vadd.f32 0.0, %v945
      %v947 = vpop.f32.mrf.mxu0
      %v948 = vpop.f32.mrf.mxu0
      %v949 = vpop.f32.mrf.mxu0
      %950 = vdwg.mxu0
      %v951 = vmul.f32 %v946, 0.5
      %v952 = vsel %vm395, %v951, -inf
      %953 = vmax.xlane.f32.xlu0 %v952
      %v954 = vpop.xlane.xlu0 %953
      %v955 = vsub.f32 %v951, %v954
      %v956 = vmul.f32 %v955, 1.442695
      %v957 = vpow.pop %v956
      %v958 = vsel %vm395, %v957, 0.0
      %959 = vadd.xlane.f32.xlu0 %v958
      %v960 = vpop.xlane.xlu0 %959
      %v961 = vrcp.pop %v960
      %v962 = vmul.f32 %v957, %v961
      %v963 = vpack.c.bf16 %v962, %v962
      %964 = vrot.lane.b32.xlu0 %v343, 44
      %v965 = vpop.permute.xlu0 %964
      %v967 = vsel %vm395, %v963, 0
      %v970 = vsel %vm413, %v965, 0
      %972 = vmatprep.subr.bf16.mxu0 0
      %973 = vmatpush1.bf16.msra.mxu0 0
      %974 = vmatprep.subr.bf16.mxu0 0
      %975 = vmatpush1.bf16.msra.mxu0 0
      %976 = vmatprep.subr.bf16.mxu0 0
      %977 = vmatpush1.bf16.msra.mxu0 0
      %978 = vmatprep.subr.bf16.mxu0 0
      %979 = vmatpush1.bf16.msra.mxu0 0
      %980 = vmatprep.subr.bf16.mxu0 0
      %981 = vmatpush1.bf16.msra.mxu0 0
      %982 = vmatprep.subr.bf16.mxu0 0
      %983 = vmatpush1.bf16.msra.mxu0 0
      %984 = vmatprep.subr.bf16.mxu0 0
      %985 = vmatpush1.bf16.msra.mxu0 0
      %986 = vmatprep.subr.bf16.mxu0 0
      %987 = vmatpush1.bf16.msra.mxu0 %v970
      %988 = vmatprep.subr.bf16.mxu0 0
      %989 = vmatpush2.bf16.msra.mxu0 0
      %990 = vmatprep.subr.bf16.mxu0 0
      %991 = vmatpush2.bf16.msra.mxu0 0
      %992 = vmatprep.subr.bf16.mxu0 0
      %993 = vmatpush2.bf16.msra.mxu0 0
      %994 = vmatprep.subr.bf16.mxu0 0
      %995 = vmatpush2.bf16.msra.mxu0 0
      %996 = vmatprep.subr.bf16.mxu0 0
      %997 = vmatpush2.bf16.msra.mxu0 0
      %998 = vmatprep.subr.bf16.mxu0 0
      %999 = vmatpush2.bf16.msra.mxu0 0
      %1000 = vmatprep.subr.bf16.mxu0 0
      %1001 = vmatpush2.bf16.msra.mxu0 0
      %1002 = vmatprep.subr.bf16.mxu0 0
      %1003 = vmatpush2.bf16.msra.mxu0 0
      %1004 = vmatprep.mubr.bf16.mxu0 0
      %1005 = vmatmul.mubr.bf16.gmra.mxu0 %v967
      %v1006 = vpop.f32.mrf.mxu0
      %v1007 = vadd.f32 0.0, %v1006
      %v1008 = vpop.f32.mrf.mxu0
      %v1009 = vpop.f32.mrf.mxu0
      %v1010 = vpop.f32.mrf.mxu0
      %1011 = vdwg.mxu0
      %1012 = vrot.lane.b32.xlu0 %v343, 104
      %v1013 = vpop.permute.xlu0 %1012
      %1014 = vrot.lane.b32.xlu0 %v343, 72
      %v1015 = vpop.permute.xlu0 %1014
      %v1017 = vsel %vm347, %v1013, 0
      %v1020 = vsel %vm347, %v1015, 0
      %1022 = vmatprep.subr.bf16.mxu0 0
      %1023 = vmatpush1.bf16.xpose.msra.mxu0 0
      %1024 = vmatprep.subr.bf16.mxu0 0
      %1025 = vmatpush1.bf16.xpose.msra.mxu0 0
      %1026 = vmatprep.subr.bf16.mxu0 0
      %1027 = vmatpush1.bf16.xpose.msra.mxu0 0
      %1028 = vmatprep.subr.bf16.mxu0 0
      %1029 = vmatpush1.bf16.xpose.msra.mxu0 0
      %1030 = vmatprep.subr.bf16.mxu0 0
      %1031 = vmatpush1.bf16.xpose.msra.mxu0 0
      %1032 = vmatprep.subr.bf16.mxu0 0
      %1033 = vmatpush1.bf16.xpose.msra.mxu0 0
      %1034 = vmatprep.subr.bf16.mxu0 0
      %1035 = vmatpush1.bf16.xpose.msra.mxu0 0
      %1036 = vmatprep.subr.bf16.mxu0 0
      %1037 = vmatpush1.bf16.xpose.msra.mxu0 %v1020
      %1038 = vmatprep.subr.bf16.mxu0 0
      %1039 = vmatpush2.bf16.xpose.msra.mxu0 0
      %1040 = vmatprep.subr.bf16.mxu0 0
      %1041 = vmatpush2.bf16.xpose.msra.mxu0 0
      %1042 = vmatprep.subr.bf16.mxu0 0
      %1043 = vmatpush2.bf16.xpose.msra.mxu0 0
      %1044 = vmatprep.subr.bf16.mxu0 0
      %1045 = vmatpush2.bf16.xpose.msra.mxu0 0
      %1046 = vmatprep.subr.bf16.mxu0 0
      %1047 = vmatpush2.bf16.xpose.msra.mxu0 0
      %1048 = vmatprep.subr.bf16.mxu0 0
      %1049 = vmatpush2.bf16.xpose.msra.mxu0 0
      %1050 = vmatprep.subr.bf16.mxu0 0
      %1051 = vmatpush2.bf16.xpose.msra.mxu0 0
      %1052 = vmatprep.subr.bf16.mxu0 0
      %1053 = vmatpush2.bf16.xpose.msra.mxu0 0
      %1054 = vmatprep.mubr.bf16.mxu0 0
      %1055 = vmatmul.mubr.bf16.gmra.mxu0 %v1017
      %v1056 = vpop.f32.mrf.mxu0
      %v1057 = vadd.f32 0.0, %v1056
      %v1058 = vpop.f32.mrf.mxu0
      %v1059 = vpop.f32.mrf.mxu0
      %v1060 = vpop.f32.mrf.mxu0
      %1061 = vdwg.mxu0
      %v1062 = vmul.f32 %v1057, 0.5
      %v1063 = vsel %vm395, %v1062, -inf
      %1064 = vmax.xlane.f32.xlu0 %v1063
      %v1065 = vpop.xlane.xlu0 %1064
      %v1066 = vsub.f32 %v1062, %v1065
      %v1067 = vmul.f32 %v1066, 1.442695
      %v1068 = vpow.pop %v1067
      %v1069 = vsel %vm395, %v1068, 0.0
      %1070 = vadd.xlane.f32.xlu0 %v1069
      %v1071 = vpop.xlane.xlu0 %1070
      %v1072 = vrcp.pop %v1071
      %v1073 = vmul.f32 %v1068, %v1072
      %v1074 = vpack.c.bf16 %v1073, %v1073
      %1075 = vrot.lane.b32.xlu0 %v343, 40
      %v1076 = vpop.permute.xlu0 %1075
      %v1078 = vsel %vm395, %v1074, 0
      %v1081 = vsel %vm413, %v1076, 0
      %1083 = vmatprep.subr.bf16.mxu0 0
      %1084 = vmatpush1.bf16.msra.mxu0 0
      %1085 = vmatprep.subr.bf16.mxu0 0
      %1086 = vmatpush1.bf16.msra.mxu0 0
      %1087 = vmatprep.subr.bf16.mxu0 0
      %1088 = vmatpush1.bf16.msra.mxu0 0
      %1089 = vmatprep.subr.bf16.mxu0 0
      %1090 = vmatpush1.bf16.msra.mxu0 0
      %1091 = vmatprep.subr.bf16.mxu0 0
      %1092 = vmatpush1.bf16.msra.mxu0 0
      %1093 = vmatprep.subr.bf16.mxu0 0
      %1094 = vmatpush1.bf16.msra.mxu0 0
      %1095 = vmatprep.subr.bf16.mxu0 0
      %1096 = vmatpush1.bf16.msra.mxu0 0
      %1097 = vmatprep.subr.bf16.mxu0 0
      %1098 = vmatpush1.bf16.msra.mxu0 %v1081
      %1099 = vmatprep.subr.bf16.mxu0 0
      %1100 = vmatpush2.bf16.msra.mxu0 0
      %1101 = vmatprep.subr.bf16.mxu0 0
      %1102 = vmatpush2.bf16.msra.mxu0 0
      %1103 = vmatprep.subr.bf16.mxu0 0
      %1104 = vmatpush2.bf16.msra.mxu0 0
      %1105 = vmatprep.subr.bf16.mxu0 0
      %1106 = vmatpush2.bf16.msra.mxu0 0
      %1107 = vmatprep.subr.bf16.mxu0 0
      %1108 = vmatpush2.bf16.msra.mxu0 0
      %1109 = vmatprep.subr.bf16.mxu0 0
      %1110 = vmatpush2.bf16.msra.mxu0 0
      %1111 = vmatprep.subr.bf16.mxu0 0
      %1112 = vmatpush2.bf16.msra.mxu0 0
      %1113 = vmatprep.subr.bf16.mxu0 0
      %1114 = vmatpush2.bf16.msra.mxu0 0
      %1115 = vmatprep.mubr.bf16.mxu0 0
      %1116 = vmatmul.mubr.bf16.gmra.mxu0 %v1078
      %v1117 = vpop.f32.mrf.mxu0
      %v1118 = vadd.f32 0.0, %v1117
      %v1119 = vpop.f32.mrf.mxu0
      %v1120 = vpop.f32.mrf.mxu0
      %v1121 = vpop.f32.mrf.mxu0
      %1122 = vdwg.mxu0
      %1123 = vrot.lane.b32.xlu0 %v343, 100
      %v1124 = vpop.permute.xlu0 %1123
      %1125 = vrot.lane.b32.xlu0 %v343, 68
      %v1126 = vpop.permute.xlu0 %1125
      %v1128 = vsel %vm347, %v1124, 0
      %v1131 = vsel %vm347, %v1126, 0
      %1133 = vmatprep.subr.bf16.mxu0 0
      %1134 = vmatpush1.bf16.xpose.msra.mxu0 0
      %1135 = vmatprep.subr.bf16.mxu0 0
      %1136 = vmatpush1.bf16.xpose.msra.mxu0 0
      %1137 = vmatprep.subr.bf16.mxu0 0
      %1138 = vmatpush1.bf16.xpose.msra.mxu0 0
      %1139 = vmatprep.subr.bf16.mxu0 0
      %1140 = vmatpush1.bf16.xpose.msra.mxu0 0
      %1141 = vmatprep.subr.bf16.mxu0 0
      %1142 = vmatpush1.bf16.xpose.msra.mxu0 0
      %1143 = vmatprep.subr.bf16.mxu0 0
      %1144 = vmatpush1.bf16.xpose.msra.mxu0 0
      %1145 = vmatprep.subr.bf16.mxu0 0
      %1146 = vmatpush1.bf16.xpose.msra.mxu0 0
      %1147 = vmatprep.subr.bf16.mxu0 0
      %1148 = vmatpush1.bf16.xpose.msra.mxu0 %v1131
      %1149 = vmatprep.subr.bf16.mxu0 0
      %1150 = vmatpush2.bf16.xpose.msra.mxu0 0
      %1151 = vmatprep.subr.bf16.mxu0 0
      %1152 = vmatpush2.bf16.xpose.msra.mxu0 0
      %1153 = vmatprep.subr.bf16.mxu0 0
      %1154 = vmatpush2.bf16.xpose.msra.mxu0 0
      %1155 = vmatprep.subr.bf16.mxu0 0
      %1156 = vmatpush2.bf16.xpose.msra.mxu0 0
      %1157 = vmatprep.subr.bf16.mxu0 0
      %1158 = vmatpush2.bf16.xpose.msra.mxu0 0
      %1159 = vmatprep.subr.bf16.mxu0 0
      %1160 = vmatpush2.bf16.xpose.msra.mxu0 0
      %1161 = vmatprep.subr.bf16.mxu0 0
      %1162 = vmatpush2.bf16.xpose.msra.mxu0 0
      %1163 = vmatprep.subr.bf16.mxu0 0
      %1164 = vmatpush2.bf16.xpose.msra.mxu0 0
      %1165 = vmatprep.mubr.bf16.mxu0 0
      %1166 = vmatmul.mubr.bf16.gmra.mxu0 %v1128
      %v1167 = vpop.f32.mrf.mxu0
      %v1168 = vadd.f32 0.0, %v1167
      %v1169 = vpop.f32.mrf.mxu0
      %v1170 = vpop.f32.mrf.mxu0
      %v1171 = vpop.f32.mrf.mxu0
      %1172 = vdwg.mxu0
      %v1173 = vmul.f32 %v1168, 0.5
      %v1174 = vsel %vm395, %v1173, -inf
      %1175 = vmax.xlane.f32.xlu0 %v1174
      %v1176 = vpop.xlane.xlu0 %1175
      %v1177 = vsub.f32 %v1173, %v1176
      %v1178 = vmul.f32 %v1177, 1.442695
      %v1179 = vpow.pop %v1178
      %v1180 = vsel %vm395, %v1179, 0.0
      %1181 = vadd.xlane.f32.xlu0 %v1180
      %v1182 = vpop.xlane.xlu0 %1181
      %v1183 = vrcp.pop %v1182
      %v1184 = vmul.f32 %v1179, %v1183
      %v1185 = vpack.c.bf16 %v1184, %v1184
      %1186 = vrot.lane.b32.xlu0 %v343, 36
      %v1187 = vpop.permute.xlu0 %1186
      %v1189 = vsel %vm395, %v1185, 0
      %v1192 = vsel %vm413, %v1187, 0
      %1194 = vmatprep.subr.bf16.mxu0 0
      %1195 = vmatpush1.bf16.msra.mxu0 0
      %1196 = vmatprep.subr.bf16.mxu0 0
      %1197 = vmatpush1.bf16.msra.mxu0 0
      %1198 = vmatprep.subr.bf16.mxu0 0
      %1199 = vmatpush1.bf16.msra.mxu0 0
      %1200 = vmatprep.subr.bf16.mxu0 0
      %1201 = vmatpush1.bf16.msra.mxu0 0
      %1202 = vmatprep.subr.bf16.mxu0 0
      %1203 = vmatpush1.bf16.msra.mxu0 0
      %1204 = vmatprep.subr.bf16.mxu0 0
      %1205 = vmatpush1.bf16.msra.mxu0 0
      %1206 = vmatprep.subr.bf16.mxu0 0
      %1207 = vmatpush1.bf16.msra.mxu0 0
      %1208 = vmatprep.subr.bf16.mxu0 0
      %1209 = vmatpush1.bf16.msra.mxu0 %v1192
      %1210 = vmatprep.subr.bf16.mxu0 0
      %1211 = vmatpush2.bf16.msra.mxu0 0
      %1212 = vmatprep.subr.bf16.mxu0 0
      %1213 = vmatpush2.bf16.msra.mxu0 0
      %1214 = vmatprep.subr.bf16.mxu0 0
      %1215 = vmatpush2.bf16.msra.mxu0 0
      %1216 = vmatprep.subr.bf16.mxu0 0
      %1217 = vmatpush2.bf16.msra.mxu0 0
      %1218 = vmatprep.subr.bf16.mxu0 0
      %1219 = vmatpush2.bf16.msra.mxu0 0
      %1220 = vmatprep.subr.bf16.mxu0 0
      %1221 = vmatpush2.bf16.msra.mxu0 0
      %1222 = vmatprep.subr.bf16.mxu0 0
      %1223 = vmatpush2.bf16.msra.mxu0 0
      %1224 = vmatprep.subr.bf16.mxu0 0
      %1225 = vmatpush2.bf16.msra.mxu0 0
      %1226 = vmatprep.mubr.bf16.mxu0 0
      %1227 = vmatmul.mubr.bf16.gmra.mxu0 %v1189
      %v1228 = vpop.f32.mrf.mxu0
      %v1229 = vadd.f32 0.0, %v1228
      %v1230 = vpop.f32.mrf.mxu0
      %v1231 = vpop.f32.mrf.mxu0
      %v1232 = vpop.f32.mrf.mxu0
      %1233 = vdwg.mxu0
      %1235 = vrot.lane.b32.xlu0 %v563, 4
      %v1236 = vpop.permute.xlu0 %1235
      %1239 = vrot.lane.b32.xlu0 %v674, 8
      %v1240 = vpop.permute.xlu0 %1239
      %1243 = vrot.lane.b32.xlu0 %v785, 12
      %v1244 = vpop.permute.xlu0 %1243
      %1247 = vrot.lane.b32.xlu0 %v896, 16
      %v1248 = vpop.permute.xlu0 %1247
      %1251 = vrot.lane.b32.xlu0 %v1007, 20
      %v1252 = vpop.permute.xlu0 %1251
      %1255 = vrot.lane.b32.xlu0 %v1118, 24
      %v1256 = vpop.permute.xlu0 %1255
      %1259 = vrot.lane.b32.xlu0 %v1229, 28
      %v1260 = vpop.permute.xlu0 %1259
      %v1262 = vsel %vm347, %v452, %v1236
      %v1263 = vsel %vm395, %v1262, %v1240
      %vm1264 = vcmask 97280
      %v1265 = vsel %vm1264, %v1263, %v1244
      %vm1266 = vcmask 130048
      %v1267 = vsel %vm1266, %v1265, %v1248
      %vm1268 = vcmask 162816
      %v1269 = vsel %vm1268, %v1267, %v1252
      %vm1270 = vcmask 195584
      %v1271 = vsel %vm1270, %v1269, %v1256
      %vm1272 = vcmask 228352
      %v1273 = vsel %vm1272, %v1271, %v1260
      %v1274 = vpack.c.bf16 %v1273, %v1273
      %v1275 = vld [vmem:[%s3] sm:$0xf]
      %v1276 = vld [vmem:[%s3 + $0x4] sm:$0xf]
      %v1277 = vld [vmem:[%s3 + $0x8] sm:$0xf]
      %v1278 = vld [vmem:[%s3 + $0xc] sm:$0xf]
      %v1279 = vld [vmem:[%s4] sm:$0x1]
      %v1281 = vlaneseq
      %v1282 = vshrl.u32 %v1281, 7
      %v1283 = vsub.s32 0, %v1282
      %v1284 = vrot.slane %v1279, %v1283
      %v1290 = vunpack.c.l.b16 %v1275
      %v1291 = vunpack.c.l.b16 %v1276
      %v1292 = vunpack.c.l.b16 %v1277
      %v1293 = vunpack.c.l.b16 %v1278
      %v1294 = vpack.c.b16 %v1291, %v1290
      %v1295 = vpack.c.b16 %v1293, %v1292
      %v1299 = vsel %vm299, %v1274, 0
      %1301 = vmatprep.subr.bf16.mxu0 0
      %1302 = vmatpush1.bf16.msra.mxu0 0
      %1303 = vmatprep.subr.bf16.mxu0 0
      %1304 = vmatpush1.bf16.msra.mxu0 0
      %1305 = vmatprep.subr.bf16.mxu0 0
      %1306 = vmatpush1.bf16.msra.mxu0 0
      %1307 = vmatprep.subr.bf16.mxu0 0
      %1308 = vmatpush1.bf16.msra.mxu0 0
      %1309 = vmatprep.subr.bf16.mxu0 0
      %1310 = vmatpush1.bf16.msra.mxu0 0
      %1311 = vmatprep.subr.bf16.mxu0 0
      %1312 = vmatpush1.bf16.msra.mxu0 0
      %1313 = vmatprep.subr.bf16.mxu0 0
      %1314 = vmatpush1.bf16.msra.mxu0 %v1295
      %1315 = vmatprep.subr.bf16.mxu0 0
      %1316 = vmatpush1.bf16.msra.mxu0 %v1294
      %1317 = vmatprep.subr.bf16.mxu0 0
      %1318 = vmatpush2.bf16.msra.mxu0 0
      %1319 = vmatprep.subr.bf16.mxu0 0
      %1320 = vmatpush2.bf16.msra.mxu0 0
      %1321 = vmatprep.subr.bf16.mxu0 0
      %1322 = vmatpush2.bf16.msra.mxu0 0
      %1323 = vmatprep.subr.bf16.mxu0 0
      %1324 = vmatpush2.bf16.msra.mxu0 0
      %1325 = vmatprep.subr.bf16.mxu0 0
      %1326 = vmatpush2.bf16.msra.mxu0 0
      %1327 = vmatprep.subr.bf16.mxu0 0
      %1328 = vmatpush2.bf16.msra.mxu0 0
      %1329 = vmatprep.subr.bf16.mxu0 0
      %1330 = vmatpush2.bf16.msra.mxu0 0
      %1331 = vmatprep.subr.bf16.mxu0 0
      %1332 = vmatpush2.bf16.msra.mxu0 0
      %1333 = vmatprep.mubr.bf16.mxu0 0
      %1334 = vmatmul.mubr.bf16.gmra.mxu0 %v1299
      %v1335 = vpop.f32.mrf.mxu0
      %v1336 = vadd.f32 %v1284, %v1335
      %v1337 = vpop.f32.mrf.mxu0
      %v1338 = vpop.f32.mrf.mxu0
      %v1339 = vpop.f32.mrf.mxu0
      %1340 = vdwg.mxu0
      %v1341 = vunpack.c.l.bf16 %v275
      %v1342 = vadd.f32 %v1336, %v1341
      %v1343 = vsel %vm299, %v1342, 0.0
      %1344 = vadd.xlane.f32.xlu0 %v1343
      %v1345 = vpop.xlane.xlu0 %1344
      %v1346 = vrcp.pop 32.0
      %v1347 = vmul.f32 %v1345, %v1346
      %v1348 = vsub.f32 %v1342, %v1347
      %v1349 = vmul.f32 %v1348, %v1348
      %v1350 = vsel %vm299, %v1349, 0.0
      %1351 = vadd.xlane.f32.xlu0 %v1350
      %v1352 = vpop.xlane.xlu0 %1351
      %v1353 = vmul.f32 %v1352, %v1346
      %v1354 = vadd.f32 %v1353, 1e-05
      %v1355 = vrsqrt.pop %v1354
      %v1356 = vmul.f32 %v1348, %v1355
      %v1357 = vld [vmem:[%s5] sm:$0x1]
      %v1359 = vlaneseq
      %v1360 = vshrl.u32 %v1359, 7
      %v1361 = vsub.s32 0, %v1360
      %v1362 = vrot.slane %v1357, %v1361
      %v1364 = vmul.f32 %v1356, %v1362
      %v1365 = vld [vmem:[%s6] sm:$0x1]
      %v1367 = vlaneseq
      %v1368 = vshrl.u32 %v1367, 7
      %v1369 = vsub.s32 0, %v1368
      %v1370 = vrot.slane %v1365, %v1369
      %v1372 = vadd.f32 %v1364, %v1370
      %v1373 = vpack.c.bf16 %v1372, %v1372
      %vm1374 = vcmask 257024
      %1375 = vst.msk [vmem:[%s273] sm:$0xf] %vm1374, %v1373
      %p1376 = scmp.lt.s32.totalorder %s18, 1
      %s1377 = scalar_select %p1376, %s18, 1
      %s1378 = smul.addr %s1377, 4
      %s1379 = scalar_lea.vmem %s7, %s1378
      // Predicated region
      $region49: #{transformer_forward.7} parent=47 // pred_check
        %p1380 = pneg %p188
      $region50: #{transformer_forward.7} parent=47 // pred_check_branch
        %1382 = sbr.rel (%p1380) target = $region52
      $region51: #{transformer_forward.7} parent=47 // pred_region
        _
      $region52: #{transformer_forward.7} parent=47 // pred_fallthru
        _
    $region48: #{transformer_forward.7} parent=5 // pred_fallthru
      _
    %p1383 = scmp.le.s32.totalorder 2, %s13
    // Predicated region
    $region53: #{transformer_forward.7} parent=5 // pred_check
      %p1384 = pneg %p1383
    $region54: #{transformer_forward.7} parent=5 // pred_check_branch
      %1386 = sbr.rel (%p1384) target = $region56
    $region55: #{transformer_forward.7} parent=5 // pred_region
      %s1387 = ssub.s32 %s13, 2
      // Predicated region
      $region57: #{transformer_forward.7} parent=55 // pred_check
        %p1388 = pneg %p194
      $region58: #{transformer_forward.7} parent=55 // pred_check_branch
        %1390 = sbr.rel (%p1388) target = $region60
      $region59: #{transformer_forward.7} parent=55 // pred_region
        %p1391 = scmp.lt.s32.totalorder %s19, 1
        %s1392 = scalar_select %p1391, %s19, 1
        %s1393 = smul.addr %s1392, 4
        %s1394 = scalar_lea.vmem %s7, %s1393
      $region60: #{transformer_forward.7} parent=55 // pred_fallthru
        _
    $region56: #{transformer_forward.7} parent=5 // pred_fallthru
      _
  $region6: #{transformer_forward.7} parent=0 // loop_footer
    %s17 = sadd.s32 1, %s13
  $region7: #{transformer_forward.7} parent=0 // loop_footer_branch
    %12 = sbr.rel target = $region3
  $region8: #{transformer_forward.7} parent=0 // loop_exit
    _

// kernel: transformer_forward.8
$region0: #{transformer_forward.8}
  #allocation0 [shape = 'u32[]', space=smem, size = 0x4, offset = 0x4, fixed_abs, tag = 'smem constant byte address 0x4 - core index']
  #allocation1 [shape = 'u32[144,128]{1,0:T(1,128)}', space=vmem, size = 0x12000, scoped, tag = 'internal scratch']
  %s0 = inlined_call_operand.vmem [shape: bf16[2,8,32], index: 0, kind: input, shape index: {}]
  %s1 = inlined_call_operand.vmem [shape: bf16[32,2048], index: 1, kind: input, shape index: {}]
  %s2 = inlined_call_operand.vmem [shape: f32[1,2048], index: 2, kind: input, shape index: {}]
  %s3 = inlined_call_operand.vmem [shape: bf16[2048,32], index: 3, kind: input, shape index: {}]
  %s4 = inlined_call_operand.vmem [shape: f32[1,32], index: 4, kind: input, shape index: {}]
  %s5 = inlined_call_operand.vmem [shape: f32[1,32], index: 5, kind: input, shape index: {}]
  %s6 = inlined_call_operand.vmem [shape: f32[1,32], index: 6, kind: input, shape index: {}]
  %s7 = inlined_call_operand.vmem [shape: bf16[2,8,32], index: 7, kind: output, shape index: {}]
  %s8 = sld [smem:[#allocation0]]
  $region61: #{transformer_forward.8} parent=0
    _
  %s10 = ssub.s32 1, %s8
  %s11 = scalar_select 0, %s10, %s8
  loop: start=0, step=1, limit=4
  $region2: #{transformer_forward.8} parent=0 // loop_pre_header
    _
  $region3: #{transformer_forward.8} parent=0 // loop_header
    %s13 = sphi 0, %s17
    %p14 = scmp.ge.s32.totalorder %s13, 4
    %s23 = sphi 0, %s25
    %s26 = sphi 0, %s23
    %s27 = sphi 0, %s26
    %s43 = sphi 0, %s27
    %s47 = sphi 0, %s47
    %s49 = sphi 0, %s47
    %s50 = sphi 0, %s49
    %s64 = sphi 0, %s50
    %s68 = sphi 0, %s68
    %s70 = sphi 0, %s68
    %s71 = sphi 0, %s70
    %s85 = sphi 0, %s71
    %s89 = sphi 0, %s89
    %s91 = sphi 0, %s89
    %s92 = sphi 0, %s91
    %s106 = sphi 0, %s92
    %s110 = sphi 0, %s110
    %s112 = sphi 0, %s110
    %s113 = sphi 0, %s112
    %s127 = sphi 0, %s113
    %s131 = sphi 0, %s131
    %s133 = sphi 0, %s131
    %s134 = sphi 0, %s133
    %s148 = sphi 0, %s134
    %s152 = sphi 0, %s152
    %s154 = sphi 0, %s152
    %s155 = sphi 0, %s154
    %s169 = sphi 0, %s155
    %s175 = sphi 0, %s177
    %s178 = sphi 0, %s175
    %s179 = sphi 0, %s178
    %s195 = sphi 0, %s179
  $region4: #{transformer_forward.8} parent=0 // loop_header_branch
    %16 = sbr.rel (%p14) target = $region8
  $region5: #{transformer_forward.8} parent=0 // loop_body
    %s18 = ssub.s32 %s13, 1
    %s19 = ssub.s32 %s13, 2
    %s20 = sadd.s32 %s13, 1
    %s21 = ssub.s32 %s13, %s20
    %p22 = scmp.eq.s32.totalorder %s21, 0
    %s24 = sadd.s32 %s23, 1
    %s25 = scalar_select %p22, %s23, %s24
    %p28 = pneg %p22
    %p29 = scmp.eq.s32.totalorder %s13, 1
    %p30 = por %p28, %p29
    %p31 = scmp.ne.s32.totalorder %s23, %s26
    %p32 = scmp.eq.s32.totalorder %s13, 0
    %p33 = por %p31, %p32
    %p34 = scmp.ne.s32.totalorder %s23, %s26
    %p35 = scmp.eq.s32.totalorder %s18, 1
    %p36 = por %p34, %p35
    %p37 = scmp.ne.s32.totalorder %s26, %s27
    %p38 = scmp.eq.s32.totalorder %s18, 0
    %p39 = por %p37, %p38
    %p40 = scmp.ne.s32.totalorder %s26, %s27
    %p41 = scmp.eq.s32.totalorder %s19, 1
    %p42 = por %p40, %p41
    %p44 = scmp.ne.s32.totalorder %s27, %s43
    %p45 = scmp.eq.s32.totalorder %s19, 0
    %p46 = por %p44, %p45
    %s48 = sadd.s32 %s47, 1
    %p51 = scmp.eq.s32.totalorder %s13, 1
    %p52 = scmp.ne.s32.totalorder %s47, %s49
    %p53 = scmp.eq.s32.totalorder %s13, 0
    %p54 = por %p52, %p53
    %p55 = scmp.ne.s32.totalorder %s47, %s49
    %p56 = scmp.eq.s32.totalorder %s18, 1
    %p57 = por %p55, %p56
    %p58 = scmp.ne.s32.totalorder %s49, %s50
    %p59 = scmp.eq.s32.totalorder %s18, 0
    %p60 = por %p58, %p59
    %p61 = scmp.ne.s32.totalorder %s49, %s50
    %p62 = scmp.eq.s32.totalorder %s19, 1
    %p63 = por %p61, %p62
    %p65 = scmp.ne.s32.totalorder %s50, %s64
    %p66 = scmp.eq.s32.totalorder %s19, 0
    %p67 = por %p65, %p66
    %s69 = sadd.s32 %s68, 1
    %p72 = scmp.eq.s32.totalorder %s13, 1
    %p73 = scmp.ne.s32.totalorder %s68, %s70
    %p74 = scmp.eq.s32.totalorder %s13, 0
    %p75 = por %p73, %p74
    %p76 = scmp.ne.s32.totalorder %s68, %s70
    %p77 = scmp.eq.s32.totalorder %s18, 1
    %p78 = por %p76, %p77
    %p79 = scmp.ne.s32.totalorder %s70, %s71
    %p80 = scmp.eq.s32.totalorder %s18, 0
    %p81 = por %p79, %p80
    %p82 = scmp.ne.s32.totalorder %s70, %s71
    %p83 = scmp.eq.s32.totalorder %s19, 1
    %p84 = por %p82, %p83
    %p86 = scmp.ne.s32.totalorder %s71, %s85
    %p87 = scmp.eq.s32.totalorder %s19, 0
    %p88 = por %p86, %p87
    %s90 = sadd.s32 %s89, 1
    %p93 = scmp.eq.s32.totalorder %s13, 1
    %p94 = scmp.ne.s32.totalorder %s89, %s91
    %p95 = scmp.eq.s32.totalorder %s13, 0
    %p96 = por %p94, %p95
    %p97 = scmp.ne.s32.totalorder %s89, %s91
    %p98 = scmp.eq.s32.totalorder %s18, 1
    %p99 = por %p97, %p98
    %p100 = scmp.ne.s32.totalorder %s91, %s92
    %p101 = scmp.eq.s32.totalorder %s18, 0
    %p102 = por %p100, %p101
    %p103 = scmp.ne.s32.totalorder %s91, %s92
    %p104 = scmp.eq.s32.totalorder %s19, 1
    %p105 = por %p103, %p104
    %p107 = scmp.ne.s32.totalorder %s92, %s106
    %p108 = scmp.eq.s32.totalorder %s19, 0
    %p109 = por %p107, %p108
    %s111 = sadd.s32 %s110, 1
    %p114 = scmp.eq.s32.totalorder %s13, 1
    %p115 = scmp.ne.s32.totalorder %s110, %s112
    %p116 = scmp.eq.s32.totalorder %s13, 0
    %p117 = por %p115, %p116
    %p118 = scmp.ne.s32.totalorder %s110, %s112
    %p119 = scmp.eq.s32.totalorder %s18, 1
    %p120 = por %p118, %p119
    %p121 = scmp.ne.s32.totalorder %s112, %s113
    %p122 = scmp.eq.s32.totalorder %s18, 0
    %p123 = por %p121, %p122
    %p124 = scmp.ne.s32.totalorder %s112, %s113
    %p125 = scmp.eq.s32.totalorder %s19, 1
    %p126 = por %p124, %p125
    %p128 = scmp.ne.s32.totalorder %s113, %s127
    %p129 = scmp.eq.s32.totalorder %s19, 0
    %p130 = por %p128, %p129
    %s132 = sadd.s32 %s131, 1
    %p135 = scmp.eq.s32.totalorder %s13, 1
    %p136 = scmp.ne.s32.totalorder %s131, %s133
    %p137 = scmp.eq.s32.totalorder %s13, 0
    %p138 = por %p136, %p137
    %p139 = scmp.ne.s32.totalorder %s131, %s133
    %p140 = scmp.eq.s32.totalorder %s18, 1
    %p141 = por %p139, %p140
    %p142 = scmp.ne.s32.totalorder %s133, %s134
    %p143 = scmp.eq.s32.totalorder %s18, 0
    %p144 = por %p142, %p143
    %p145 = scmp.ne.s32.totalorder %s133, %s134
    %p146 = scmp.eq.s32.totalorder %s19, 1
    %p147 = por %p145, %p146
    %p149 = scmp.ne.s32.totalorder %s134, %s148
    %p150 = scmp.eq.s32.totalorder %s19, 0
    %p151 = por %p149, %p150
    %s153 = sadd.s32 %s152, 1
    %p156 = scmp.eq.s32.totalorder %s13, 1
    %p157 = scmp.ne.s32.totalorder %s152, %s154
    %p158 = scmp.eq.s32.totalorder %s13, 0
    %p159 = por %p157, %p158
    %p160 = scmp.ne.s32.totalorder %s152, %s154
    %p161 = scmp.eq.s32.totalorder %s18, 1
    %p162 = por %p160, %p161
    %p163 = scmp.ne.s32.totalorder %s154, %s155
    %p164 = scmp.eq.s32.totalorder %s18, 0
    %p165 = por %p163, %p164
    %p166 = scmp.ne.s32.totalorder %s154, %s155
    %p167 = scmp.eq.s32.totalorder %s19, 1
    %p168 = por %p166, %p167
    %p170 = scmp.ne.s32.totalorder %s155, %s169
    %p171 = scmp.eq.s32.totalorder %s19, 0
    %p172 = por %p170, %p171
    %s173 = ssub.s32 %s13, %s20
    %p174 = scmp.eq.s32.totalorder %s173, 0
    %s176 = sadd.s32 %s175, 1
    %s177 = scalar_select %p174, %s175, %s176
    %p180 = pneg %p174
    %p181 = scmp.eq.s32.totalorder %s13, 1
    %p182 = por %p180, %p181
    %p183 = scmp.ne.s32.totalorder %s175, %s178
    %p184 = scmp.eq.s32.totalorder %s13, 0
    %p185 = por %p183, %p184
    %p186 = scmp.ne.s32.totalorder %s175, %s178
    %p187 = scmp.eq.s32.totalorder %s18, 1
    %p188 = por %p186, %p187
    %p189 = scmp.ne.s32.totalorder %s178, %s179
    %p190 = scmp.eq.s32.totalorder %s18, 0
    %p191 = por %p189, %p190
    %p192 = scmp.ne.s32.totalorder %s178, %s179
    %p193 = scmp.eq.s32.totalorder %s19, 1
    %p194 = por %p192, %p193
    %p196 = scmp.ne.s32.totalorder %s179, %s195
    %p197 = scmp.eq.s32.totalorder %s19, 0
    %p198 = por %p196, %p197
    %p199 = scmp.le.s32.totalorder 1, %s13
    %p200 = scmp.lt.s32.totalorder %s13, 3
    %p201 = pnand %p199, %p200
    %p202 = pneg %p201
    // Predicated region
    $region9: #{transformer_forward.8} parent=5 // pred_check
      _
    $region10: #{transformer_forward.8} parent=5 // pred_check_branch
      %204 = sbr.rel (%p201) target = $region12
    $region11: #{transformer_forward.8} parent=5 // pred_region
      %s205 = ssub.s32 %s13, 1
      // Predicated region
      $region13: #{transformer_forward.8} parent=11 // pred_check
        %p206 = pneg %p60
      $region14: #{transformer_forward.8} parent=11 // pred_check_branch
        %208 = sbr.rel (%p206) target = $region16
      $region15: #{transformer_forward.8} parent=11 // pred_region
        _
      $region16: #{transformer_forward.8} parent=11 // pred_fallthru
        _
      // Predicated region
      $region17: #{transformer_forward.8} parent=11 // pred_check
        %p209 = pneg %p81
      $region18: #{transformer_forward.8} parent=11 // pred_check_branch
        %211 = sbr.rel (%p209) target = $region20
      $region19: #{transformer_forward.8} parent=11 // pred_region
        _
      $region20: #{transformer_forward.8} parent=11 // pred_fallthru
        _
      // Predicated region
      $region21: #{transformer_forward.8} parent=11 // pred_check
        %p212 = pneg %p102
      $region22: #{transformer_forward.8} parent=11 // pred_check_branch
        %214 = sbr.rel (%p212) target = $region24
      $region23: #{transformer_forward.8} parent=11 // pred_region
        _
      $region24: #{transformer_forward.8} parent=11 // pred_fallthru
        _
      // Predicated region
      $region25: #{transformer_forward.8} parent=11 // pred_check
        %p215 = pneg %p123
      $region26: #{transformer_forward.8} parent=11 // pred_check_branch
        %217 = sbr.rel (%p215) target = $region28
      $region27: #{transformer_forward.8} parent=11 // pred_region
        _
      $region28: #{transformer_forward.8} parent=11 // pred_fallthru
        _
      // Predicated region
      $region29: #{transformer_forward.8} parent=11 // pred_check
        %p218 = pneg %p144
      $region30: #{transformer_forward.8} parent=11 // pred_check_branch
        %220 = sbr.rel (%p218) target = $region32
      $region31: #{transformer_forward.8} parent=11 // pred_region
        _
      $region32: #{transformer_forward.8} parent=11 // pred_fallthru
        _
      // Predicated region
      $region33: #{transformer_forward.8} parent=11 // pred_check
        %p221 = pneg %p165
      $region34: #{transformer_forward.8} parent=11 // pred_check_branch
        %223 = sbr.rel (%p221) target = $region36
      $region35: #{transformer_forward.8} parent=11 // pred_region
        _
      $region36: #{transformer_forward.8} parent=11 // pred_fallthru
        _
    $region12: #{transformer_forward.8} parent=5 // pred_fallthru
      _
    %p224 = scmp.lt.s32.totalorder %s13, 2
    // Predicated region
    $region37: #{transformer_forward.8} parent=5 // pred_check
      %p225 = pneg %p224
    $region38: #{transformer_forward.8} parent=5 // pred_check_branch
      %227 = sbr.rel (%p225) target = $region40
    $region39: #{transformer_forward.8} parent=5 // pred_region
      // Predicated region
      $region41: #{transformer_forward.8} parent=39 // pred_check
        %p228 = pneg %p33
      $region42: #{transformer_forward.8} parent=39 // pred_check_branch
        %230 = sbr.rel (%p228) target = $region44
      $region43: #{transformer_forward.8} parent=39 // pred_region
        %p231 = scmp.lt.s32.totalorder %s13, 1
        %s232 = scalar_select %p231, %s13, 1
        %s233 = smul.addr %s232, 4
        %s234 = scalar_lea.vmem %s0, %s233
      $region44: #{transformer_forward.8} parent=39 // pred_fallthru
        _
    $region40: #{transformer_forward.8} parent=5 // pred_fallthru
      _
    %p235 = scmp.le.s32.totalorder 1, %s13
    %p236 = scmp.lt.s32.totalorder %s13, 3
    %p237 = pnand %p235, %p236
    %p238 = pneg %p237
    // Predicated region
    $region45: #{transformer_forward.8} parent=5 // pred_check
      _
    $region46: #{transformer_forward.8} parent=5 // pred_check_branch
      %240 = sbr.rel (%p237) target = $region48
    $region47: #{transformer_forward.8} parent=5 // pred_region
      %s241 = ssub.s32 %s13, 1
      %p242 = scmp.lt.s32.totalorder %s18, 1
      %s243 = scalar_select %p242, %s18, 1
      %s244 = smul.addr %s243, 4
      %s245 = scalar_lea.vmem %s0, %s244
      %p246 = pneg %p39
      %p247 = pneg %p36
      %p248 = pneg %p60
      %p249 = pneg %p57
      %p250 = pneg %p81
      %p251 = pneg %p78
      %p252 = pneg %p102
      %p253 = pneg %p99
      %p254 = pneg %p123
      %p255 = pneg %p120
      %p256 = pneg %p144
      %p257 = pneg %p141
      %p258 = pneg %p165
      %p259 = pneg %p162
      %p260 = pneg %p191
      %p261 = pneg %p188
      %p262 = scmp.lt.s32.totalorder %s18, 1
      %s263 = scalar_select %p262, %s18, 1
      %s264 = smul.addr %s263, 4
      %s265 = scalar_lea.vmem %s7, %s264
      %p266 = scmp.lt.s32.totalorder %s18, 1
      %s267 = scalar_select %p266, %s18, 1
      %s268 = smul.addr %s267, 4
      %s269 = scalar_lea.vmem %s0, %s268
      %p270 = scmp.lt.s32.totalorder %s18, 1
      %s271 = scalar_select %p270, %s18, 1
      %s272 = smul.addr %s271, 4
      %s273 = scalar_lea.vmem %s7, %s272
      %v275 = vld [vmem:[%s269] sm:$0xf]
      %v276 = vld [vmem:[%s1] sm:$0xff]
      %v277 = vld [vmem:[%s1 + $0x8] sm:$0xff]
      %v278 = vld [vmem:[%s1 + $0x10] sm:$0xff]
      %v279 = vld [vmem:[%s1 + $0x18] sm:$0xff]
      %v280 = vld [vmem:[%s1 + $0x20] sm:$0xff]
      %v281 = vld [vmem:[%s1 + $0x28] sm:$0xff]
      %v282 = vld [vmem:[%s1 + $0x30] sm:$0xff]
      %v283 = vld [vmem:[%s1 + $0x38] sm:$0xff]
      %v284 = vld [vmem:[%s1 + $0x40] sm:$0xff]
      %v285 = vld [vmem:[%s1 + $0x48] sm:$0xff]
      %v286 = vld [vmem:[%s1 + $0x50] sm:$0xff]
      %v287 = vld [vmem:[%s1 + $0x58] sm:$0xff]
      %v288 = vld [vmem:[%s1 + $0x60] sm:$0xff]
      %v289 = vld [vmem:[%s1 + $0x68] sm:$0xff]
      %v290 = vld [vmem:[%s1 + $0x70] sm:$0xff]
      %v291 = vld [vmem:[%s1 + $0x78] sm:$0xff]
      %v292 = vld [vmem:[%s1 + $0x80] sm:$0xff]
      %v293 = vld [vmem:[%s1 + $0x88] sm:$0xff]
      %v294 = vld [vmem:[%s1 + $0x90] sm:$0xff]
      %v295 = vld [vmem:[%s1 + $0x98] sm:$0xff]
      %v296 = vld [vmem:[%s1 + $0xa0] sm:$0xff]
      %v297 = vld [vmem:[%s1 + $0xa8] sm:$0xff]
      %v298 = vld [vmem:[%s1 + $0xb0] sm:$0xff]
      %v299 = vld [vmem:[%s1 + $0xb8] sm:$0xff]
      %v300 = vld [vmem:[%s1 + $0xc0] sm:$0xff]
      %v301 = vld [vmem:[%s1 + $0xc8] sm:$0xff]
      %v302 = vld [vmem:[%s1 + $0xd0] sm:$0xff]
      %v303 = vld [vmem:[%s1 + $0xd8] sm:$0xff]
      %v304 = vld [vmem:[%s1 + $0xe0] sm:$0xff]
      %v305 = vld [vmem:[%s1 + $0xe8] sm:$0xff]
      %v306 = vld [vmem:[%s1 + $0xf0] sm:$0xff]
      %v307 = vld [vmem:[%s1 + $0xf8] sm:$0xff]
      %v308 = vld [vmem:[%s2] sm:$0xff]
      %v309 = vld [vmem:[%s2 + $0x8] sm:$0xff]
      %v312 = vlaneseq
      %v313 = vshrl.u32 %v312, 7
      %v314 = vsub.s32 0, %v313
      %v315 = vrot.slane %v308, %v314
      %v316 = vlaneseq
      %v317 = vshrl.u32 %v316, 7
      %v318 = vsub.s32 1, %v317
      %v319 = vrot.slane %v308, %v318
      %v320 = vlaneseq
      %v321 = vshrl.u32 %v320, 7
      %v322 = vsub.s32 2, %v321
      %v323 = vrot.slane %v308, %v322
      %v324 = vlaneseq
      %v325 = vshrl.u32 %v324, 7
      %v326 = vsub.s32 3, %v325
      %v327 = vrot.slane %v308, %v326
      %v328 = vlaneseq
      %v329 = vshrl.u32 %v328, 7
      %v330 = vsub.s32 4, %v329
      %v331 = vrot.slane %v308, %v330
      %v332 = vlaneseq
      %v333 = vshrl.u32 %v332, 7
      %v334 = vsub.s32 5, %v333
      %v335 = vrot.slane %v308, %v334
      %v336 = vlaneseq
      %v337 = vshrl.u32 %v336, 7
      %v338 = vsub.s32 6, %v337
      %v339 = vrot.slane %v308, %v338
      %v340 = vlaneseq
      %v341 = vshrl.u32 %v340, 7
      %v342 = vsub.s32 7, %v341
      %v343 = vrot.slane %v308, %v342
      %v344 = vlaneseq
      %v345 = vshrl.u32 %v344, 7
      %v346 = vsub.s32 0, %v345
      %v347 = vrot.slane %v309, %v346
      %v348 = vlaneseq
      %v349 = vshrl.u32 %v348, 7
      %v350 = vsub.s32 1, %v349
      %v351 = vrot.slane %v309, %v350
      %v352 = vlaneseq
      %v353 = vshrl.u32 %v352, 7
      %v354 = vsub.s32 2, %v353
      %v355 = vrot.slane %v309, %v354
      %v356 = vlaneseq
      %v357 = vshrl.u32 %v356, 7
      %v358 = vsub.s32 3, %v357
      %v359 = vrot.slane %v309, %v358
      %v360 = vlaneseq
      %v361 = vshrl.u32 %v360, 7
      %v362 = vsub.s32 4, %v361
      %v363 = vrot.slane %v309, %v362
      %v364 = vlaneseq
      %v365 = vshrl.u32 %v364, 7
      %v366 = vsub.s32 5, %v365
      %v367 = vrot.slane %v309, %v366
      %v368 = vlaneseq
      %v369 = vshrl.u32 %v368, 7
      %v370 = vsub.s32 6, %v369
      %v371 = vrot.slane %v309, %v370
      %v372 = vlaneseq
      %v373 = vshrl.u32 %v372, 7
      %v374 = vsub.s32 7, %v373
      %v375 = vrot.slane %v309, %v374
      %v424 = vunpack.c.l.b16 %v276
      %v425 = vunpack.c.h.b16 %v276
      %v426 = vunpack.c.l.b16 %v277
      %v427 = vunpack.c.h.b16 %v277
      %v428 = vunpack.c.l.b16 %v278
      %v429 = vunpack.c.h.b16 %v278
      %v430 = vunpack.c.l.b16 %v279
      %v431 = vunpack.c.h.b16 %v279
      %v432 = vunpack.c.l.b16 %v280
      %v433 = vunpack.c.h.b16 %v280
      %v434 = vunpack.c.l.b16 %v281
      %v435 = vunpack.c.h.b16 %v281
      %v436 = vunpack.c.l.b16 %v282
      %v437 = vunpack.c.h.b16 %v282
      %v438 = vunpack.c.l.b16 %v283
      %v439 = vunpack.c.h.b16 %v283
      %v440 = vunpack.c.l.b16 %v284
      %v441 = vunpack.c.h.b16 %v284
      %v442 = vunpack.c.l.b16 %v285
      %v443 = vunpack.c.h.b16 %v285
      %v444 = vunpack.c.l.b16 %v286
      %v445 = vunpack.c.h.b16 %v286
      %v446 = vunpack.c.l.b16 %v287
      %v447 = vunpack.c.h.b16 %v287
      %v448 = vunpack.c.l.b16 %v288
      %v449 = vunpack.c.h.b16 %v288
      %v450 = vunpack.c.l.b16 %v289
      %v451 = vunpack.c.h.b16 %v289
      %v452 = vunpack.c.l.b16 %v290
      %v453 = vunpack.c.h.b16 %v290
      %v454 = vunpack.c.l.b16 %v291
      %v455 = vunpack.c.h.b16 %v291
      %v456 = vunpack.c.l.b16 %v292
      %v457 = vunpack.c.h.b16 %v292
      %v458 = vunpack.c.l.b16 %v293
      %v459 = vunpack.c.h.b16 %v293
      %v460 = vunpack.c.l.b16 %v294
      %v461 = vunpack.c.h.b16 %v294
      %v462 = vunpack.c.l.b16 %v295
      %v463 = vunpack.c.h.b16 %v295
      %v464 = vunpack.c.l.b16 %v296
      %v465 = vunpack.c.h.b16 %v296
      %v466 = vunpack.c.l.b16 %v297
      %v467 = vunpack.c.h.b16 %v297
      %v468 = vunpack.c.l.b16 %v298
      %v469 = vunpack.c.h.b16 %v298
      %v470 = vunpack.c.l.b16 %v299
      %v471 = vunpack.c.h.b16 %v299
      %v472 = vunpack.c.l.b16 %v300
      %v473 = vunpack.c.h.b16 %v300
      %v474 = vunpack.c.l.b16 %v301
      %v475 = vunpack.c.h.b16 %v301
      %v476 = vunpack.c.l.b16 %v302
      %v477 = vunpack.c.h.b16 %v302
      %v478 = vunpack.c.l.b16 %v303
      %v479 = vunpack.c.h.b16 %v303
      %v480 = vunpack.c.l.b16 %v304
      %v481 = vunpack.c.h.b16 %v304
      %v482 = vunpack.c.l.b16 %v305
      %v483 = vunpack.c.h.b16 %v305
      %v484 = vunpack.c.l.b16 %v306
      %v485 = vunpack.c.h.b16 %v306
      %v486 = vunpack.c.l.b16 %v307
      %v487 = vunpack.c.h.b16 %v307
      %v488 = vpack.c.b16 %v440, %v424
      %v489 = vpack.c.b16 %v441, %v425
      %v490 = vpack.c.b16 %v442, %v426
      %v491 = vpack.c.b16 %v443, %v427
      %v492 = vpack.c.b16 %v444, %v428
      %v493 = vpack.c.b16 %v445, %v429
      %v494 = vpack.c.b16 %v446, %v430
      %v495 = vpack.c.b16 %v447, %v431
      %v496 = vpack.c.b16 %v448, %v432
      %v497 = vpack.c.b16 %v449, %v433
      %v498 = vpack.c.b16 %v450, %v434
      %v499 = vpack.c.b16 %v451, %v435
      %v500 = vpack.c.b16 %v452, %v436
      %v501 = vpack.c.b16 %v453, %v437
      %v502 = vpack.c.b16 %v454, %v438
      %v503 = vpack.c.b16 %v455, %v439
      %v504 = vpack.c.b16 %v472, %v456
      %v505 = vpack.c.b16 %v473, %v457
      %v506 = vpack.c.b16 %v474, %v458
      %v507 = vpack.c.b16 %v475, %v459
      %v508 = vpack.c.b16 %v476, %v460
      %v509 = vpack.c.b16 %v477, %v461
      %v510 = vpack.c.b16 %v478, %v462
      %v511 = vpack.c.b16 %v479, %v463
      %v512 = vpack.c.b16 %v480, %v464
      %v513 = vpack.c.b16 %v481, %v465
      %v514 = vpack.c.b16 %v482, %v466
      %v515 = vpack.c.b16 %v483, %v467
      %v516 = vpack.c.b16 %v484, %v468
      %v517 = vpack.c.b16 %v485, %v469
      %v518 = vpack.c.b16 %v486, %v470
      %v519 = vpack.c.b16 %v487, %v471
      %vm552 = vcmask 261120
      %v554 = vsel %vm552, %v275, 0
      %556 = vmatprep.subr.bf16.mxu0 0
      %557 = vmatpush1.bf16.msra.mxu0 0
      %558 = vmatprep.subr.bf16.mxu0 0
      %559 = vmatpush1.bf16.msra.mxu0 0
      %560 = vmatprep.subr.bf16.mxu0 0
      %561 = vmatpush1.bf16.msra.mxu0 0
      %562 = vmatprep.subr.bf16.mxu0 0
      %563 = vmatpush1.bf16.msra.mxu0 0
      %564 = vmatprep.subr.bf16.mxu0 0
      %565 = vmatpush1.bf16.msra.mxu0 0
      %566 = vmatprep.subr.bf16.mxu0 0
      %567 = vmatpush1.bf16.msra.mxu0 0
      %568 = vmatprep.subr.bf16.mxu0 %v505
      %569 = vmatpush1.bf16.msra.mxu0 %v504
      %570 = vmatprep.subr.bf16.mxu0 %v489
      %571 = vmatpush1.bf16.msra.mxu0 %v488
      %572 = vmatprep.subr.bf16.mxu0 0
      %573 = vmatpush2.bf16.msra.mxu0 0
      %574 = vmatprep.subr.bf16.mxu0 0
      %575 = vmatpush2.bf16.msra.mxu0 0
      %576 = vmatprep.subr.bf16.mxu0 0
      %577 = vmatpush2.bf16.msra.mxu0 0
      %578 = vmatprep.subr.bf16.mxu0 0
      %579 = vmatpush2.bf16.msra.mxu0 0
      %580 = vmatprep.subr.bf16.mxu0 0
      %581 = vmatpush2.bf16.msra.mxu0 0
      %582 = vmatprep.subr.bf16.mxu0 0
      %583 = vmatpush2.bf16.msra.mxu0 0
      %584 = vmatprep.subr.bf16.mxu0 0
      %585 = vmatpush2.bf16.msra.mxu0 0
      %586 = vmatprep.subr.bf16.mxu0 0
      %587 = vmatpush2.bf16.msra.mxu0 0
      %588 = vmatprep.mubr.bf16.mxu0 0
      %589 = vmatmul.mubr.bf16.gmra.mxu0 %v554
      %v590 = vpop.f32.mrf.mxu0
      %v591 = vadd.f32 %v315, %v590
      %v592 = vpop.f32.mrf.mxu0
      %v593 = vadd.f32 %v319, %v592
      %v594 = vpop.f32.mrf.mxu0
      %v595 = vpop.f32.mrf.mxu0
      %596 = vdwg.mxu0
      %597 = vmatprep.subr.bf16.mxu0 0
      %598 = vmatpush1.bf16.msra.mxu0 0
      %599 = vmatprep.subr.bf16.mxu0 0
      %600 = vmatpush1.bf16.msra.mxu0 0
      %601 = vmatprep.subr.bf16.mxu0 0
      %602 = vmatpush1.bf16.msra.mxu0 0
      %603 = vmatprep.subr.bf16.mxu0 0
      %604 = vmatpush1.bf16.msra.mxu0 0
      %605 = vmatprep.subr.bf16.mxu0 0
      %606 = vmatpush1.bf16.msra.mxu0 0
      %607 = vmatprep.subr.bf16.mxu0 0
      %608 = vmatpush1.bf16.msra.mxu0 0
      %609 = vmatprep.subr.bf16.mxu0 %v507
      %610 = vmatpush1.bf16.msra.mxu0 %v506
      %611 = vmatprep.subr.bf16.mxu0 %v491
      %612 = vmatpush1.bf16.msra.mxu0 %v490
      %613 = vmatprep.subr.bf16.mxu0 0
      %614 = vmatpush2.bf16.msra.mxu0 0
      %615 = vmatprep.subr.bf16.mxu0 0
      %616 = vmatpush2.bf16.msra.mxu0 0
      %617 = vmatprep.subr.bf16.mxu0 0
      %618 = vmatpush2.bf16.msra.mxu0 0
      %619 = vmatprep.subr.bf16.mxu0 0
      %620 = vmatpush2.bf16.msra.mxu0 0
      %621 = vmatprep.subr.bf16.mxu0 0
      %622 = vmatpush2.bf16.msra.mxu0 0
      %623 = vmatprep.subr.bf16.mxu0 0
      %624 = vmatpush2.bf16.msra.mxu0 0
      %625 = vmatprep.subr.bf16.mxu0 0
      %626 = vmatpush2.bf16.msra.mxu0 0
      %627 = vmatprep.subr.bf16.mxu0 0
      %628 = vmatpush2.bf16.msra.mxu0 0
      %629 = vmatprep.mubr.bf16.mxu0 0
      %630 = vmatmul.mubr.bf16.gmra.mxu0 %v554
      %v631 = vpop.f32.mrf.mxu0
      %v632 = vadd.f32 %v323, %v631
      %v633 = vpop.f32.mrf.mxu0
      %v634 = vadd.f32 %v327, %v633
      %v635 = vpop.f32.mrf.mxu0
      %v636 = vpop.f32.mrf.mxu0
      %637 = vdwg.mxu0
      %638 = vmatprep.subr.bf16.mxu0 0
      %639 = vmatpush1.bf16.msra.mxu0 0
      %640 = vmatprep.subr.bf16.mxu0 0
      %641 = vmatpush1.bf16.msra.mxu0 0
      %642 = vmatprep.subr.bf16.mxu0 0
      %643 = vmatpush1.bf16.msra.mxu0 0
      %644 = vmatprep.subr.bf16.mxu0 0
      %645 = vmatpush1.bf16.msra.mxu0 0
      %646 = vmatprep.subr.bf16.mxu0 0
      %647 = vmatpush1.bf16.msra.mxu0 0
      %648 = vmatprep.subr.bf16.mxu0 0
      %649 = vmatpush1.bf16.msra.mxu0 0
      %650 = vmatprep.subr.bf16.mxu0 %v509
      %651 = vmatpush1.bf16.msra.mxu0 %v508
      %652 = vmatprep.subr.bf16.mxu0 %v493
      %653 = vmatpush1.bf16.msra.mxu0 %v492
      %654 = vmatprep.subr.bf16.mxu0 0
      %655 = vmatpush2.bf16.msra.mxu0 0
      %656 = vmatprep.subr.bf16.mxu0 0
      %657 = vmatpush2.bf16.msra.mxu0 0
      %658 = vmatprep.subr.bf16.mxu0 0
      %659 = vmatpush2.bf16.msra.mxu0 0
      %660 = vmatprep.subr.bf16.mxu0 0
      %661 = vmatpush2.bf16.msra.mxu0 0
      %662 = vmatprep.subr.bf16.mxu0 0
      %663 = vmatpush2.bf16.msra.mxu0 0
      %664 = vmatprep.subr.bf16.mxu0 0
      %665 = vmatpush2.bf16.msra.mxu0 0
      %666 = vmatprep.subr.bf16.mxu0 0
      %667 = vmatpush2.bf16.msra.mxu0 0
      %668 = vmatprep.subr.bf16.mxu0 0
      %669 = vmatpush2.bf16.msra.mxu0 0
      %670 = vmatprep.mubr.bf16.mxu0 0
      %671 = vmatmul.mubr.bf16.gmra.mxu0 %v554
      %v672 = vpop.f32.mrf.mxu0
      %v673 = vadd.f32 %v331, %v672
      %v674 = vpop.f32.mrf.mxu0
      %v675 = vadd.f32 %v335, %v674
      %v676 = vpop.f32.mrf.mxu0
      %v677 = vpop.f32.mrf.mxu0
      %678 = vdwg.mxu0
      %679 = vmatprep.subr.bf16.mxu0 0
      %680 = vmatpush1.bf16.msra.mxu0 0
      %681 = vmatprep.subr.bf16.mxu0 0
      %682 = vmatpush1.bf16.msra.mxu0 0
      %683 = vmatprep.subr.bf16.mxu0 0
      %684 = vmatpush1.bf16.msra.mxu0 0
      %685 = vmatprep.subr.bf16.mxu0 0
      %686 = vmatpush1.bf16.msra.mxu0 0
      %687 = vmatprep.subr.bf16.mxu0 0
      %688 = vmatpush1.bf16.msra.mxu0 0
      %689 = vmatprep.subr.bf16.mxu0 0
      %690 = vmatpush1.bf16.msra.mxu0 0
      %691 = vmatprep.subr.bf16.mxu0 %v511
      %692 = vmatpush1.bf16.msra.mxu0 %v510
      %693 = vmatprep.subr.bf16.mxu0 %v495
      %694 = vmatpush1.bf16.msra.mxu0 %v494
      %695 = vmatprep.subr.bf16.mxu0 0
      %696 = vmatpush2.bf16.msra.mxu0 0
      %697 = vmatprep.subr.bf16.mxu0 0
      %698 = vmatpush2.bf16.msra.mxu0 0
      %699 = vmatprep.subr.bf16.mxu0 0
      %700 = vmatpush2.bf16.msra.mxu0 0
      %701 = vmatprep.subr.bf16.mxu0 0
      %702 = vmatpush2.bf16.msra.mxu0 0
      %703 = vmatprep.subr.bf16.mxu0 0
      %704 = vmatpush2.bf16.msra.mxu0 0
      %705 = vmatprep.subr.bf16.mxu0 0
      %706 = vmatpush2.bf16.msra.mxu0 0
      %707 = vmatprep.subr.bf16.mxu0 0
      %708 = vmatpush2.bf16.msra.mxu0 0
      %709 = vmatprep.subr.bf16.mxu0 0
      %710 = vmatpush2.bf16.msra.mxu0 0
      %711 = vmatprep.mubr.bf16.mxu0 0
      %712 = vmatmul.mubr.bf16.gmra.mxu0 %v554
      %v713 = vpop.f32.mrf.mxu0
      %v714 = vadd.f32 %v339, %v713
      %v715 = vpop.f32.mrf.mxu0
      %v716 = vadd.f32 %v343, %v715
      %v717 = vpop.f32.mrf.mxu0
      %v718 = vpop.f32.mrf.mxu0
      %719 = vdwg.mxu0
      %720 = vmatprep.subr.bf16.mxu0 0
      %721 = vmatpush1.bf16.msra.mxu0 0
      %722 = vmatprep.subr.bf16.mxu0 0
      %723 = vmatpush1.bf16.msra.mxu0 0
      %724 = vmatprep.subr.bf16.mxu0 0
      %725 = vmatpush1.bf16.msra.mxu0 0
      %726 = vmatprep.subr.bf16.mxu0 0
      %727 = vmatpush1.bf16.msra.mxu0 0
      %728 = vmatprep.subr.bf16.mxu0 0
      %729 = vmatpush1.bf16.msra.mxu0 0
      %730 = vmatprep.subr.bf16.mxu0 0
      %731 = vmatpush1.bf16.msra.mxu0 0
      %732 = vmatprep.subr.bf16.mxu0 %v513
      %733 = vmatpush1.bf16.msra.mxu0 %v512
      %734 = vmatprep.subr.bf16.mxu0 %v497
      %735 = vmatpush1.bf16.msra.mxu0 %v496
      %736 = vmatprep.subr.bf16.mxu0 0
      %737 = vmatpush2.bf16.msra.mxu0 0
      %738 = vmatprep.subr.bf16.mxu0 0
      %739 = vmatpush2.bf16.msra.mxu0 0
      %740 = vmatprep.subr.bf16.mxu0 0
      %741 = vmatpush2.bf16.msra.mxu0 0
      %742 = vmatprep.subr.bf16.mxu0 0
      %743 = vmatpush2.bf16.msra.mxu0 0
      %744 = vmatprep.subr.bf16.mxu0 0
      %745 = vmatpush2.bf16.msra.mxu0 0
      %746 = vmatprep.subr.bf16.mxu0 0
      %747 = vmatpush2.bf16.msra.mxu0 0
      %748 = vmatprep.subr.bf16.mxu0 0
      %749 = vmatpush2.bf16.msra.mxu0 0
      %750 = vmatprep.subr.bf16.mxu0 0
      %751 = vmatpush2.bf16.msra.mxu0 0
      %752 = vmatprep.mubr.bf16.mxu0 0
      %753 = vmatmul.mubr.bf16.gmra.mxu0 %v554
      %v754 = vpop.f32.mrf.mxu0
      %v755 = vadd.f32 %v347, %v754
      %v756 = vpop.f32.mrf.mxu0
      %v757 = vadd.f32 %v351, %v756
      %v758 = vpop.f32.mrf.mxu0
      %v759 = vpop.f32.mrf.mxu0
      %760 = vdwg.mxu0
      %761 = vmatprep.subr.bf16.mxu0 0
      %762 = vmatpush1.bf16.msra.mxu0 0
      %763 = vmatprep.subr.bf16.mxu0 0
      %764 = vmatpush1.bf16.msra.mxu0 0
      %765 = vmatprep.subr.bf16.mxu0 0
      %766 = vmatpush1.bf16.msra.mxu0 0
      %767 = vmatprep.subr.bf16.mxu0 0
      %768 = vmatpush1.bf16.msra.mxu0 0
      %769 = vmatprep.subr.bf16.mxu0 0
      %770 = vmatpush1.bf16.msra.mxu0 0
      %771 = vmatprep.subr.bf16.mxu0 0
      %772 = vmatpush1.bf16.msra.mxu0 0
      %773 = vmatprep.subr.bf16.mxu0 %v515
      %774 = vmatpush1.bf16.msra.mxu0 %v514
      %775 = vmatprep.subr.bf16.mxu0 %v499
      %776 = vmatpush1.bf16.msra.mxu0 %v498
      %777 = vmatprep.subr.bf16.mxu0 0
      %778 = vmatpush2.bf16.msra.mxu0 0
      %779 = vmatprep.subr.bf16.mxu0 0
      %780 = vmatpush2.bf16.msra.mxu0 0
      %781 = vmatprep.subr.bf16.mxu0 0
      %782 = vmatpush2.bf16.msra.mxu0 0
      %783 = vmatprep.subr.bf16.mxu0 0
      %784 = vmatpush2.bf16.msra.mxu0 0
      %785 = vmatprep.subr.bf16.mxu0 0
      %786 = vmatpush2.bf16.msra.mxu0 0
      %787 = vmatprep.subr.bf16.mxu0 0
      %788 = vmatpush2.bf16.msra.mxu0 0
      %789 = vmatprep.subr.bf16.mxu0 0
      %790 = vmatpush2.bf16.msra.mxu0 0
      %791 = vmatprep.subr.bf16.mxu0 0
      %792 = vmatpush2.bf16.msra.mxu0 0
      %793 = vmatprep.mubr.bf16.mxu0 0
      %794 = vmatmul.mubr.bf16.gmra.mxu0 %v554
      %v795 = vpop.f32.mrf.mxu0
      %v796 = vadd.f32 %v355, %v795
      %v797 = vpop.f32.mrf.mxu0
      %v798 = vadd.f32 %v359, %v797
      %v799 = vpop.f32.mrf.mxu0
      %v800 = vpop.f32.mrf.mxu0
      %801 = vdwg.mxu0
      %802 = vmatprep.subr.bf16.mxu0 0
      %803 = vmatpush1.bf16.msra.mxu0 0
      %804 = vmatprep.subr.bf16.mxu0 0
      %805 = vmatpush1.bf16.msra.mxu0 0
      %806 = vmatprep.subr.bf16.mxu0 0
      %807 = vmatpush1.bf16.msra.mxu0 0
      %808 = vmatprep.subr.bf16.mxu0 0
      %809 = vmatpush1.bf16.msra.mxu0 0
      %810 = vmatprep.subr.bf16.mxu0 0
      %811 = vmatpush1.bf16.msra.mxu0 0
      %812 = vmatprep.subr.bf16.mxu0 0
      %813 = vmatpush1.bf16.msra.mxu0 0
      %814 = vmatprep.subr.bf16.mxu0 %v517
      %815 = vmatpush1.bf16.msra.mxu0 %v516
      %816 = vmatprep.subr.bf16.mxu0 %v501
      %817 = vmatpush1.bf16.msra.mxu0 %v500
      %818 = vmatprep.subr.bf16.mxu0 0
      %819 = vmatpush2.bf16.msra.mxu0 0
      %820 = vmatprep.subr.bf16.mxu0 0
      %821 = vmatpush2.bf16.msra.mxu0 0
      %822 = vmatprep.subr.bf16.mxu0 0
      %823 = vmatpush2.bf16.msra.mxu0 0
      %824 = vmatprep.subr.bf16.mxu0 0
      %825 = vmatpush2.bf16.msra.mxu0 0
      %826 = vmatprep.subr.bf16.mxu0 0
      %827 = vmatpush2.bf16.msra.mxu0 0
      %828 = vmatprep.subr.bf16.mxu0 0
      %829 = vmatpush2.bf16.msra.mxu0 0
      %830 = vmatprep.subr.bf16.mxu0 0
      %831 = vmatpush2.bf16.msra.mxu0 0
      %832 = vmatprep.subr.bf16.mxu0 0
      %833 = vmatpush2.bf16.msra.mxu0 0
      %834 = vmatprep.mubr.bf16.mxu0 0
      %835 = vmatmul.mubr.bf16.gmra.mxu0 %v554
      %v836 = vpop.f32.mrf.mxu0
      %v837 = vadd.f32 %v363, %v836
      %v838 = vpop.f32.mrf.mxu0
      %v839 = vadd.f32 %v367, %v838
      %v840 = vpop.f32.mrf.mxu0
      %v841 = vpop.f32.mrf.mxu0
      %842 = vdwg.mxu0
      %843 = vmatprep.subr.bf16.mxu0 0
      %844 = vmatpush1.bf16.msra.mxu0 0
      %845 = vmatprep.subr.bf16.mxu0 0
      %846 = vmatpush1.bf16.msra.mxu0 0
      %847 = vmatprep.subr.bf16.mxu0 0
      %848 = vmatpush1.bf16.msra.mxu0 0
      %849 = vmatprep.subr.bf16.mxu0 0
      %850 = vmatpush1.bf16.msra.mxu0 0
      %851 = vmatprep.subr.bf16.mxu0 0
      %852 = vmatpush1.bf16.msra.mxu0 0
      %853 = vmatprep.subr.bf16.mxu0 0
      %854 = vmatpush1.bf16.msra.mxu0 0
      %855 = vmatprep.subr.bf16.mxu0 %v519
      %856 = vmatpush1.bf16.msra.mxu0 %v518
      %857 = vmatprep.subr.bf16.mxu0 %v503
      %858 = vmatpush1.bf16.msra.mxu0 %v502
      %859 = vmatprep.subr.bf16.mxu0 0
      %860 = vmatpush2.bf16.msra.mxu0 0
      %861 = vmatprep.subr.bf16.mxu0 0
      %862 = vmatpush2.bf16.msra.mxu0 0
      %863 = vmatprep.subr.bf16.mxu0 0
      %864 = vmatpush2.bf16.msra.mxu0 0
      %865 = vmatprep.subr.bf16.mxu0 0
      %866 = vmatpush2.bf16.msra.mxu0 0
      %867 = vmatprep.subr.bf16.mxu0 0
      %868 = vmatpush2.bf16.msra.mxu0 0
      %869 = vmatprep.subr.bf16.mxu0 0
      %870 = vmatpush2.bf16.msra.mxu0 0
      %871 = vmatprep.subr.bf16.mxu0 0
      %872 = vmatpush2.bf16.msra.mxu0 0
      %873 = vmatprep.subr.bf16.mxu0 0
      %874 = vmatpush2.bf16.msra.mxu0 0
      %875 = vmatprep.mubr.bf16.mxu0 0
      %876 = vmatmul.mubr.bf16.gmra.mxu0 %v554
      %v877 = vpop.f32.mrf.mxu0
      %v878 = vadd.f32 %v371, %v877
      %v879 = vpop.f32.mrf.mxu0
      %v880 = vadd.f32 %v375, %v879
      %v881 = vpop.f32.mrf.mxu0
      %v882 = vpop.f32.mrf.mxu0
      %883 = vdwg.mxu0
      %v884 = vmax.f32 %v591, 0.0
      %v885 = vmax.f32 %v593, 0.0
      %v886 = vmax.f32 %v632, 0.0
      %v887 = vmax.f32 %v634, 0.0
      %v888 = vmax.f32 %v673, 0.0
      %v889 = vmax.f32 %v675, 0.0
      %v890 = vmax.f32 %v714, 0.0
      %v891 = vmax.f32 %v716, 0.0
      %v892 = vmax.f32 %v755, 0.0
      %v893 = vmax.f32 %v757, 0.0
      %v894 = vmax.f32 %v796, 0.0
      %v895 = vmax.f32 %v798, 0.0
      %v896 = vmax.f32 %v837, 0.0
      %v897 = vmax.f32 %v839, 0.0
      %v898 = vmax.f32 %v878, 0.0
      %v899 = vmax.f32 %v880, 0.0
      %v900 = vpack.c.bf16 %v884, %v884
      %v901 = vpack.c.bf16 %v885, %v885
      %v902 = vpack.c.bf16 %v886, %v886
      %v903 = vpack.c.bf16 %v887, %v887
      %v904 = vpack.c.bf16 %v888, %v888
      %v905 = vpack.c.bf16 %v889, %v889
      %v906 = vpack.c.bf16 %v890, %v890
      %v907 = vpack.c.bf16 %v891, %v891
      %v908 = vpack.c.bf16 %v892, %v892
      %v909 = vpack.c.bf16 %v893, %v893
      %v910 = vpack.c.bf16 %v894, %v894
      %v911 = vpack.c.bf16 %v895, %v895
      %v912 = vpack.c.bf16 %v896, %v896
      %v913 = vpack.c.bf16 %v897, %v897
      %v914 = vpack.c.bf16 %v898, %v898
      %v915 = vpack.c.bf16 %v899, %v899
      %v916 = vld [vmem:[%s3] sm:$0xf]
      %v917 = vld [vmem:[%s3 + $0x4] sm:$0xf]
      %v918 = vld [vmem:[%s3 + $0x8] sm:$0xf]
      %v919 = vld [vmem:[%s3 + $0xc] sm:$0xf]
      %v920 = vld [vmem:[%s3 + $0x10] sm:$0xf]
      %v921 = vld [vmem:[%s3 + $0x14] sm:$0xf]
      %v922 = vld [vmem:[%s3 + $0x18] sm:$0xf]
      %v923 = vld [vmem:[%s3 + $0x1c] sm:$0xf]
      %v924 = vld [vmem:[%s3 + $0x20] sm:$0xf]
      %v925 = vld [vmem:[%s3 + $0x24] sm:$0xf]
      %v926 = vld [vmem:[%s3 + $0x28] sm:$0xf]
      %v927 = vld [vmem:[%s3 + $0x2c] sm:$0xf]
      %v928 = vld [vmem:[%s3 + $0x30] sm:$0xf]
      %v929 = vld [vmem:[%s3 + $0x34] sm:$0xf]
      %v930 = vld [vmem:[%s3 + $0x38] sm:$0xf]
      %v931 = vld [vmem:[%s3 + $0x3c] sm:$0xf]
      %v932 = vld [vmem:[%s3 + $0x40] sm:$0xf]
      %v933 = vld [vmem:[%s3 + $0x44] sm:$0xf]
      %v934 = vld [vmem:[%s3 + $0x48] sm:$0xf]
      %v935 = vld [vmem:[%s3 + $0x4c] sm:$0xf]
      %v936 = vld [vmem:[%s3 + $0x50] sm:$0xf]
      %v937 = vld [vmem:[%s3 + $0x54] sm:$0xf]
      %v938 = vld [vmem:[%s3 + $0x58] sm:$0xf]
      %v939 = vld [vmem:[%s3 + $0x5c] sm:$0xf]
      %v940 = vld [vmem:[%s3 + $0x60] sm:$0xf]
      %v941 = vld [vmem:[%s3 + $0x64] sm:$0xf]
      %v942 = vld [vmem:[%s3 + $0x68] sm:$0xf]
      %v943 = vld [vmem:[%s3 + $0x6c] sm:$0xf]
      %v944 = vld [vmem:[%s3 + $0x70] sm:$0xf]
      %v945 = vld [vmem:[%s3 + $0x74] sm:$0xf]
      %v946 = vld [vmem:[%s3 + $0x78] sm:$0xf]
      %v947 = vld [vmem:[%s3 + $0x7c] sm:$0xf]
      %v948 = vld [vmem:[%s3 + $0x80] sm:$0xf]
      %v949 = vld [vmem:[%s3 + $0x84] sm:$0xf]
      %v950 = vld [vmem:[%s3 + $0x88] sm:$0xf]
      %v951 = vld [vmem:[%s3 + $0x8c] sm:$0xf]
      %v952 = vld [vmem:[%s3 + $0x90] sm:$0xf]
      %v953 = vld [vmem:[%s3 + $0x94] sm:$0xf]
      %v954 = vld [vmem:[%s3 + $0x98] sm:$0xf]
      %v955 = vld [vmem:[%s3 + $0x9c] sm:$0xf]
      %v956 = vld [vmem:[%s3 + $0xa0] sm:$0xf]
      %v957 = vld [vmem:[%s3 + $0xa4] sm:$0xf]
      %v958 = vld [vmem:[%s3 + $0xa8] sm:$0xf]
      %v959 = vld [vmem:[%s3 + $0xac] sm:$0xf]
      %v960 = vld [vmem:[%s3 + $0xb0] sm:$0xf]
      %v961 = vld [vmem:[%s3 + $0xb4] sm:$0xf]
      %v962 = vld [vmem:[%s3 + $0xb8] sm:$0xf]
      %v963 = vld [vmem:[%s3 + $0xbc] sm:$0xf]
      %v964 = vld [vmem:[%s3 + $0xc0] sm:$0xf]
      %v965 = vld [vmem:[%s3 + $0xc4] sm:$0xf]
      %v966 = vld [vmem:[%s3 + $0xc8] sm:$0xf]
      %v967 = vld [vmem:[%s3 + $0xcc] sm:$0xf]
      %v968 = vld [vmem:[%s3 + $0xd0] sm:$0xf]
      %v969 = vld [vmem:[%s3 + $0xd4] sm:$0xf]
      %v970 = vld [vmem:[%s3 + $0xd8] sm:$0xf]
      %v971 = vld [vmem:[%s3 + $0xdc] sm:$0xf]
      %v972 = vld [vmem:[%s3 + $0xe0] sm:$0xf]
      %v973 = vld [vmem:[%s3 + $0xe4] sm:$0xf]
      %v974 = vld [vmem:[%s3 + $0xe8] sm:$0xf]
      %v975 = vld [vmem:[%s3 + $0xec] sm:$0xf]
      %v976 = vld [vmem:[%s3 + $0xf0] sm:$0xf]
      %v977 = vld [vmem:[%s3 + $0xf4] sm:$0xf]
      %v978 = vld [vmem:[%s3 + $0xf8] sm:$0xf]
      %v979 = vld [vmem:[%s3 + $0xfc] sm:$0xf]
      %v980 = vld [vmem:[%s3 + $0x100] sm:$0xf]
      %v981 = vld [vmem:[%s3 + $0x104] sm:$0xf]
      %v982 = vld [vmem:[%s3 + $0x108] sm:$0xf]
      %v983 = vld [vmem:[%s3 + $0x10c] sm:$0xf]
      %v984 = vld [vmem:[%s3 + $0x110] sm:$0xf]
      %v985 = vld [vmem:[%s3 + $0x114] sm:$0xf]
      %v986 = vld [vmem:[%s3 + $0x118] sm:$0xf]
      %v987 = vld [vmem:[%s3 + $0x11c] sm:$0xf]
      %v988 = vld [vmem:[%s3 + $0x120] sm:$0xf]
      %v989 = vld [vmem:[%s3 + $0x124] sm:$0xf]
      %v990 = vld [vmem:[%s3 + $0x128] sm:$0xf]
      %v991 = vld [vmem:[%s3 + $0x12c] sm:$0xf]
      %v992 = vld [vmem:[%s3 + $0x130] sm:$0xf]
      %v993 = vld [vmem:[%s3 + $0x134] sm:$0xf]
      %v994 = vld [vmem:[%s3 + $0x138] sm:$0xf]
      %v995 = vld [vmem:[%s3 + $0x13c] sm:$0xf]
      %v996 = vld [vmem:[%s3 + $0x140] sm:$0xf]
      %v997 = vld [vmem:[%s3 + $0x144] sm:$0xf]
      %v998 = vld [vmem:[%s3 + $0x148] sm:$0xf]
      %v999 = vld [vmem:[%s3 + $0x14c] sm:$0xf]
      %v1000 = vld [vmem:[%s3 + $0x150] sm:$0xf]
      %v1001 = vld [vmem:[%s3 + $0x154] sm:$0xf]
      %v1002 = vld [vmem:[%s3 + $0x158] sm:$0xf]
      %v1003 = vld [vmem:[%s3 + $0x15c] sm:$0xf]
      %v1004 = vld [vmem:[%s3 + $0x160] sm:$0xf]
      %v1005 = vld [vmem:[%s3 + $0x164] sm:$0xf]
      %v1006 = vld [vmem:[%s3 + $0x168] sm:$0xf]
      %v1007 = vld [vmem:[%s3 + $0x16c] sm:$0xf]
      %v1008 = vld [vmem:[%s3 + $0x170] sm:$0xf]
      %v1009 = vld [vmem:[%s3 + $0x174] sm:$0xf]
      %v1010 = vld [vmem:[%s3 + $0x178] sm:$0xf]
      %v1011 = vld [vmem:[%s3 + $0x17c] sm:$0xf]
      %v1012 = vld [vmem:[%s3 + $0x180] sm:$0xf]
      %v1013 = vld [vmem:[%s3 + $0x184] sm:$0xf]
      %v1014 = vld [vmem:[%s3 + $0x188] sm:$0xf]
      %v1015 = vld [vmem:[%s3 + $0x18c] sm:$0xf]
      %v1016 = vld [vmem:[%s3 + $0x190] sm:$0xf]
      %v1017 = vld [vmem:[%s3 + $0x194] sm:$0xf]
      %v1018 = vld [vmem:[%s3 + $0x198] sm:$0xf]
      %v1019 = vld [vmem:[%s3 + $0x19c] sm:$0xf]
      %v1020 = vld [vmem:[%s3 + $0x1a0] sm:$0xf]
      %v1021 = vld [vmem:[%s3 + $0x1a4] sm:$0xf]
      %v1022 = vld [vmem:[%s3 + $0x1a8] sm:$0xf]
      %v1023 = vld [vmem:[%s3 + $0x1ac] sm:$0xf]
      %v1024 = vld [vmem:[%s3 + $0x1b0] sm:$0xf]
      %v1025 = vld [vmem:[%s3 + $0x1b4] sm:$0xf]
      %v1026 = vld [vmem:[%s3 + $0x1b8] sm:$0xf]
      %v1027 = vld [vmem:[%s3 + $0x1bc] sm:$0xf]
      %v1028 = vld [vmem:[%s3 + $0x1c0] sm:$0xf]
      %v1029 = vld [vmem:[%s3 + $0x1c4] sm:$0xf]
      %v1030 = vld [vmem:[%s3 + $0x1c8] sm:$0xf]
      %v1031 = vld [vmem:[%s3 + $0x1cc] sm:$0xf]
      %v1032 = vld [vmem:[%s3 + $0x1d0] sm:$0xf]
      %v1033 = vld [vmem:[%s3 + $0x1d4] sm:$0xf]
      %v1034 = vld [vmem:[%s3 + $0x1d8] sm:$0xf]
      %v1035 = vld [vmem:[%s3 + $0x1dc] sm:$0xf]
      %v1036 = vld [vmem:[%s3 + $0x1e0] sm:$0xf]
      %v1037 = vld [vmem:[%s3 + $0x1e4] sm:$0xf]
      %v1038 = vld [vmem:[%s3 + $0x1e8] sm:$0xf]
      %v1039 = vld [vmem:[%s3 + $0x1ec] sm:$0xf]
      %v1040 = vld [vmem:[%s3 + $0x1f0] sm:$0xf]
      %v1041 = vld [vmem:[%s3 + $0x1f4] sm:$0xf]
      %v1042 = vld [vmem:[%s3 + $0x1f8] sm:$0xf]
      %v1043 = vld [vmem:[%s3 + $0x1fc] sm:$0xf]
      %v1044 = vld [vmem:[%s3 + $0x200] sm:$0xf]
      %v1045 = vld [vmem:[%s3 + $0x204] sm:$0xf]
      %v1046 = vld [vmem:[%s3 + $0x208] sm:$0xf]
      %v1047 = vld [vmem:[%s3 + $0x20c] sm:$0xf]
      %v1048 = vld [vmem:[%s3 + $0x210] sm:$0xf]
      %v1049 = vld [vmem:[%s3 + $0x214] sm:$0xf]
      %v1050 = vld [vmem:[%s3 + $0x218] sm:$0xf]
      %v1051 = vld [vmem:[%s3 + $0x21c] sm:$0xf]
      %v1052 = vld [vmem:[%s3 + $0x220] sm:$0xf]
      %v1053 = vld [vmem:[%s3 + $0x224] sm:$0xf]
      %v1054 = vld [vmem:[%s3 + $0x228] sm:$0xf]
      %v1055 = vld [vmem:[%s3 + $0x22c] sm:$0xf]
      %v1056 = vld [vmem:[%s3 + $0x230] sm:$0xf]
      %v1057 = vld [vmem:[%s3 + $0x234] sm:$0xf]
      %v1058 = vld [vmem:[%s3 + $0x238] sm:$0xf]
      %v1059 = vld [vmem:[%s3 + $0x23c] sm:$0xf]
      %v1060 = vld [vmem:[%s3 + $0x240] sm:$0xf]
      %v1061 = vld [vmem:[%s3 + $0x244] sm:$0xf]
      %v1062 = vld [vmem:[%s3 + $0x248] sm:$0xf]
      %v1063 = vld [vmem:[%s3 + $0x24c] sm:$0xf]
      %v1064 = vld [vmem:[%s3 + $0x250] sm:$0xf]
      %v1065 = vld [vmem:[%s3 + $0x254] sm:$0xf]
      %v1066 = vld [vmem:[%s3 + $0x258] sm:$0xf]
      %v1067 = vld [vmem:[%s3 + $0x25c] sm:$0xf]
      %v1068 = vld [vmem:[%s3 + $0x260] sm:$0xf]
      %v1069 = vld [vmem:[%s3 + $0x264] sm:$0xf]
      %v1070 = vld [vmem:[%s3 + $0x268] sm:$0xf]
      %v1071 = vld [vmem:[%s3 + $0x26c] sm:$0xf]
      %v1072 = vld [vmem:[%s3 + $0x270] sm:$0xf]
      %v1073 = vld [vmem:[%s3 + $0x274] sm:$0xf]
      %v1074 = vld [vmem:[%s3 + $0x278] sm:$0xf]
      %v1075 = vld [vmem:[%s3 + $0x27c] sm:$0xf]
      %v1076 = vld [vmem:[%s3 + $0x280] sm:$0xf]
      %v1077 = vld [vmem:[%s3 + $0x284] sm:$0xf]
      %v1078 = vld [vmem:[%s3 + $0x288] sm:$0xf]
      %v1079 = vld [vmem:[%s3 + $0x28c] sm:$0xf]
      %v1080 = vld [vmem:[%s3 + $0x290] sm:$0xf]
      %v1081 = vld [vmem:[%s3 + $0x294] sm:$0xf]
      %v1082 = vld [vmem:[%s3 + $0x298] sm:$0xf]
      %v1083 = vld [vmem:[%s3 + $0x29c] sm:$0xf]
      %v1084 = vld [vmem:[%s3 + $0x2a0] sm:$0xf]
      %v1085 = vld [vmem:[%s3 + $0x2a4] sm:$0xf]
      %v1086 = vld [vmem:[%s3 + $0x2a8] sm:$0xf]
      %v1087 = vld [vmem:[%s3 + $0x2ac] sm:$0xf]
      %v1088 = vld [vmem:[%s3 + $0x2b0] sm:$0xf]
      %v1089 = vld [vmem:[%s3 + $0x2b4] sm:$0xf]
      %v1090 = vld [vmem:[%s3 + $0x2b8] sm:$0xf]
      %v1091 = vld [vmem:[%s3 + $0x2bc] sm:$0xf]
      %v1092 = vld [vmem:[%s3 + $0x2c0] sm:$0xf]
      %v1093 = vld [vmem:[%s3 + $0x2c4] sm:$0xf]
      %v1094 = vld [vmem:[%s3 + $0x2c8] sm:$0xf]
      %v1095 = vld [vmem:[%s3 + $0x2cc] sm:$0xf]
      %v1096 = vld [vmem:[%s3 + $0x2d0] sm:$0xf]
      %v1097 = vld [vmem:[%s3 + $0x2d4] sm:$0xf]
      %v1098 = vld [vmem:[%s3 + $0x2d8] sm:$0xf]
      %v1099 = vld [vmem:[%s3 + $0x2dc] sm:$0xf]
      %v1100 = vld [vmem:[%s3 + $0x2e0] sm:$0xf]
      %v1101 = vld [vmem:[%s3 + $0x2e4] sm:$0xf]
      %v1102 = vld [vmem:[%s3 + $0x2e8] sm:$0xf]
      %v1103 = vld [vmem:[%s3 + $0x2ec] sm:$0xf]
      %v1104 = vld [vmem:[%s3 + $0x2f0] sm:$0xf]
      %v1105 = vld [vmem:[%s3 + $0x2f4] sm:$0xf]
      %v1106 = vld [vmem:[%s3 + $0x2f8] sm:$0xf]
      %v1107 = vld [vmem:[%s3 + $0x2fc] sm:$0xf]
      %v1108 = vld [vmem:[%s3 + $0x300] sm:$0xf]
      %v1109 = vld [vmem:[%s3 + $0x304] sm:$0xf]
      %v1110 = vld [vmem:[%s3 + $0x308] sm:$0xf]
      %v1111 = vld [vmem:[%s3 + $0x30c] sm:$0xf]
      %v1112 = vld [vmem:[%s3 + $0x310] sm:$0xf]
      %v1113 = vld [vmem:[%s3 + $0x314] sm:$0xf]
      %v1114 = vld [vmem:[%s3 + $0x318] sm:$0xf]
      %v1115 = vld [vmem:[%s3 + $0x31c] sm:$0xf]
      %v1116 = vld [vmem:[%s3 + $0x320] sm:$0xf]
      %v1117 = vld [vmem:[%s3 + $0x324] sm:$0xf]
      %v1118 = vld [vmem:[%s3 + $0x328] sm:$0xf]
      %v1119 = vld [vmem:[%s3 + $0x32c] sm:$0xf]
      %v1120 = vld [vmem:[%s3 + $0x330] sm:$0xf]
      %v1121 = vld [vmem:[%s3 + $0x334] sm:$0xf]
      %v1122 = vld [vmem:[%s3 + $0x338] sm:$0xf]
      %v1123 = vld [vmem:[%s3 + $0x33c] sm:$0xf]
      %v1124 = vld [vmem:[%s3 + $0x340] sm:$0xf]
      %v1125 = vld [vmem:[%s3 + $0x344] sm:$0xf]
      %v1126 = vld [vmem:[%s3 + $0x348] sm:$0xf]
      %v1127 = vld [vmem:[%s3 + $0x34c] sm:$0xf]
      %v1128 = vld [vmem:[%s3 + $0x350] sm:$0xf]
      %v1129 = vld [vmem:[%s3 + $0x354] sm:$0xf]
      %v1130 = vld [vmem:[%s3 + $0x358] sm:$0xf]
      %v1131 = vld [vmem:[%s3 + $0x35c] sm:$0xf]
      %v1132 = vld [vmem:[%s3 + $0x360] sm:$0xf]
      %v1133 = vld [vmem:[%s3 + $0x364] sm:$0xf]
      %v1134 = vld [vmem:[%s3 + $0x368] sm:$0xf]
      %v1135 = vld [vmem:[%s3 + $0x36c] sm:$0xf]
      %v1136 = vld [vmem:[%s3 + $0x370] sm:$0xf]
      %v1137 = vld [vmem:[%s3 + $0x374] sm:$0xf]
      %v1138 = vld [vmem:[%s3 + $0x378] sm:$0xf]
      %v1139 = vld [vmem:[%s3 + $0x37c] sm:$0xf]
      %v1140 = vld [vmem:[%s3 + $0x380] sm:$0xf]
      %v1141 = vld [vmem:[%s3 + $0x384] sm:$0xf]
      %v1142 = vld [vmem:[%s3 + $0x388] sm:$0xf]
      %v1143 = vld [vmem:[%s3 + $0x38c] sm:$0xf]
      %v1144 = vld [vmem:[%s3 + $0x390] sm:$0xf]
      %v1145 = vld [vmem:[%s3 + $0x394] sm:$0xf]
      %v1146 = vld [vmem:[%s3 + $0x398] sm:$0xf]
      %v1147 = vld [vmem:[%s3 + $0x39c] sm:$0xf]
      %v1148 = vld [vmem:[%s3 + $0x3a0] sm:$0xf]
      %v1149 = vld [vmem:[%s3 + $0x3a4] sm:$0xf]
      %v1150 = vld [vmem:[%s3 + $0x3a8] sm:$0xf]
      %v1151 = vld [vmem:[%s3 + $0x3ac] sm:$0xf]
      %v1152 = vld [vmem:[%s3 + $0x3b0] sm:$0xf]
      %v1153 = vld [vmem:[%s3 + $0x3b4] sm:$0xf]
      %v1154 = vld [vmem:[%s3 + $0x3b8] sm:$0xf]
      %v1155 = vld [vmem:[%s3 + $0x3bc] sm:$0xf]
      %v1156 = vld [vmem:[%s3 + $0x3c0] sm:$0xf]
      %v1157 = vld [vmem:[%s3 + $0x3c4] sm:$0xf]
      %v1158 = vld [vmem:[%s3 + $0x3c8] sm:$0xf]
      %v1159 = vld [vmem:[%s3 + $0x3cc] sm:$0xf]
      %v1160 = vld [vmem:[%s3 + $0x3d0] sm:$0xf]
      %v1161 = vld [vmem:[%s3 + $0x3d4] sm:$0xf]
      %v1162 = vld [vmem:[%s3 + $0x3d8] sm:$0xf]
      %v1163 = vld [vmem:[%s3 + $0x3dc] sm:$0xf]
      %v1164 = vld [vmem:[%s3 + $0x3e0] sm:$0xf]
      %v1165 = vld [vmem:[%s3 + $0x3e4] sm:$0xf]
      %v1166 = vld [vmem:[%s3 + $0x3e8] sm:$0xf]
      %v1167 = vld [vmem:[%s3 + $0x3ec] sm:$0xf]
      %v1168 = vld [vmem:[%s3 + $0x3f0] sm:$0xf]
      %v1169 = vld [vmem:[%s3 + $0x3f4] sm:$0xf]
      %v1170 = vld [vmem:[%s3 + $0x3f8] sm:$0xf]
      %v1171 = vld [vmem:[%s3 + $0x3fc] sm:$0xf]
      %v1172 = vld [vmem:[%s4] sm:$0x1]
      %v1174 = vlaneseq
      %v1175 = vshrl.u32 %v1174, 7
      %v1176 = vsub.s32 0, %v1175
      %v1177 = vrot.slane %v1172, %v1176
      %v1435 = vunpack.c.l.b16 %v916
      %v1436 = vunpack.c.l.b16 %v917
      %v1437 = vunpack.c.l.b16 %v918
      %v1438 = vunpack.c.l.b16 %v919
      %v1439 = vunpack.c.l.b16 %v920
      %v1440 = vunpack.c.l.b16 %v921
      %v1441 = vunpack.c.l.b16 %v922
      %v1442 = vunpack.c.l.b16 %v923
      %v1443 = vunpack.c.l.b16 %v924
      %v1444 = vunpack.c.l.b16 %v925
      %v1445 = vunpack.c.l.b16 %v926
      %v1446 = vunpack.c.l.b16 %v927
      %v1447 = vunpack.c.l.b16 %v928
      %v1448 = vunpack.c.l.b16 %v929
      %v1449 = vunpack.c.l.b16 %v930
      %v1450 = vunpack.c.l.b16 %v931
      %v1451 = vunpack.c.l.b16 %v932
      %v1452 = vunpack.c.l.b16 %v933
      %v1453 = vunpack.c.l.b16 %v934
      %v1454 = vunpack.c.l.b16 %v935
      %v1455 = vunpack.c.l.b16 %v936
      %v1456 = vunpack.c.l.b16 %v937
      %v1457 = vunpack.c.l.b16 %v938
      %v1458 = vunpack.c.l.b16 %v939
      %v1459 = vunpack.c.l.b16 %v940
      %v1460 = vunpack.c.l.b16 %v941
      %v1461 = vunpack.c.l.b16 %v942
      %v1462 = vunpack.c.l.b16 %v943
      %v1463 = vunpack.c.l.b16 %v944
      %v1464 = vunpack.c.l.b16 %v945
      %v1465 = vunpack.c.l.b16 %v946
      %v1466 = vunpack.c.l.b16 %v947
      %v1467 = vunpack.c.l.b16 %v948
      %v1468 = vunpack.c.l.b16 %v949
      %v1469 = vunpack.c.l.b16 %v950
      %v1470 = vunpack.c.l.b16 %v951
      %v1471 = vunpack.c.l.b16 %v952
      %v1472 = vunpack.c.l.b16 %v953
      %v1473 = vunpack.c.l.b16 %v954
      %v1474 = vunpack.c.l.b16 %v955
      %v1475 = vunpack.c.l.b16 %v956
      %v1476 = vunpack.c.l.b16 %v957
      %v1477 = vunpack.c.l.b16 %v958
      %v1478 = vunpack.c.l.b16 %v959
      %v1479 = vunpack.c.l.b16 %v960
      %v1480 = vunpack.c.l.b16 %v961
      %v1481 = vunpack.c.l.b16 %v962
      %v1482 = vunpack.c.l.b16 %v963
      %v1483 = vunpack.c.l.b16 %v964
      %v1484 = vunpack.c.l.b16 %v965
      %v1485 = vunpack.c.l.b16 %v966
      %v1486 = vunpack.c.l.b16 %v967
      %v1487 = vunpack.c.l.b16 %v968
      %v1488 = vunpack.c.l.b16 %v969
      %v1489 = vunpack.c.l.b16 %v970
      %v1490 = vunpack.c.l.b16 %v971
      %v1491 = vunpack.c.l.b16 %v972
      %v1492 = vunpack.c.l.b16 %v973
      %v1493 = vunpack.c.l.b16 %v974
      %v1494 = vunpack.c.l.b16 %v975
      %v1495 = vunpack.c.l.b16 %v976
      %v1496 = vunpack.c.l.b16 %v977
      %v1497 = vunpack.c.l.b16 %v978
      %v1498 = vunpack.c.l.b16 %v979
      %v1499 = vunpack.c.l.b16 %v980
      %v1500 = vunpack.c.l.b16 %v981
      %v1501 = vunpack.c.l.b16 %v982
      %v1502 = vunpack.c.l.b16 %v983
      %v1503 = vunpack.c.l.b16 %v984
      %v1504 = vunpack.c.l.b16 %v985
      %v1505 = vunpack.c.l.b16 %v986
      %v1506 = vunpack.c.l.b16 %v987
      %v1507 = vunpack.c.l.b16 %v988
      %v1508 = vunpack.c.l.b16 %v989
      %v1509 = vunpack.c.l.b16 %v990
      %v1510 = vunpack.c.l.b16 %v991
      %v1511 = vunpack.c.l.b16 %v992
      %v1512 = vunpack.c.l.b16 %v993
      %v1513 = vunpack.c.l.b16 %v994
      %v1514 = vunpack.c.l.b16 %v995
      %v1515 = vunpack.c.l.b16 %v996
      %v1516 = vunpack.c.l.b16 %v997
      %v1517 = vunpack.c.l.b16 %v998
      %v1518 = vunpack.c.l.b16 %v999
      %v1519 = vunpack.c.l.b16 %v1000
      %v1520 = vunpack.c.l.b16 %v1001
      %v1521 = vunpack.c.l.b16 %v1002
      %v1522 = vunpack.c.l.b16 %v1003
      %v1523 = vunpack.c.l.b16 %v1004
      %v1524 = vunpack.c.l.b16 %v1005
      %v1525 = vunpack.c.l.b16 %v1006
      %v1526 = vunpack.c.l.b16 %v1007
      %v1527 = vunpack.c.l.b16 %v1008
      %v1528 = vunpack.c.l.b16 %v1009
      %v1529 = vunpack.c.l.b16 %v1010
      %v1530 = vunpack.c.l.b16 %v1011
      %v1531 = vunpack.c.l.b16 %v1012
      %v1532 = vunpack.c.l.b16 %v1013
      %v1533 = vunpack.c.l.b16 %v1014
      %v1534 = vunpack.c.l.b16 %v1015
      %v1535 = vunpack.c.l.b16 %v1016
      %v1536 = vunpack.c.l.b16 %v1017
      %v1537 = vunpack.c.l.b16 %v1018
      %v1538 = vunpack.c.l.b16 %v1019
      %v1539 = vunpack.c.l.b16 %v1020
      %v1540 = vunpack.c.l.b16 %v1021
      %v1541 = vunpack.c.l.b16 %v1022
      %v1542 = vunpack.c.l.b16 %v1023
      %v1543 = vunpack.c.l.b16 %v1024
      %v1544 = vunpack.c.l.b16 %v1025
      %v1545 = vunpack.c.l.b16 %v1026
      %v1546 = vunpack.c.l.b16 %v1027
      %v1547 = vunpack.c.l.b16 %v1028
      %v1548 = vunpack.c.l.b16 %v1029
      %v1549 = vunpack.c.l.b16 %v1030
      %v1550 = vunpack.c.l.b16 %v1031
      %v1551 = vunpack.c.l.b16 %v1032
      %v1552 = vunpack.c.l.b16 %v1033
      %v1553 = vunpack.c.l.b16 %v1034
      %v1554 = vunpack.c.l.b16 %v1035
      %v1555 = vunpack.c.l.b16 %v1036
      %v1556 = vunpack.c.l.b16 %v1037
      %v1557 = vunpack.c.l.b16 %v1038
      %v1558 = vunpack.c.l.b16 %v1039
      %v1559 = vunpack.c.l.b16 %v1040
      %v1560 = vunpack.c.l.b16 %v1041
      %v1561 = vunpack.c.l.b16 %v1042
      %v1562 = vunpack.c.l.b16 %v1043
      %v1563 = vunpack.c.l.b16 %v1044
      %v1564 = vunpack.c.l.b16 %v1045
      %v1565 = vunpack.c.l.b16 %v1046
      %v1566 = vunpack.c.l.b16 %v1047
      %v1567 = vunpack.c.l.b16 %v1048
      %v1568 = vunpack.c.l.b16 %v1049
      %v1569 = vunpack.c.l.b16 %v1050
      %v1570 = vunpack.c.l.b16 %v1051
      %v1571 = vunpack.c.l.b16 %v1052
      %v1572 = vunpack.c.l.b16 %v1053
      %v1573 = vunpack.c.l.b16 %v1054
      %v1574 = vunpack.c.l.b16 %v1055
      %v1575 = vunpack.c.l.b16 %v1056
      %v1576 = vunpack.c.l.b16 %v1057
      %v1577 = vunpack.c.l.b16 %v1058
      %v1578 = vunpack.c.l.b16 %v1059
      %v1579 = vunpack.c.l.b16 %v1060
      %v1580 = vunpack.c.l.b16 %v1061
      %v1581 = vunpack.c.l.b16 %v1062
      %v1582 = vunpack.c.l.b16 %v1063
      %v1583 = vunpack.c.l.b16 %v1064
      %v1584 = vunpack.c.l.b16 %v1065
      %v1585 = vunpack.c.l.b16 %v1066
      %v1586 = vunpack.c.l.b16 %v1067
      %v1587 = vunpack.c.l.b16 %v1068
      %v1588 = vunpack.c.l.b16 %v1069
      %v1589 = vunpack.c.l.b16 %v1070
      %v1590 = vunpack.c.l.b16 %v1071
      %v1591 = vunpack.c.l.b16 %v1072
      %v1592 = vunpack.c.l.b16 %v1073
      %v1593 = vunpack.c.l.b16 %v1074
      %v1594 = vunpack.c.l.b16 %v1075
      %v1595 = vunpack.c.l.b16 %v1076
      %v1596 = vunpack.c.l.b16 %v1077
      %v1597 = vunpack.c.l.b16 %v1078
      %v1598 = vunpack.c.l.b16 %v1079
      %v1599 = vunpack.c.l.b16 %v1080
      %v1600 = vunpack.c.l.b16 %v1081
      %v1601 = vunpack.c.l.b16 %v1082
      %v1602 = vunpack.c.l.b16 %v1083
      %v1603 = vunpack.c.l.b16 %v1084
      %v1604 = vunpack.c.l.b16 %v1085
      %v1605 = vunpack.c.l.b16 %v1086
      %v1606 = vunpack.c.l.b16 %v1087
      %v1607 = vunpack.c.l.b16 %v1088
      %v1608 = vunpack.c.l.b16 %v1089
      %v1609 = vunpack.c.l.b16 %v1090
      %v1610 = vunpack.c.l.b16 %v1091
      %v1611 = vunpack.c.l.b16 %v1092
      %v1612 = vunpack.c.l.b16 %v1093
      %v1613 = vunpack.c.l.b16 %v1094
      %v1614 = vunpack.c.l.b16 %v1095
      %v1615 = vunpack.c.l.b16 %v1096
      %v1616 = vunpack.c.l.b16 %v1097
      %v1617 = vunpack.c.l.b16 %v1098
      %v1618 = vunpack.c.l.b16 %v1099
      %v1619 = vunpack.c.l.b16 %v1100
      %v1620 = vunpack.c.l.b16 %v1101
      %v1621 = vunpack.c.l.b16 %v1102
      %v1622 = vunpack.c.l.b16 %v1103
      %v1623 = vunpack.c.l.b16 %v1104
      %v1624 = vunpack.c.l.b16 %v1105
      %v1625 = vunpack.c.l.b16 %v1106
      %v1626 = vunpack.c.l.b16 %v1107
      %v1627 = vunpack.c.l.b16 %v1108
      %v1628 = vunpack.c.l.b16 %v1109
      %v1629 = vunpack.c.l.b16 %v1110
      %v1630 = vunpack.c.l.b16 %v1111
      %v1631 = vunpack.c.l.b16 %v1112
      %v1632 = vunpack.c.l.b16 %v1113
      %v1633 = vunpack.c.l.b16 %v1114
      %v1634 = vunpack.c.l.b16 %v1115
      %v1635 = vunpack.c.l.b16 %v1116
      %v1636 = vunpack.c.l.b16 %v1117
      %v1637 = vunpack.c.l.b16 %v1118
      %v1638 = vunpack.c.l.b16 %v1119
      %v1639 = vunpack.c.l.b16 %v1120
      %v1640 = vunpack.c.l.b16 %v1121
      %v1641 = vunpack.c.l.b16 %v1122
      %v1642 = vunpack.c.l.b16 %v1123
      %v1643 = vunpack.c.l.b16 %v1124
      %v1644 = vunpack.c.l.b16 %v1125
      %v1645 = vunpack.c.l.b16 %v1126
      %v1646 = vunpack.c.l.b16 %v1127
      %v1647 = vunpack.c.l.b16 %v1128
      %v1648 = vunpack.c.l.b16 %v1129
      %v1649 = vunpack.c.l.b16 %v1130
      %v1650 = vunpack.c.l.b16 %v1131
      %v1651 = vunpack.c.l.b16 %v1132
      %v1652 = vunpack.c.l.b16 %v1133
      %v1653 = vunpack.c.l.b16 %v1134
      %v1654 = vunpack.c.l.b16 %v1135
      %v1655 = vunpack.c.l.b16 %v1136
      %v1656 = vunpack.c.l.b16 %v1137
      %v1657 = vunpack.c.l.b16 %v1138
      %v1658 = vunpack.c.l.b16 %v1139
      %v1659 = vunpack.c.l.b16 %v1140
      %v1660 = vunpack.c.l.b16 %v1141
      %v1661 = vunpack.c.l.b16 %v1142
      %v1662 = vunpack.c.l.b16 %v1143
      %v1663 = vunpack.c.l.b16 %v1144
      %v1664 = vunpack.c.l.b16 %v1145
      %v1665 = vunpack.c.l.b16 %v1146
      %v1666 = vunpack.c.l.b16 %v1147
      %v1667 = vunpack.c.l.b16 %v1148
      %v1668 = vunpack.c.l.b16 %v1149
      %v1669 = vunpack.c.l.b16 %v1150
      %v1670 = vunpack.c.l.b16 %v1151
      %v1671 = vunpack.c.l.b16 %v1152
      %v1672 = vunpack.c.l.b16 %v1153
      %v1673 = vunpack.c.l.b16 %v1154
      %v1674 = vunpack.c.l.b16 %v1155
      %v1675 = vunpack.c.l.b16 %v1156
      %v1676 = vunpack.c.l.b16 %v1157
      %v1677 = vunpack.c.l.b16 %v1158
      %v1678 = vunpack.c.l.b16 %v1159
      %v1679 = vunpack.c.l.b16 %v1160
      %v1680 = vunpack.c.l.b16 %v1161
      %v1681 = vunpack.c.l.b16 %v1162
      %v1682 = vunpack.c.l.b16 %v1163
      %v1683 = vunpack.c.l.b16 %v1164
      %v1684 = vunpack.c.l.b16 %v1165
      %v1685 = vunpack.c.l.b16 %v1166
      %v1686 = vunpack.c.l.b16 %v1167
      %v1687 = vunpack.c.l.b16 %v1168
      %v1688 = vunpack.c.l.b16 %v1169
      %v1689 = vunpack.c.l.b16 %v1170
      %v1690 = vunpack.c.l.b16 %v1171
      %v1691 = vpack.c.b16 %v1436, %v1435
      %v1692 = vpack.c.b16 %v1438, %v1437
      %v1693 = vpack.c.b16 %v1440, %v1439
      %v1694 = vpack.c.b16 %v1442, %v1441
      %v1695 = vpack.c.b16 %v1444, %v1443
      %v1696 = vpack.c.b16 %v1446, %v1445
      %v1697 = vpack.c.b16 %v1448, %v1447
      %v1698 = vpack.c.b16 %v1450, %v1449
      %v1699 = vpack.c.b16 %v1452, %v1451
      %v1700 = vpack.c.b16 %v1454, %v1453
      %v1701 = vpack.c.b16 %v1456, %v1455
      %v1702 = vpack.c.b16 %v1458, %v1457
      %v1703 = vpack.c.b16 %v1460, %v1459
      %v1704 = vpack.c.b16 %v1462, %v1461
      %v1705 = vpack.c.b16 %v1464, %v1463
      %v1706 = vpack.c.b16 %v1466, %v1465
      %v1707 = vpack.c.b16 %v1468, %v1467
      %v1708 = vpack.c.b16 %v1470, %v1469
      %v1709 = vpack.c.b16 %v1472, %v1471
      %v1710 = vpack.c.b16 %v1474, %v1473
      %v1711 = vpack.c.b16 %v1476, %v1475
      %v1712 = vpack.c.b16 %v1478, %v1477
      %v1713 = vpack.c.b16 %v1480, %v1479
      %v1714 = vpack.c.b16 %v1482, %v1481
      %v1715 = vpack.c.b16 %v1484, %v1483
      %v1716 = vpack.c.b16 %v1486, %v1485
      %v1717 = vpack.c.b16 %v1488, %v1487
      %v1718 = vpack.c.b16 %v1490, %v1489
      %v1719 = vpack.c.b16 %v1492, %v1491
      %v1720 = vpack.c.b16 %v1494, %v1493
      %v1721 = vpack.c.b16 %v1496, %v1495
      %v1722 = vpack.c.b16 %v1498, %v1497
      %v1723 = vpack.c.b16 %v1500, %v1499
      %v1724 = vpack.c.b16 %v1502, %v1501
      %v1725 = vpack.c.b16 %v1504, %v1503
      %v1726 = vpack.c.b16 %v1506, %v1505
      %v1727 = vpack.c.b16 %v1508, %v1507
      %v1728 = vpack.c.b16 %v1510, %v1509
      %v1729 = vpack.c.b16 %v1512, %v1511
      %v1730 = vpack.c.b16 %v1514, %v1513
      %v1731 = vpack.c.b16 %v1516, %v1515
      %v1732 = vpack.c.b16 %v1518, %v1517
      %v1733 = vpack.c.b16 %v1520, %v1519
      %v1734 = vpack.c.b16 %v1522, %v1521
      %v1735 = vpack.c.b16 %v1524, %v1523
      %v1736 = vpack.c.b16 %v1526, %v1525
      %v1737 = vpack.c.b16 %v1528, %v1527
      %v1738 = vpack.c.b16 %v1530, %v1529
      %v1739 = vpack.c.b16 %v1532, %v1531
      %v1740 = vpack.c.b16 %v1534, %v1533
      %v1741 = vpack.c.b16 %v1536, %v1535
      %v1742 = vpack.c.b16 %v1538, %v1537
      %v1743 = vpack.c.b16 %v1540, %v1539
      %v1744 = vpack.c.b16 %v1542, %v1541
      %v1745 = vpack.c.b16 %v1544, %v1543
      %v1746 = vpack.c.b16 %v1546, %v1545
      %v1747 = vpack.c.b16 %v1548, %v1547
      %v1748 = vpack.c.b16 %v1550, %v1549
      %v1749 = vpack.c.b16 %v1552, %v1551
      %v1750 = vpack.c.b16 %v1554, %v1553
      %v1751 = vpack.c.b16 %v1556, %v1555
      %v1752 = vpack.c.b16 %v1558, %v1557
      %v1753 = vpack.c.b16 %v1560, %v1559
      %v1754 = vpack.c.b16 %v1562, %v1561
      %v1755 = vpack.c.b16 %v1564, %v1563
      %v1756 = vpack.c.b16 %v1566, %v1565
      %v1757 = vpack.c.b16 %v1568, %v1567
      %v1758 = vpack.c.b16 %v1570, %v1569
      %v1759 = vpack.c.b16 %v1572, %v1571
      %v1760 = vpack.c.b16 %v1574, %v1573
      %v1761 = vpack.c.b16 %v1576, %v1575
      %v1762 = vpack.c.b16 %v1578, %v1577
      %v1763 = vpack.c.b16 %v1580, %v1579
      %v1764 = vpack.c.b16 %v1582, %v1581
      %v1765 = vpack.c.b16 %v1584, %v1583
      %v1766 = vpack.c.b16 %v1586, %v1585
      %v1767 = vpack.c.b16 %v1588, %v1587
      %v1768 = vpack.c.b16 %v1590, %v1589
      %v1769 = vpack.c.b16 %v1592, %v1591
      %v1770 = vpack.c.b16 %v1594, %v1593
      %v1771 = vpack.c.b16 %v1596, %v1595
      %v1772 = vpack.c.b16 %v1598, %v1597
      %v1773 = vpack.c.b16 %v1600, %v1599
      %v1774 = vpack.c.b16 %v1602, %v1601
      %v1775 = vpack.c.b16 %v1604, %v1603
      %v1776 = vpack.c.b16 %v1606, %v1605
      %v1777 = vpack.c.b16 %v1608, %v1607
      %v1778 = vpack.c.b16 %v1610, %v1609
      %v1779 = vpack.c.b16 %v1612, %v1611
      %v1780 = vpack.c.b16 %v1614, %v1613
      %v1781 = vpack.c.b16 %v1616, %v1615
      %v1782 = vpack.c.b16 %v1618, %v1617
      %v1783 = vpack.c.b16 %v1620, %v1619
      %v1784 = vpack.c.b16 %v1622, %v1621
      %v1785 = vpack.c.b16 %v1624, %v1623
      %v1786 = vpack.c.b16 %v1626, %v1625
      %v1787 = vpack.c.b16 %v1628, %v1627
      %v1788 = vpack.c.b16 %v1630, %v1629
      %v1789 = vpack.c.b16 %v1632, %v1631
      %v1790 = vpack.c.b16 %v1634, %v1633
      %v1791 = vpack.c.b16 %v1636, %v1635
      %v1792 = vpack.c.b16 %v1638, %v1637
      %v1793 = vpack.c.b16 %v1640, %v1639
      %v1794 = vpack.c.b16 %v1642, %v1641
      %v1795 = vpack.c.b16 %v1644, %v1643
      %v1796 = vpack.c.b16 %v1646, %v1645
      %v1797 = vpack.c.b16 %v1648, %v1647
      %v1798 = vpack.c.b16 %v1650, %v1649
      %v1799 = vpack.c.b16 %v1652, %v1651
      %v1800 = vpack.c.b16 %v1654, %v1653
      %v1801 = vpack.c.b16 %v1656, %v1655
      %v1802 = vpack.c.b16 %v1658, %v1657
      %v1803 = vpack.c.b16 %v1660, %v1659
      %v1804 = vpack.c.b16 %v1662, %v1661
      %v1805 = vpack.c.b16 %v1664, %v1663
      %v1806 = vpack.c.b16 %v1666, %v1665
      %v1807 = vpack.c.b16 %v1668, %v1667
      %v1808 = vpack.c.b16 %v1670, %v1669
      %v1809 = vpack.c.b16 %v1672, %v1671
      %v1810 = vpack.c.b16 %v1674, %v1673
      %v1811 = vpack.c.b16 %v1676, %v1675
      %v1812 = vpack.c.b16 %v1678, %v1677
      %v1813 = vpack.c.b16 %v1680, %v1679
      %v1814 = vpack.c.b16 %v1682, %v1681
      %v1815 = vpack.c.b16 %v1684, %v1683
      %v1816 = vpack.c.b16 %v1686, %v1685
      %v1817 = vpack.c.b16 %v1688, %v1687
      %v1818 = vpack.c.b16 %v1690, %v1689
      %1947 = vmatprep.subr.bf16.mxu0 0
      %1948 = vmatpush1.bf16.msra.mxu0 %v1698
      %1949 = vmatprep.subr.bf16.mxu0 0
      %1950 = vmatpush1.bf16.msra.mxu0 %v1697
      %1951 = vmatprep.subr.bf16.mxu0 0
      %1952 = vmatpush1.bf16.msra.mxu0 %v1696
      %1953 = vmatprep.subr.bf16.mxu0 0
      %1954 = vmatpush1.bf16.msra.mxu0 %v1695
      %1955 = vmatprep.subr.bf16.mxu0 0
      %1956 = vmatpush1.bf16.msra.mxu0 %v1694
      %1957 = vmatprep.subr.bf16.mxu0 0
      %1958 = vmatpush1.bf16.msra.mxu0 %v1693
      %1959 = vmatprep.subr.bf16.mxu0 0
      %1960 = vmatpush1.bf16.msra.mxu0 %v1692
      %1961 = vmatprep.subr.bf16.mxu0 0
      %1962 = vmatpush1.bf16.msra.mxu0 %v1691
      %1963 = vmatprep.subr.bf16.mxu0 0
      %1964 = vmatpush2.bf16.msra.mxu0 %v1706
      %1965 = vmatprep.subr.bf16.mxu0 0
      %1966 = vmatpush2.bf16.msra.mxu0 %v1705
      %1967 = vmatprep.subr.bf16.mxu0 0
      %1968 = vmatpush2.bf16.msra.mxu0 %v1704
      %1969 = vmatprep.subr.bf16.mxu0 0
      %1970 = vmatpush2.bf16.msra.mxu0 %v1703
      %1971 = vmatprep.subr.bf16.mxu0 0
      %1972 = vmatpush2.bf16.msra.mxu0 %v1702
      %1973 = vmatprep.subr.bf16.mxu0 0
      %1974 = vmatpush2.bf16.msra.mxu0 %v1701
      %1975 = vmatprep.subr.bf16.mxu0 0
      %1976 = vmatpush2.bf16.msra.mxu0 %v1700
      %1977 = vmatprep.subr.bf16.mxu0 0
      %1978 = vmatpush2.bf16.msra.mxu0 %v1699
      %1979 = vmatprep.mubr.bf16.mxu0 %v901
      %1980 = vmatmul.mubr.bf16.gmra.mxu0 %v900
      %v1981 = vpop.f32.mrf.mxu0
      %v1982 = vadd.f32 %v1177, %v1981
      %v1983 = vpop.f32.mrf.mxu0
      %v1984 = vpop.f32.mrf.mxu0
      %v1985 = vpop.f32.mrf.mxu0
      %1986 = vdwg.mxu0
      %1987 = vmatprep.subr.bf16.mxu0 0
      %1988 = vmatpush1.bf16.msra.mxu0 %v1714
      %1989 = vmatprep.subr.bf16.mxu0 0
      %1990 = vmatpush1.bf16.msra.mxu0 %v1713
      %1991 = vmatprep.subr.bf16.mxu0 0
      %1992 = vmatpush1.bf16.msra.mxu0 %v1712
      %1993 = vmatprep.subr.bf16.mxu0 0
      %1994 = vmatpush1.bf16.msra.mxu0 %v1711
      %1995 = vmatprep.subr.bf16.mxu0 0
      %1996 = vmatpush1.bf16.msra.mxu0 %v1710
      %1997 = vmatprep.subr.bf16.mxu0 0
      %1998 = vmatpush1.bf16.msra.mxu0 %v1709
      %1999 = vmatprep.subr.bf16.mxu0 0
      %2000 = vmatpush1.bf16.msra.mxu0 %v1708
      %2001 = vmatprep.subr.bf16.mxu0 0
      %2002 = vmatpush1.bf16.msra.mxu0 %v1707
      %2003 = vmatprep.subr.bf16.mxu0 0
      %2004 = vmatpush2.bf16.msra.mxu0 %v1722
      %2005 = vmatprep.subr.bf16.mxu0 0
      %2006 = vmatpush2.bf16.msra.mxu0 %v1721
      %2007 = vmatprep.subr.bf16.mxu0 0
      %2008 = vmatpush2.bf16.msra.mxu0 %v1720
      %2009 = vmatprep.subr.bf16.mxu0 0
      %2010 = vmatpush2.bf16.msra.mxu0 %v1719
      %2011 = vmatprep.subr.bf16.mxu0 0
      %2012 = vmatpush2.bf16.msra.mxu0 %v1718
      %2013 = vmatprep.subr.bf16.mxu0 0
      %2014 = vmatpush2.bf16.msra.mxu0 %v1717
      %2015 = vmatprep.subr.bf16.mxu0 0
      %2016 = vmatpush2.bf16.msra.mxu0 %v1716
      %2017 = vmatprep.subr.bf16.mxu0 0
      %2018 = vmatpush2.bf16.msra.mxu0 %v1715
      %2019 = vmatprep.mubr.bf16.mxu0 %v903
      %2020 = vmatmul.mubr.bf16.gmra.mxu0 %v902
      %v2021 = vpop.f32.mrf.mxu0
      %v2022 = vadd.f32 %v1982, %v2021
      %v2023 = vpop.f32.mrf.mxu0
      %v2024 = vpop.f32.mrf.mxu0
      %v2025 = vpop.f32.mrf.mxu0
      %2026 = vdwg.mxu0
      %2027 = vmatprep.subr.bf16.mxu0 0
      %2028 = vmatpush1.bf16.msra.mxu0 %v1730
      %2029 = vmatprep.subr.bf16.mxu0 0
      %2030 = vmatpush1.bf16.msra.mxu0 %v1729
      %2031 = vmatprep.subr.bf16.mxu0 0
      %2032 = vmatpush1.bf16.msra.mxu0 %v1728
      %2033 = vmatprep.subr.bf16.mxu0 0
      %2034 = vmatpush1.bf16.msra.mxu0 %v1727
      %2035 = vmatprep.subr.bf16.mxu0 0
      %2036 = vmatpush1.bf16.msra.mxu0 %v1726
      %2037 = vmatprep.subr.bf16.mxu0 0
      %2038 = vmatpush1.bf16.msra.mxu0 %v1725
      %2039 = vmatprep.subr.bf16.mxu0 0
      %2040 = vmatpush1.bf16.msra.mxu0 %v1724
      %2041 = vmatprep.subr.bf16.mxu0 0
      %2042 = vmatpush1.bf16.msra.mxu0 %v1723
      %2043 = vmatprep.subr.bf16.mxu0 0
      %2044 = vmatpush2.bf16.msra.mxu0 %v1738
      %2045 = vmatprep.subr.bf16.mxu0 0
      %2046 = vmatpush2.bf16.msra.mxu0 %v1737
      %2047 = vmatprep.subr.bf16.mxu0 0
      %2048 = vmatpush2.bf16.msra.mxu0 %v1736
      %2049 = vmatprep.subr.bf16.mxu0 0
      %2050 = vmatpush2.bf16.msra.mxu0 %v1735
      %2051 = vmatprep.subr.bf16.mxu0 0
      %2052 = vmatpush2.bf16.msra.mxu0 %v1734
      %2053 = vmatprep.subr.bf16.mxu0 0
      %2054 = vmatpush2.bf16.msra.mxu0 %v1733
      %2055 = vmatprep.subr.bf16.mxu0 0
      %2056 = vmatpush2.bf16.msra.mxu0 %v1732
      %2057 = vmatprep.subr.bf16.mxu0 0
      %2058 = vmatpush2.bf16.msra.mxu0 %v1731
      %2059 = vmatprep.mubr.bf16.mxu0 %v905
      %2060 = vmatmul.mubr.bf16.gmra.mxu0 %v904
      %v2061 = vpop.f32.mrf.mxu0
      %v2062 = vadd.f32 %v2022, %v2061
      %v2063 = vpop.f32.mrf.mxu0
      %v2064 = vpop.f32.mrf.mxu0
      %v2065 = vpop.f32.mrf.mxu0
      %2066 = vdwg.mxu0
      %2067 = vmatprep.subr.bf16.mxu0 0
      %2068 = vmatpush1.bf16.msra.mxu0 %v1746
      %2069 = vmatprep.subr.bf16.mxu0 0
      %2070 = vmatpush1.bf16.msra.mxu0 %v1745
      %2071 = vmatprep.subr.bf16.mxu0 0
      %2072 = vmatpush1.bf16.msra.mxu0 %v1744
      %2073 = vmatprep.subr.bf16.mxu0 0
      %2074 = vmatpush1.bf16.msra.mxu0 %v1743
      %2075 = vmatprep.subr.bf16.mxu0 0
      %2076 = vmatpush1.bf16.msra.mxu0 %v1742
      %2077 = vmatprep.subr.bf16.mxu0 0
      %2078 = vmatpush1.bf16.msra.mxu0 %v1741
      %2079 = vmatprep.subr.bf16.mxu0 0
      %2080 = vmatpush1.bf16.msra.mxu0 %v1740
      %2081 = vmatprep.subr.bf16.mxu0 0
      %2082 = vmatpush1.bf16.msra.mxu0 %v1739
      %2083 = vmatprep.subr.bf16.mxu0 0
      %2084 = vmatpush2.bf16.msra.mxu0 %v1754
      %2085 = vmatprep.subr.bf16.mxu0 0
      %2086 = vmatpush2.bf16.msra.mxu0 %v1753
      %2087 = vmatprep.subr.bf16.mxu0 0
      %2088 = vmatpush2.bf16.msra.mxu0 %v1752
      %2089 = vmatprep.subr.bf16.mxu0 0
      %2090 = vmatpush2.bf16.msra.mxu0 %v1751
      %2091 = vmatprep.subr.bf16.mxu0 0
      %2092 = vmatpush2.bf16.msra.mxu0 %v1750
      %2093 = vmatprep.subr.bf16.mxu0 0
      %2094 = vmatpush2.bf16.msra.mxu0 %v1749
      %2095 = vmatprep.subr.bf16.mxu0 0
      %2096 = vmatpush2.bf16.msra.mxu0 %v1748
      %2097 = vmatprep.subr.bf16.mxu0 0
      %2098 = vmatpush2.bf16.msra.mxu0 %v1747
      %2099 = vmatprep.mubr.bf16.mxu0 %v907
      %2100 = vmatmul.mubr.bf16.gmra.mxu0 %v906
      %v2101 = vpop.f32.mrf.mxu0
      %v2102 = vadd.f32 %v2062, %v2101
      %v2103 = vpop.f32.mrf.mxu0
      %v2104 = vpop.f32.mrf.mxu0
      %v2105 = vpop.f32.mrf.mxu0
      %2106 = vdwg.mxu0
      %2107 = vmatprep.subr.bf16.mxu0 0
      %2108 = vmatpush1.bf16.msra.mxu0 %v1762
      %2109 = vmatprep.subr.bf16.mxu0 0
      %2110 = vmatpush1.bf16.msra.mxu0 %v1761
      %2111 = vmatprep.subr.bf16.mxu0 0
      %2112 = vmatpush1.bf16.msra.mxu0 %v1760
      %2113 = vmatprep.subr.bf16.mxu0 0
      %2114 = vmatpush1.bf16.msra.mxu0 %v1759
      %2115 = vmatprep.subr.bf16.mxu0 0
      %2116 = vmatpush1.bf16.msra.mxu0 %v1758
      %2117 = vmatprep.subr.bf16.mxu0 0
      %2118 = vmatpush1.bf16.msra.mxu0 %v1757
      %2119 = vmatprep.subr.bf16.mxu0 0
      %2120 = vmatpush1.bf16.msra.mxu0 %v1756
      %2121 = vmatprep.subr.bf16.mxu0 0
      %2122 = vmatpush1.bf16.msra.mxu0 %v1755
      %2123 = vmatprep.subr.bf16.mxu0 0
      %2124 = vmatpush2.bf16.msra.mxu0 %v1770
      %2125 = vmatprep.subr.bf16.mxu0 0
      %2126 = vmatpush2.bf16.msra.mxu0 %v1769
      %2127 = vmatprep.subr.bf16.mxu0 0
      %2128 = vmatpush2.bf16.msra.mxu0 %v1768
      %2129 = vmatprep.subr.bf16.mxu0 0
      %2130 = vmatpush2.bf16.msra.mxu0 %v1767
      %2131 = vmatprep.subr.bf16.mxu0 0
      %2132 = vmatpush2.bf16.msra.mxu0 %v1766
      %2133 = vmatprep.subr.bf16.mxu0 0
      %2134 = vmatpush2.bf16.msra.mxu0 %v1765
      %2135 = vmatprep.subr.bf16.mxu0 0
      %2136 = vmatpush2.bf16.msra.mxu0 %v1764
      %2137 = vmatprep.subr.bf16.mxu0 0
      %2138 = vmatpush2.bf16.msra.mxu0 %v1763
      %2139 = vmatprep.mubr.bf16.mxu0 %v909
      %2140 = vmatmul.mubr.bf16.gmra.mxu0 %v908
      %v2141 = vpop.f32.mrf.mxu0
      %v2142 = vadd.f32 %v2102, %v2141
      %v2143 = vpop.f32.mrf.mxu0
      %v2144 = vpop.f32.mrf.mxu0
      %v2145 = vpop.f32.mrf.mxu0
      %2146 = vdwg.mxu0
      %2147 = vmatprep.subr.bf16.mxu0 0
      %2148 = vmatpush1.bf16.msra.mxu0 %v1778
      %2149 = vmatprep.subr.bf16.mxu0 0
      %2150 = vmatpush1.bf16.msra.mxu0 %v1777
      %2151 = vmatprep.subr.bf16.mxu0 0
      %2152 = vmatpush1.bf16.msra.mxu0 %v1776
      %2153 = vmatprep.subr.bf16.mxu0 0
      %2154 = vmatpush1.bf16.msra.mxu0 %v1775
      %2155 = vmatprep.subr.bf16.mxu0 0
      %2156 = vmatpush1.bf16.msra.mxu0 %v1774
      %2157 = vmatprep.subr.bf16.mxu0 0
      %2158 = vmatpush1.bf16.msra.mxu0 %v1773
      %2159 = vmatprep.subr.bf16.mxu0 0
      %2160 = vmatpush1.bf16.msra.mxu0 %v1772
      %2161 = vmatprep.subr.bf16.mxu0 0
      %2162 = vmatpush1.bf16.msra.mxu0 %v1771
      %2163 = vmatprep.subr.bf16.mxu0 0
      %2164 = vmatpush2.bf16.msra.mxu0 %v1786
      %2165 = vmatprep.subr.bf16.mxu0 0
      %2166 = vmatpush2.bf16.msra.mxu0 %v1785
      %2167 = vmatprep.subr.bf16.mxu0 0
      %2168 = vmatpush2.bf16.msra.mxu0 %v1784
      %2169 = vmatprep.subr.bf16.mxu0 0
      %2170 = vmatpush2.bf16.msra.mxu0 %v1783
      %2171 = vmatprep.subr.bf16.mxu0 0
      %2172 = vmatpush2.bf16.msra.mxu0 %v1782
      %2173 = vmatprep.subr.bf16.mxu0 0
      %2174 = vmatpush2.bf16.msra.mxu0 %v1781
      %2175 = vmatprep.subr.bf16.mxu0 0
      %2176 = vmatpush2.bf16.msra.mxu0 %v1780
      %2177 = vmatprep.subr.bf16.mxu0 0
      %2178 = vmatpush2.bf16.msra.mxu0 %v1779
      %2179 = vmatprep.mubr.bf16.mxu0 %v911
      %2180 = vmatmul.mubr.bf16.gmra.mxu0 %v910
      %v2181 = vpop.f32.mrf.mxu0
      %v2182 = vadd.f32 %v2142, %v2181
      %v2183 = vpop.f32.mrf.mxu0
      %v2184 = vpop.f32.mrf.mxu0
      %v2185 = vpop.f32.mrf.mxu0
      %2186 = vdwg.mxu0
      %2187 = vmatprep.subr.bf16.mxu0 0
      %2188 = vmatpush1.bf16.msra.mxu0 %v1794
      %2189 = vmatprep.subr.bf16.mxu0 0
      %2190 = vmatpush1.bf16.msra.mxu0 %v1793
      %2191 = vmatprep.subr.bf16.mxu0 0
      %2192 = vmatpush1.bf16.msra.mxu0 %v1792
      %2193 = vmatprep.subr.bf16.mxu0 0
      %2194 = vmatpush1.bf16.msra.mxu0 %v1791
      %2195 = vmatprep.subr.bf16.mxu0 0
      %2196 = vmatpush1.bf16.msra.mxu0 %v1790
      %2197 = vmatprep.subr.bf16.mxu0 0
      %2198 = vmatpush1.bf16.msra.mxu0 %v1789
      %2199 = vmatprep.subr.bf16.mxu0 0
      %2200 = vmatpush1.bf16.msra.mxu0 %v1788
      %2201 = vmatprep.subr.bf16.mxu0 0
      %2202 = vmatpush1.bf16.msra.mxu0 %v1787
      %2203 = vmatprep.subr.bf16.mxu0 0
      %2204 = vmatpush2.bf16.msra.mxu0 %v1802
      %2205 = vmatprep.subr.bf16.mxu0 0
      %2206 = vmatpush2.bf16.msra.mxu0 %v1801
      %2207 = vmatprep.subr.bf16.mxu0 0
      %2208 = vmatpush2.bf16.msra.mxu0 %v1800
      %2209 = vmatprep.subr.bf16.mxu0 0
      %2210 = vmatpush2.bf16.msra.mxu0 %v1799
      %2211 = vmatprep.subr.bf16.mxu0 0
      %2212 = vmatpush2.bf16.msra.mxu0 %v1798
      %2213 = vmatprep.subr.bf16.mxu0 0
      %2214 = vmatpush2.bf16.msra.mxu0 %v1797
      %2215 = vmatprep.subr.bf16.mxu0 0
      %2216 = vmatpush2.bf16.msra.mxu0 %v1796
      %2217 = vmatprep.subr.bf16.mxu0 0
      %2218 = vmatpush2.bf16.msra.mxu0 %v1795
      %2219 = vmatprep.mubr.bf16.mxu0 %v913
      %2220 = vmatmul.mubr.bf16.gmra.mxu0 %v912
      %v2221 = vpop.f32.mrf.mxu0
      %v2222 = vadd.f32 %v2182, %v2221
      %v2223 = vpop.f32.mrf.mxu0
      %v2224 = vpop.f32.mrf.mxu0
      %v2225 = vpop.f32.mrf.mxu0
      %2226 = vdwg.mxu0
      %2227 = vmatprep.subr.bf16.mxu0 0
      %2228 = vmatpush1.bf16.msra.mxu0 %v1810
      %2229 = vmatprep.subr.bf16.mxu0 0
      %2230 = vmatpush1.bf16.msra.mxu0 %v1809
      %2231 = vmatprep.subr.bf16.mxu0 0
      %2232 = vmatpush1.bf16.msra.mxu0 %v1808
      %2233 = vmatprep.subr.bf16.mxu0 0
      %2234 = vmatpush1.bf16.msra.mxu0 %v1807
      %2235 = vmatprep.subr.bf16.mxu0 0
      %2236 = vmatpush1.bf16.msra.mxu0 %v1806
      %2237 = vmatprep.subr.bf16.mxu0 0
      %2238 = vmatpush1.bf16.msra.mxu0 %v1805
      %2239 = vmatprep.subr.bf16.mxu0 0
      %2240 = vmatpush1.bf16.msra.mxu0 %v1804
      %2241 = vmatprep.subr.bf16.mxu0 0
      %2242 = vmatpush1.bf16.msra.mxu0 %v1803
      %2243 = vmatprep.subr.bf16.mxu0 0
      %2244 = vmatpush2.bf16.msra.mxu0 %v1818
      %2245 = vmatprep.subr.bf16.mxu0 0
      %2246 = vmatpush2.bf16.msra.mxu0 %v1817
      %2247 = vmatprep.subr.bf16.mxu0 0
      %2248 = vmatpush2.bf16.msra.mxu0 %v1816
      %2249 = vmatprep.subr.bf16.mxu0 0
      %2250 = vmatpush2.bf16.msra.mxu0 %v1815
      %2251 = vmatprep.subr.bf16.mxu0 0
      %2252 = vmatpush2.bf16.msra.mxu0 %v1814
      %2253 = vmatprep.subr.bf16.mxu0 0
      %2254 = vmatpush2.bf16.msra.mxu0 %v1813
      %2255 = vmatprep.subr.bf16.mxu0 0
      %2256 = vmatpush2.bf16.msra.mxu0 %v1812
      %2257 = vmatprep.subr.bf16.mxu0 0
      %2258 = vmatpush2.bf16.msra.mxu0 %v1811
      %2259 = vmatprep.mubr.bf16.mxu0 %v915
      %2260 = vmatmul.mubr.bf16.gmra.mxu0 %v914
      %v2261 = vpop.f32.mrf.mxu0
      %v2262 = vadd.f32 %v2222, %v2261
      %v2263 = vpop.f32.mrf.mxu0
      %v2264 = vpop.f32.mrf.mxu0
      %v2265 = vpop.f32.mrf.mxu0
      %2266 = vdwg.mxu0
      %v2267 = vunpack.c.l.bf16 %v275
      %v2268 = vadd.f32 %v2262, %v2267
      %v2269 = vsel %vm552, %v2268, 0.0
      %2270 = vadd.xlane.f32.xlu0 %v2269
      %v2271 = vpop.xlane.xlu0 %2270
      %v2272 = vrcp.pop 32.0
      %v2273 = vmul.f32 %v2271, %v2272
      %v2274 = vsub.f32 %v2268, %v2273
      %v2275 = vmul.f32 %v2274, %v2274
      %v2276 = vsel %vm552, %v2275, 0.0
      %2277 = vadd.xlane.f32.xlu0 %v2276
      %v2278 = vpop.xlane.xlu0 %2277
      %v2279 = vmul.f32 %v2278, %v2272
      %v2280 = vadd.f32 %v2279, 1e-05
      %v2281 = vrsqrt.pop %v2280
      %v2282 = vmul.f32 %v2274, %v2281
      %v2283 = vld [vmem:[%s5] sm:$0x1]
      %v2285 = vlaneseq
      %v2286 = vshrl.u32 %v2285, 7
      %v2287 = vsub.s32 0, %v2286
      %v2288 = vrot.slane %v2283, %v2287
      %v2290 = vmul.f32 %v2282, %v2288
      %v2291 = vld [vmem:[%s6] sm:$0x1]
      %v2293 = vlaneseq
      %v2294 = vshrl.u32 %v2293, 7
      %v2295 = vsub.s32 0, %v2294
      %v2296 = vrot.slane %v2291, %v2295
      %v2298 = vadd.f32 %v2290, %v2296
      %v2299 = vpack.c.bf16 %v2298, %v2298
      %vm2300 = vcmask 257024
      %2301 = vst.msk [vmem:[%s273] sm:$0xf] %vm2300, %v2299
      %p2302 = scmp.lt.s32.totalorder %s18, 1
      %s2303 = scalar_select %p2302, %s18, 1
      %s2304 = smul.addr %s2303, 4
      %s2305 = scalar_lea.vmem %s7, %s2304
      // Predicated region
      $region49: #{transformer_forward.8} parent=47 // pred_check
        %p2306 = pneg %p188
      $region50: #{transformer_forward.8} parent=47 // pred_check_branch
        %2308 = sbr.rel (%p2306) target = $region52
      $region51: #{transformer_forward.8} parent=47 // pred_region
        _
      $region52: #{transformer_forward.8} parent=47 // pred_fallthru
        _
    $region48: #{transformer_forward.8} parent=5 // pred_fallthru
      _
    %p2309 = scmp.le.s32.totalorder 2, %s13
    // Predicated region
    $region53: #{transformer_forward.8} parent=5 // pred_check
      %p2310 = pneg %p2309
    $region54: #{transformer_forward.8} parent=5 // pred_check_branch
      %2312 = sbr.rel (%p2310) target = $region56
    $region55: #{transformer_forward.8} parent=5 // pred_region
      %s2313 = ssub.s32 %s13, 2
      // Predicated region
      $region57: #{transformer_forward.8} parent=55 // pred_check
        %p2314 = pneg %p194
      $region58: #{transformer_forward.8} parent=55 // pred_check_branch
        %2316 = sbr.rel (%p2314) target = $region60
      $region59: #{transformer_forward.8} parent=55 // pred_region
        %p2317 = scmp.lt.s32.totalorder %s19, 1
        %s2318 = scalar_select %p2317, %s19, 1
        %s2319 = smul.addr %s2318, 4
        %s2320 = scalar_lea.vmem %s7, %s2319
      $region60: #{transformer_forward.8} parent=55 // pred_fallthru
        _
    $region56: #{transformer_forward.8} parent=5 // pred_fallthru
      _
  $region6: #{transformer_forward.8} parent=0 // loop_footer
    %s17 = sadd.s32 1, %s13
  $region7: #{transformer_forward.8} parent=0 // loop_footer_branch
    %12 = sbr.rel target = $region3
  $region8: #{transformer_forward.8} parent=0 // loop_exit
    _

// kernel: transformer_forward.11
$region0: #{transformer_forward.11}
  #allocation0 [shape = 'u32[]', space=smem, size = 0x4, offset = 0x4, fixed_abs, tag = 'smem constant byte address 0x4 - core index']
  #allocation1 [shape = 'u32[144,128]{1,0:T(1,128)}', space=vmem, size = 0x12000, scoped, tag = 'internal scratch']
  #allocation2 [shape = 'f32[2,256]{1,0:T(2,128)}', space=vmem, size = 0x800, scoped, tag = 'scratch operand']
  %s0 = inlined_call_operand.vmem [shape: bf16[2,256], index: 0, kind: input, shape index: {}]
  %s1 = inlined_call_operand.vmem [shape: bf16[256,256], index: 1, kind: input, shape index: {}]
  %s2 = inlined_call_operand.vmem [shape: f32[1,256], index: 2, kind: input, shape index: {}]
  %s3 = inlined_call_operand.vmem [shape: f32[2,256], index: 3, kind: output, shape index: {}]
  %s4 = sld [smem:[#allocation0]]
  $region30: #{transformer_forward.11} parent=0
    _
  %s6 = ssub.s32 1, %s4
  %s7 = scalar_select 0, %s6, %s4
  // Predicated region
  $region2: #{transformer_forward.11} parent=0 // pred_check
    _
  $region3: #{transformer_forward.11} parent=0 // pred_check_branch
    %9 = sbr.rel (0) target = $region5
  $region4: #{transformer_forward.11} parent=0 // pred_region
    _
  $region5: #{transformer_forward.11} parent=0 // pred_fallthru
    _
  // Predicated region
  $region6: #{transformer_forward.11} parent=0 // pred_check
    _
  $region7: #{transformer_forward.11} parent=0 // pred_check_branch
    %11 = sbr.rel (0) target = $region9
  $region8: #{transformer_forward.11} parent=0 // pred_region
    _
  $region9: #{transformer_forward.11} parent=0 // pred_fallthru
    _
  // Predicated region
  $region10: #{transformer_forward.11} parent=0 // pred_check
    _
  $region11: #{transformer_forward.11} parent=0 // pred_check_branch
    %13 = sbr.rel (0) target = $region13
  $region12: #{transformer_forward.11} parent=0 // pred_region
    _
  $region13: #{transformer_forward.11} parent=0 // pred_fallthru
    _
  %p14 = scmp.eq.s32.totalorder 0, 0
  // Predicated region
  $region14: #{transformer_forward.11} parent=0 // pred_check
    %p15 = pneg %p14
  $region15: #{transformer_forward.11} parent=0 // pred_check_branch
    %17 = sbr.rel (%p15) target = $region17
  $region16: #{transformer_forward.11} parent=0 // pred_region
    %18 = vst [vmem:[#allocation2] sm:$0xf] 0.0
  $region17: #{transformer_forward.11} parent=0 // pred_fallthru
    _
  %v19 = vld [vmem:[#allocation2] sm:$0xf]
  %v20 = vld [vmem:[%s0] sm:$0x3]
  %v21 = vld [vmem:[%s1] sm:$0xff]
  %v22 = vld [vmem:[%s1 + $0x8] sm:$0xff]
  %v23 = vld [vmem:[%s1 + $0x10] sm:$0xff]
  %v24 = vld [vmem:[%s1 + $0x18] sm:$0xff]
  %v25 = vld [vmem:[%s1 + $0x20] sm:$0xff]
  %v26 = vld [vmem:[%s1 + $0x28] sm:$0xff]
  %v27 = vld [vmem:[%s1 + $0x30] sm:$0xff]
  %v28 = vld [vmem:[%s1 + $0x38] sm:$0xff]
  %v29 = vld [vmem:[%s1 + $0x40] sm:$0xff]
  %v30 = vld [vmem:[%s1 + $0x48] sm:$0xff]
  %v31 = vld [vmem:[%s1 + $0x50] sm:$0xff]
  %v32 = vld [vmem:[%s1 + $0x58] sm:$0xff]
  %v33 = vld [vmem:[%s1 + $0x60] sm:$0xff]
  %v34 = vld [vmem:[%s1 + $0x68] sm:$0xff]
  %v35 = vld [vmem:[%s1 + $0x70] sm:$0xff]
  %v36 = vld [vmem:[%s1 + $0x78] sm:$0xff]
  %v37 = vld [vmem:[%s1 + $0x80] sm:$0xff]
  %v38 = vld [vmem:[%s1 + $0x88] sm:$0xff]
  %v39 = vld [vmem:[%s1 + $0x90] sm:$0xff]
  %v40 = vld [vmem:[%s1 + $0x98] sm:$0xff]
  %v41 = vld [vmem:[%s1 + $0xa0] sm:$0xff]
  %v42 = vld [vmem:[%s1 + $0xa8] sm:$0xff]
  %v43 = vld [vmem:[%s1 + $0xb0] sm:$0xff]
  %v44 = vld [vmem:[%s1 + $0xb8] sm:$0xff]
  %v45 = vld [vmem:[%s1 + $0xc0] sm:$0xff]
  %v46 = vld [vmem:[%s1 + $0xc8] sm:$0xff]
  %v47 = vld [vmem:[%s1 + $0xd0] sm:$0xff]
  %v48 = vld [vmem:[%s1 + $0xd8] sm:$0xff]
  %v49 = vld [vmem:[%s1 + $0xe0] sm:$0xff]
  %v50 = vld [vmem:[%s1 + $0xe8] sm:$0xff]
  %v51 = vld [vmem:[%s1 + $0xf0] sm:$0xff]
  %v52 = vld [vmem:[%s1 + $0xf8] sm:$0xff]
  %v55 = vunpack.c.l.s4 1966171168
  %v56 = vunpack.c.0.s8 %v55
  %v57 = vlaneseq
  %v58 = vshrl.u32 %v57, 7
  %v59 = vsub.s32 %v56, %v58
  %v60 = vrot.slane %v20, %v59
  %v61 = vcombine.high %v60, %v60
  %v63 = vunpack.c.l.s4 1966171168
  %v64 = vunpack.c.0.s8 %v63
  %v65 = vlaneseq
  %v66 = vshrl.u32 %v65, 7
  %v67 = vsub.s32 %v64, %v66
  %v68 = vrot.slane %v60, %v67
  %v70 = vunpack.c.l.s4 1966171168
  %v71 = vunpack.c.0.s8 %v70
  %v72 = vlaneseq
  %v73 = vshrl.u32 %v72, 7
  %v74 = vsub.s32 %v71, %v73
  %v75 = vrot.slane %v61, %v74
  %v110 = vunpack.c.l.b16 %v21
  %v111 = vunpack.c.h.b16 %v21
  %v112 = vunpack.c.l.b16 %v22
  %v113 = vunpack.c.h.b16 %v22
  %v114 = vunpack.c.l.b16 %v23
  %v115 = vunpack.c.h.b16 %v23
  %v116 = vunpack.c.l.b16 %v24
  %v117 = vunpack.c.h.b16 %v24
  %v118 = vunpack.c.l.b16 %v25
  %v119 = vunpack.c.h.b16 %v25
  %v120 = vunpack.c.l.b16 %v26
  %v121 = vunpack.c.h.b16 %v26
  %v122 = vunpack.c.l.b16 %v27
  %v123 = vunpack.c.h.b16 %v27
  %v124 = vunpack.c.l.b16 %v28
  %v125 = vunpack.c.h.b16 %v28
  %v126 = vunpack.c.l.b16 %v29
  %v127 = vunpack.c.h.b16 %v29
  %v128 = vunpack.c.l.b16 %v30
  %v129 = vunpack.c.h.b16 %v30
  %v130 = vunpack.c.l.b16 %v31
  %v131 = vunpack.c.h.b16 %v31
  %v132 = vunpack.c.l.b16 %v32
  %v133 = vunpack.c.h.b16 %v32
  %v134 = vunpack.c.l.b16 %v33
  %v135 = vunpack.c.h.b16 %v33
  %v136 = vunpack.c.l.b16 %v34
  %v137 = vunpack.c.h.b16 %v34
  %v138 = vunpack.c.l.b16 %v35
  %v139 = vunpack.c.h.b16 %v35
  %v140 = vunpack.c.l.b16 %v36
  %v141 = vunpack.c.h.b16 %v36
  %v142 = vunpack.c.l.b16 %v37
  %v143 = vunpack.c.h.b16 %v37
  %v144 = vunpack.c.l.b16 %v38
  %v145 = vunpack.c.h.b16 %v38
  %v146 = vunpack.c.l.b16 %v39
  %v147 = vunpack.c.h.b16 %v39
  %v148 = vunpack.c.l.b16 %v40
  %v149 = vunpack.c.h.b16 %v40
  %v150 = vunpack.c.l.b16 %v41
  %v151 = vunpack.c.h.b16 %v41
  %v152 = vunpack.c.l.b16 %v42
  %v153 = vunpack.c.h.b16 %v42
  %v154 = vunpack.c.l.b16 %v43
  %v155 = vunpack.c.h.b16 %v43
  %v156 = vunpack.c.l.b16 %v44
  %v157 = vunpack.c.h.b16 %v44
  %v158 = vunpack.c.l.b16 %v45
  %v159 = vunpack.c.h.b16 %v45
  %v160 = vunpack.c.l.b16 %v46
  %v161 = vunpack.c.h.b16 %v46
  %v162 = vunpack.c.l.b16 %v47
  %v163 = vunpack.c.h.b16 %v47
  %v164 = vunpack.c.l.b16 %v48
  %v165 = vunpack.c.h.b16 %v48
  %v166 = vunpack.c.l.b16 %v49
  %v167 = vunpack.c.h.b16 %v49
  %v168 = vunpack.c.l.b16 %v50
  %v169 = vunpack.c.h.b16 %v50
  %v170 = vunpack.c.l.b16 %v51
  %v171 = vunpack.c.h.b16 %v51
  %v172 = vunpack.c.l.b16 %v52
  %v173 = vunpack.c.h.b16 %v52
  %v174 = vpack.c.b16 %v112, %v110
  %v175 = vpack.c.b16 %v113, %v111
  %v176 = vpack.c.b16 %v116, %v114
  %v177 = vpack.c.b16 %v117, %v115
  %v178 = vpack.c.b16 %v120, %v118
  %v179 = vpack.c.b16 %v121, %v119
  %v180 = vpack.c.b16 %v124, %v122
  %v181 = vpack.c.b16 %v125, %v123
  %v182 = vpack.c.b16 %v128, %v126
  %v183 = vpack.c.b16 %v129, %v127
  %v184 = vpack.c.b16 %v132, %v130
  %v185 = vpack.c.b16 %v133, %v131
  %v186 = vpack.c.b16 %v136, %v134
  %v187 = vpack.c.b16 %v137, %v135
  %v188 = vpack.c.b16 %v140, %v138
  %v189 = vpack.c.b16 %v141, %v139
  %v190 = vpack.c.b16 %v144, %v142
  %v191 = vpack.c.b16 %v145, %v143
  %v192 = vpack.c.b16 %v148, %v146
  %v193 = vpack.c.b16 %v149, %v147
  %v194 = vpack.c.b16 %v152, %v150
  %v195 = vpack.c.b16 %v153, %v151
  %v196 = vpack.c.b16 %v156, %v154
  %v197 = vpack.c.b16 %v157, %v155
  %v198 = vpack.c.b16 %v160, %v158
  %v199 = vpack.c.b16 %v161, %v159
  %v200 = vpack.c.b16 %v164, %v162
  %v201 = vpack.c.b16 %v165, %v163
  %v202 = vpack.c.b16 %v168, %v166
  %v203 = vpack.c.b16 %v169, %v167
  %v204 = vpack.c.b16 %v172, %v170
  %v205 = vpack.c.b16 %v173, %v171
  %238 = vmatprep.subr.bf16.mxu0 %v189
  %239 = vmatpush1.bf16.msra.mxu0 %v188
  %240 = vmatprep.subr.bf16.mxu0 %v187
  %241 = vmatpush1.bf16.msra.mxu0 %v186
  %242 = vmatprep.subr.bf16.mxu0 %v185
  %243 = vmatpush1.bf16.msra.mxu0 %v184
  %244 = vmatprep.subr.bf16.mxu0 %v183
  %245 = vmatpush1.bf16.msra.mxu0 %v182
  %246 = vmatprep.subr.bf16.mxu0 %v181
  %247 = vmatpush1.bf16.msra.mxu0 %v180
  %248 = vmatprep.subr.bf16.mxu0 %v179
  %249 = vmatpush1.bf16.msra.mxu0 %v178
  %250 = vmatprep.subr.bf16.mxu0 %v177
  %251 = vmatpush1.bf16.msra.mxu0 %v176
  %252 = vmatprep.subr.bf16.mxu0 %v175
  %253 = vmatpush1.bf16.msra.mxu0 %v174
  %254 = vmatprep.subr.bf16.mxu0 %v205
  %255 = vmatpush2.bf16.msra.mxu0 %v204
  %256 = vmatprep.subr.bf16.mxu0 %v203
  %257 = vmatpush2.bf16.msra.mxu0 %v202
  %258 = vmatprep.subr.bf16.mxu0 %v201
  %259 = vmatpush2.bf16.msra.mxu0 %v200
  %260 = vmatprep.subr.bf16.mxu0 %v199
  %261 = vmatpush2.bf16.msra.mxu0 %v198
  %262 = vmatprep.subr.bf16.mxu0 %v197
  %263 = vmatpush2.bf16.msra.mxu0 %v196
  %264 = vmatprep.subr.bf16.mxu0 %v195
  %265 = vmatpush2.bf16.msra.mxu0 %v194
  %266 = vmatprep.subr.bf16.mxu0 %v193
  %267 = vmatpush2.bf16.msra.mxu0 %v192
  %268 = vmatprep.subr.bf16.mxu0 %v191
  %269 = vmatpush2.bf16.msra.mxu0 %v190
  %270 = vmatprep.mubr.bf16.mxu0 %v75
  %271 = vmatmul.mubr.bf16.gmra.mxu0 %v68
  %v272 = vpop.f32.mrf.mxu0
  %v273 = vadd.f32 0.0, %v272
  %v274 = vpop.f32.mrf.mxu0
  %v275 = vadd.f32 0.0, %v274
  %v276 = vpop.f32.mrf.mxu0
  %v277 = vpop.f32.mrf.mxu0
  %278 = vdwg.mxu0
  %v281 = vcombine.low %v273, %v275
  %v283 = vunpack.c.l.s4 1983009808
  %v284 = vunpack.c.0.s8 %v283
  %v285 = vlaneseq
  %v286 = vshrl.u32 %v285, 7
  %v287 = vsub.s32 %v284, %v286
  %v288 = vrot.slane %v281, %v287
  %v290 = vadd.f32 %v19, %v288
  %291 = vst [vmem:[#allocation2] sm:$0xf] %v290
  // Predicated region
  $region18: #{transformer_forward.11} parent=0 // pred_check
    %p292 = pneg %p14
  $region19: #{transformer_forward.11} parent=0 // pred_check_branch
    %294 = sbr.rel (%p292) target = $region21
  $region20: #{transformer_forward.11} parent=0 // pred_region
    %v295 = vld [vmem:[#allocation2] sm:$0xf]
    %v296 = vld [vmem:[%s2] sm:$0x3]
    %v298 = vlaneseq
    %v299 = vshrl.u32 %v298, 7
    %v300 = vsub.s32 0, %v299
    %v301 = vrot.slane %v296, %v300
    %v302 = vlaneseq
    %v303 = vshrl.u32 %v302, 7
    %v304 = vsub.s32 1, %v303
    %v305 = vrot.slane %v296, %v304
    %v306 = vcombine.low %v301, %v305
    %v308 = vunpack.c.l.s4 1983009808
    %v309 = vunpack.c.0.s8 %v308
    %v310 = vlaneseq
    %v311 = vshrl.u32 %v310, 7
    %v312 = vsub.s32 %v309, %v311
    %v313 = vrot.slane %v306, %v312
    %v315 = vadd.f32 %v295, %v313
    %316 = vst [vmem:[%s3] sm:$0xf] %v315
  $region21: #{transformer_forward.11} parent=0 // pred_fallthru
    _
  // Predicated region
  $region22: #{transformer_forward.11} parent=0 // pred_check
    _
  $region23: #{transformer_forward.11} parent=0 // pred_check_branch
    %318 = sbr.rel (0) target = $region25
  $region24: #{transformer_forward.11} parent=0 // pred_region
    _
  $region25: #{transformer_forward.11} parent=0 // pred_fallthru
    _
  // Predicated region
  $region26: #{transformer_forward.11} parent=0 // pred_check
    _
  $region27: #{transformer_forward.11} parent=0 // pred_check_branch
    %320 = sbr.rel (0) target = $region29
  $region28: #{transformer_forward.11} parent=0 // pred_region
    _
  $region29: #{transformer_forward.11} parent=0 // pred_fallthru
    _

</llo_original>
